<compile_context>
chip_gen: v7x
topology: tpu7x:2x2x1
jax: 0.10.0
libtpu: 0.0.40
codegen_flags: <defaults>
</compile_context>

<pallas_src>
import functools

import jax
import jax.numpy as jnp
from jax.experimental import pallas as pl
from jax.experimental.pallas import tpu as pltpu


# ----------------------------------------------------------------------------
# Fused Pallas kernel (one batch element per grid step)
# ----------------------------------------------------------------------------
def _rdb_fused_kernel(x_ref, masks_ref,
                      w1_ref, b1_ref, w2_ref, b2_ref, w3_ref, b3_ref,
                      w4_ref, b4_ref, w5_ref, b5_ref,
                      o_ref,
                      icol_ref, apad_ref,
                      *, C, G, H, W, res_scale, alpha):
    HW = H * W
    P = W + 1                      # max |flat shift| of a 3x3 tap
    Ctot = C + 4 * G
    cdtype = icol_ref.dtype

    # Rows of not-yet-computed channels must read as 0 (they meet zero-padded
    # weight columns) and the shift halo of `apad` must be 0.
    icol_ref[...] = jnp.zeros_like(icol_ref)
    apad_ref[...] = jnp.zeros_like(apad_ref)

    def append(act, c0):
        """Scatter `act` (nch, HW) into the 9 tap-shifted row groups of icol."""
        nch = act.shape[0]
        # Write once into the zero-haloed row buffer; the 9 shifted views are
        # plain static lane-offset slices (halo supplies the H-edge zeros,
        # the masks supply the W-edge zeros).
        apad_ref[0:nch, P:P + HW] = act.astype(cdtype)
        for ky in range(3):
            for kx in range(3):
                off = (ky - 1) * W + (kx - 1)
                tap = ky * 3 + kx
                shifted = apad_ref[0:nch, P + off:P + off + HW]
                if kx == 0:                                   # dx = -1
                    shifted = shifted * masks_ref[0:1, :]
                elif kx == 2:                                 # dx = +1
                    shifted = shifted * masks_ref[1:2, :]
                row = tap * Ctot + c0
                icol_ref[row:row + nch, :] = shifted

    def conv(w_ref, b_ref):
        # One big MXU matmul: (Cout, 9*Ctot) @ (9*Ctot, HW) -> f32 (Cout, HW)
        acc = jnp.dot(w_ref[...], icol_ref[...],
                      preferred_element_type=jnp.float32)
        return acc + b_ref[...]                               # (Cout, 1) bcast

    def lrelu(v):
        return jnp.where(v >= 0, v, alpha * v)

    x_raw = x_ref[0, :, :]                        # (C, HW) input activation
    x_res = x_raw.astype(jnp.float32)             # residual kept in f32
    append(x_raw, 0)
    y1 = lrelu(conv(w1_ref, b1_ref)); append(y1, C)
    y2 = lrelu(conv(w2_ref, b2_ref)); append(y2, C + G)
    y3 = lrelu(conv(w3_ref, b3_ref)); append(y3, C + 2 * G)
    y4 = lrelu(conv(w4_ref, b4_ref)); append(y4, C + 3 * G)
    y5 = conv(w5_ref, b5_ref)                     # (C, HW), f32
    o_ref[0, :, :] = (x_res + res_scale * y5).astype(o_ref.dtype)


# ----------------------------------------------------------------------------
# Wrapper
# ----------------------------------------------------------------------------
def _pack_weight(w_hwio, Ctot, dtype):
    """(3,3,Cin,Cout) HWIO -> (Cout, 9*Ctot), zero-padded over channels >= Cin.

    Row layout matches the icol slab: column index = (ky*3+kx)*Ctot + cin.
    """
    kh, kw, cin, cout = w_hwio.shape
    wt = jnp.transpose(w_hwio, (3, 0, 1, 2))                    # (Cout,3,3,Cin)
    wt = jnp.pad(wt, ((0, 0), (0, 0), (0, 0), (0, Ctot - cin)))
    return wt.reshape(cout, kh * kw * Ctot).astype(dtype)


def residual_dense_block_forward(x_nchw, params, res_scale=0.2, *,
                                 compute_dtype=jnp.float32, alpha=0.2):
    """PyTorch-semantics forward: x + DenseBlock(x) * res_scale (NCHW in/out)."""
    N, C, H, W = x_nchw.shape
    G = params["conv1"][0].shape[-1]
    Ctot = C + 4 * G
    HW = H * W
    P = W + 1
    Cmax = max(C, G)

    # (N,C,H,W) -> (N,C,H*W): contiguous-dim merge, free at the XLA level.
    x2d = x_nchw.reshape(N, C, HW)

    # Column edge masks for the dx = -1 / +1 taps (exact 0/1, cast-safe).
    col = jnp.arange(HW, dtype=jnp.int32) % W
    masks = jnp.stack([col != 0, col != W - 1]).astype(compute_dtype)  # (2,HW)

    flat_params = []
    in_specs = [
        pl.BlockSpec((1, C, HW), lambda n: (n, 0, 0)),   # x (per-batch block)
        pl.BlockSpec((2, HW), lambda n: (0, 0)),         # edge masks
    ]
    for i in range(1, 6):
        w, b = params[f"conv{i}"]
        cout = w.shape[-1]
        flat_params.append(_pack_weight(w, Ctot, compute_dtype))
        flat_params.append(b.reshape(cout, 1).astype(jnp.float32))
        in_specs.append(pl.BlockSpec((cout, 9 * Ctot), lambda n: (0, 0)))
        in_specs.append(pl.BlockSpec((cout, 1), lambda n: (0, 0)))

    kernel = functools.partial(
        _rdb_fused_kernel, C=C, G=G, H=H, W=W,
        res_scale=float(res_scale), alpha=float(alpha))

    cost = pl.CostEstimate(
        flops=int(2 * N * 9 * Ctot * HW * (4 * G + C)),
        transcendentals=0,
        bytes_accessed=int(
            2 * x2d.size * x2d.dtype.itemsize
            + sum(p.size * p.dtype.itemsize for p in flat_params)
            + masks.size * masks.dtype.itemsize),
    )

    out2d = pl.pallas_call(
        kernel,
        out_shape=jax.ShapeDtypeStruct((N, C, HW), x_nchw.dtype),
        grid=(N,),
        in_specs=in_specs,
        out_specs=pl.BlockSpec((1, C, HW), lambda n: (n, 0, 0)),
        scratch_shapes=[
            pltpu.VMEM((9 * Ctot, HW), compute_dtype),       # im2col slab
            pltpu.VMEM((Cmax, HW + 2 * P), compute_dtype),   # zero-haloed rows
        ],
        compiler_params=pltpu.CompilerParams(
            dimension_semantics=("parallel",)),
        cost_estimate=cost,
    )(x2d, masks, *flat_params)

    return out2d.reshape(N, C, H, W)


# ----------------------------------------------------------------------------
# Parameters (ESRGAN-style init) and plain-JAX reference
# ----------------------------------------------------------------------------
def init_rdb_params(key, channels, grow_channels, init_scale=0.1):
    params = {}
    cins = [channels,
            channels + grow_channels,
            channels + 2 * grow_channels,
            channels + 3 * grow_channels,
            channels + 4 * grow_channels]
    couts = [grow_channels] * 4 + [channels]
    for i, (cin, cout) in enumerate(zip(cins, couts), start=1):
        key, sub = jax.random.split(key)
        std = (2.0 / (cin * 9)) ** 0.5
        w = jax.random.normal(sub, (3, 3, cin, cout), jnp.float32) * std * init_scale
        b = jnp.zeros((cout,), jnp.float32)
        params[f"conv{i}"] = (w, b)
    return params


def _ref_conv(x_nhwc, w, b):
    y = jax.lax.conv_general_dilated(
        x_nhwc, w, window_strides=(1, 1), padding="SAME",
        dimension_numbers=("NHWC", "HWIO", "NHWC"))
    return y + b


def _ref_forward(x_nchw, params, res_scale=0.2):
    lrelu = lambda v: jnp.where(v >= 0, v, 0.2 * v)
    x = jnp.transpose(x_nchw, (0, 2, 3, 1))
    x1 = lrelu(_ref_conv(x, *params["conv1"]))
    x2 = lrelu(_ref_conv(jnp.concatenate([x, x1], -1), *params["conv2"]))
    x3 = lrelu(_ref_conv(jnp.concatenate([x, x1, x2], -1), *params["conv3"]))
    x4 = lrelu(_ref_conv(jnp.concatenate([x, x1, x2, x3], -1), *params["conv4"]))
    x5 = _ref_conv(jnp.concatenate([x, x1, x2, x3, x4], -1), *params["conv5"])
    return jnp.transpose(x + x5 * res_scale, (0, 3, 1, 2))


# ----------------------------------------------------------------------------
if __name__ == "__main__":
    # Small shapes consistent with the module: batch=2, channels=16,
    # grow_channels=8, spatial 16x16, NCHW input like PyTorch.
    N, C, H, W = 2, 16, 16, 16
    GROW = 8
    RES_SCALE = 0.2

    key = jax.random.PRNGKey(0)
    key, kx = jax.random.split(key)
    x = jax.random.normal(kx, (N, C, H, W), jnp.float32)
    params = init_rdb_params(key, channels=C, grow_channels=GROW)

    ref = jax.block_until_ready(_ref_forward(x, params, res_scale=RES_SCALE))

    # f32 path (tight check vs. lax.conv reference)
    out = residual_dense_block_forward(x, params, res_scale=RES_SCALE,
                                       compute_dtype=jnp.float32)
    out = jax.block_until_ready(out)
    assert out.shape == (N, C, H, W) and out.dtype == jnp.float32
    assert jnp.allclose(out, ref, atol=1e-3, rtol=1e-3), "f32 mismatch vs reference"

    # bf16 MXU fast path (f32 accumulation, f32 residual add) — looser check
    out_bf16 = jax.block_until_ready(
        residual_dense_block_forward(x, params, res_scale=RES_SCALE,
                                     compute_dtype=jnp.bfloat16))
    assert jnp.allclose(out_bf16, ref, atol=2e-2, rtol=2e-2), "bf16 mismatch vs reference"

    print("KERNEL_OK")
</pallas_src>

<mosaic_0001>
module attributes {stable_mosaic.version = 11 : i64} {
  func.func @_rdb_fused_kernel(%arg0: i32, %arg1: memref<1x16x256xf32, #tpu.memory_space<vmem>>, %arg2: memref<2x256xf32, #tpu.memory_space<vmem>>, %arg3: memref<8x432xf32, #tpu.memory_space<vmem>>, %arg4: memref<8x1xf32, #tpu.memory_space<vmem>>, %arg5: memref<8x432xf32, #tpu.memory_space<vmem>>, %arg6: memref<8x1xf32, #tpu.memory_space<vmem>>, %arg7: memref<8x432xf32, #tpu.memory_space<vmem>>, %arg8: memref<8x1xf32, #tpu.memory_space<vmem>>, %arg9: memref<8x432xf32, #tpu.memory_space<vmem>>, %arg10: memref<8x1xf32, #tpu.memory_space<vmem>>, %arg11: memref<16x432xf32, #tpu.memory_space<vmem>>, %arg12: memref<16x1xf32, #tpu.memory_space<vmem>>, %arg13: memref<1x16x256xf32, #tpu.memory_space<vmem>>, %arg14: memref<432x256xf32, #tpu.memory_space<vmem>>, %arg15: memref<16x290xf32, #tpu.memory_space<vmem>>) attributes {dimension_semantics = [#tpu.dimension_semantics<parallel>], iteration_bounds = array<i64: 2>, scalar_prefetch = 0 : i64, scratch_operands = 2 : i64, tpu.core_type = #tpu.core_type<tc>, window_params = [{transform_indices = @transform_0, window_bounds = array<i64: 1, 16, 256>}, {pipeline_mode = #tpu.pipeline_mode<synchronous>, transform_indices = @transform_1, window_bounds = array<i64: 2, 256>}, {pipeline_mode = #tpu.pipeline_mode<synchronous>, transform_indices = @transform_2, window_bounds = array<i64: 8, 432>}, {pipeline_mode = #tpu.pipeline_mode<synchronous>, transform_indices = @transform_3, window_bounds = array<i64: 8, 1>}, {pipeline_mode = #tpu.pipeline_mode<synchronous>, transform_indices = @transform_4, window_bounds = array<i64: 8, 432>}, {pipeline_mode = #tpu.pipeline_mode<synchronous>, transform_indices = @transform_5, window_bounds = array<i64: 8, 1>}, {pipeline_mode = #tpu.pipeline_mode<synchronous>, transform_indices = @transform_6, window_bounds = array<i64: 8, 432>}, {pipeline_mode = #tpu.pipeline_mode<synchronous>, transform_indices = @transform_7, window_bounds = array<i64: 8, 1>}, {pipeline_mode = #tpu.pipeline_mode<synchronous>, transform_indices = @transform_8, window_bounds = array<i64: 8, 432>}, {pipeline_mode = #tpu.pipeline_mode<synchronous>, transform_indices = @transform_9, window_bounds = array<i64: 8, 1>}, {pipeline_mode = #tpu.pipeline_mode<synchronous>, transform_indices = @transform_10, window_bounds = array<i64: 16, 432>}, {pipeline_mode = #tpu.pipeline_mode<synchronous>, transform_indices = @transform_11, window_bounds = array<i64: 16, 1>}, {transform_indices = @transform_12, window_bounds = array<i64: 1, 16, 256>}]} {
    %cst = arith.constant 0.000000e+00 : f32
    %0 = vector.broadcast %cst : f32 to vector<432x256xf32>
    %c0 = arith.constant 0 : index
    %c0_0 = arith.constant 0 : index
    %1 = vector.load %arg14[%c0, %c0_0] : memref<432x256xf32, #tpu.memory_space<vmem>>, vector<432x256xf32>
    tpu.vector_store %arg14[%c0, %c0_0], %0 {strides = array<i32>} : memref<432x256xf32, #tpu.memory_space<vmem>>, vector<432x256xf32>,
    %cst_1 = arith.constant 0.000000e+00 : f32
    %2 = vector.broadcast %cst_1 : f32 to vector<16x290xf32>
    %c0_2 = arith.constant 0 : index
    %c0_3 = arith.constant 0 : index
    %3 = vector.load %arg15[%c0_2, %c0_3] : memref<16x290xf32, #tpu.memory_space<vmem>>, vector<16x290xf32>
    tpu.vector_store %arg15[%c0_2, %c0_3], %2 {strides = array<i32>} : memref<16x290xf32, #tpu.memory_space<vmem>>, vector<16x290xf32>,
    %c0_4 = arith.constant 0 : index
    %c0_5 = arith.constant 0 : index
    %c0_6 = arith.constant 0 : index
    %4 = vector.load %arg1[%c0_4, %c0_5, %c0_6] : memref<1x16x256xf32, #tpu.memory_space<vmem>>, vector<1x16x256xf32>
    %5 = vector.shape_cast %4 : vector<1x16x256xf32> to vector<16x256xf32>
    %c0_7 = arith.constant 0 : index
    %c17 = arith.constant 17 : index
    %6 = vector.load %arg15[%c0_7, %c17] : memref<16x290xf32, #tpu.memory_space<vmem>>, vector<16x256xf32>
    tpu.vector_store %arg15[%c0_7, %c17], %5 {strides = array<i32>} : memref<16x290xf32, #tpu.memory_space<vmem>>, vector<16x256xf32>,
    %c0_8 = arith.constant 0 : index
    %c0_9 = arith.constant 0 : index
    %7 = vector.load %arg15[%c0_8, %c0_9] : memref<16x290xf32, #tpu.memory_space<vmem>>, vector<16x256xf32>
    %c0_10 = arith.constant 0 : index
    %c0_11 = arith.constant 0 : index
    %8 = vector.load %arg2[%c0_10, %c0_11] : memref<2x256xf32, #tpu.memory_space<vmem>>, vector<1x256xf32>
    %9 = vector.broadcast %8 : vector<1x256xf32> to vector<16x256xf32>
    %10 = arith.mulf %7, %9 : vector<16x256xf32>
    %c0_12 = arith.constant 0 : index
    %c0_13 = arith.constant 0 : index
    %11 = vector.load %arg14[%c0_12, %c0_13] : memref<432x256xf32, #tpu.memory_space<vmem>>, vector<16x256xf32>
    tpu.vector_store %arg14[%c0_12, %c0_13], %10 {strides = array<i32>} : memref<432x256xf32, #tpu.memory_space<vmem>>, vector<16x256xf32>,
    %c0_14 = arith.constant 0 : index
    %c1 = arith.constant 1 : index
    %12 = vector.load %arg15[%c0_14, %c1] : memref<16x290xf32, #tpu.memory_space<vmem>>, vector<16x256xf32>
    %c48 = arith.constant 48 : index
    %c0_15 = arith.constant 0 : index
    %13 = vector.load %arg14[%c48, %c0_15] : memref<432x256xf32, #tpu.memory_space<vmem>>, vector<16x256xf32>
    tpu.vector_store %arg14[%c48, %c0_15], %12 {strides = array<i32>} : memref<432x256xf32, #tpu.memory_space<vmem>>, vector<16x256xf32>,
    %c0_16 = arith.constant 0 : index
    %c2 = arith.constant 2 : index
    %14 = vector.load %arg15[%c0_16, %c2] : memref<16x290xf32, #tpu.memory_space<vmem>>, vector<16x256xf32>
    %c1_17 = arith.constant 1 : index
    %c0_18 = arith.constant 0 : index
    %15 = vector.load %arg2[%c1_17, %c0_18] : memref<2x256xf32, #tpu.memory_space<vmem>>, vector<1x256xf32>
    %16 = vector.broadcast %15 : vector<1x256xf32> to vector<16x256xf32>
    %17 = arith.mulf %14, %16 : vector<16x256xf32>
    %c96 = arith.constant 96 : index
    %c0_19 = arith.constant 0 : index
    %18 = vector.load %arg14[%c96, %c0_19] : memref<432x256xf32, #tpu.memory_space<vmem>>, vector<16x256xf32>
    tpu.vector_store %arg14[%c96, %c0_19], %17 {strides = array<i32>} : memref<432x256xf32, #tpu.memory_space<vmem>>, vector<16x256xf32>,
    %c0_20 = arith.constant 0 : index
    %c16 = arith.constant 16 : index
    %19 = vector.load %arg15[%c0_20, %c16] : memref<16x290xf32, #tpu.memory_space<vmem>>, vector<16x256xf32>
    %c0_21 = arith.constant 0 : index
    %c0_22 = arith.constant 0 : index
    %20 = vector.load %arg2[%c0_21, %c0_22] : memref<2x256xf32, #tpu.memory_space<vmem>>, vector<1x256xf32>
    %21 = vector.broadcast %20 : vector<1x256xf32> to vector<16x256xf32>
    %22 = arith.mulf %19, %21 : vector<16x256xf32>
    %c144 = arith.constant 144 : index
    %c0_23 = arith.constant 0 : index
    %23 = vector.load %arg14[%c144, %c0_23] : memref<432x256xf32, #tpu.memory_space<vmem>>, vector<16x256xf32>
    tpu.vector_store %arg14[%c144, %c0_23], %22 {strides = array<i32>} : memref<432x256xf32, #tpu.memory_space<vmem>>, vector<16x256xf32>,
    %c0_24 = arith.constant 0 : index
    %c17_25 = arith.constant 17 : index
    %24 = vector.load %arg15[%c0_24, %c17_25] : memref<16x290xf32, #tpu.memory_space<vmem>>, vector<16x256xf32>
    %c192 = arith.constant 192 : index
    %c0_26 = arith.constant 0 : index
    %25 = vector.load %arg14[%c192, %c0_26] : memref<432x256xf32, #tpu.memory_space<vmem>>, vector<16x256xf32>
    tpu.vector_store %arg14[%c192, %c0_26], %24 {strides = array<i32>} : memref<432x256xf32, #tpu.memory_space<vmem>>, vector<16x256xf32>,
    %c0_27 = arith.constant 0 : index
    %c18 = arith.constant 18 : index
    %26 = vector.load %arg15[%c0_27, %c18] : memref<16x290xf32, #tpu.memory_space<vmem>>, vector<16x256xf32>
    %c1_28 = arith.constant 1 : index
    %c0_29 = arith.constant 0 : index
    %27 = vector.load %arg2[%c1_28, %c0_29] : memref<2x256xf32, #tpu.memory_space<vmem>>, vector<1x256xf32>
    %28 = vector.broadcast %27 : vector<1x256xf32> to vector<16x256xf32>
    %29 = arith.mulf %26, %28 : vector<16x256xf32>
    %c240 = arith.constant 240 : index
    %c0_30 = arith.constant 0 : index
    %30 = vector.load %arg14[%c240, %c0_30] : memref<432x256xf32, #tpu.memory_space<vmem>>, vector<16x256xf32>
    tpu.vector_store %arg14[%c240, %c0_30], %29 {strides = array<i32>} : memref<432x256xf32, #tpu.memory_space<vmem>>, vector<16x256xf32>,
    %c0_31 = arith.constant 0 : index
    %c32 = arith.constant 32 : index
    %31 = vector.load %arg15[%c0_31, %c32] : memref<16x290xf32, #tpu.memory_space<vmem>>, vector<16x256xf32>
    %c0_32 = arith.constant 0 : index
    %c0_33 = arith.constant 0 : index
    %32 = vector.load %arg2[%c0_32, %c0_33] : memref<2x256xf32, #tpu.memory_space<vmem>>, vector<1x256xf32>
    %33 = vector.broadcast %32 : vector<1x256xf32> to vector<16x256xf32>
    %34 = arith.mulf %31, %33 : vector<16x256xf32>
    %c288 = arith.constant 288 : index
    %c0_34 = arith.constant 0 : index
    %35 = vector.load %arg14[%c288, %c0_34] : memref<432x256xf32, #tpu.memory_space<vmem>>, vector<16x256xf32>
    tpu.vector_store %arg14[%c288, %c0_34], %34 {strides = array<i32>} : memref<432x256xf32, #tpu.memory_space<vmem>>, vector<16x256xf32>,
    %c0_35 = arith.constant 0 : index
    %c33 = arith.constant 33 : index
    %36 = vector.load %arg15[%c0_35, %c33] : memref<16x290xf32, #tpu.memory_space<vmem>>, vector<16x256xf32>
    %c336 = arith.constant 336 : index
    %c0_36 = arith.constant 0 : index
    %37 = vector.load %arg14[%c336, %c0_36] : memref<432x256xf32, #tpu.memory_space<vmem>>, vector<16x256xf32>
    tpu.vector_store %arg14[%c336, %c0_36], %36 {strides = array<i32>} : memref<432x256xf32, #tpu.memory_space<vmem>>, vector<16x256xf32>,
    %c0_37 = arith.constant 0 : index
    %c34 = arith.constant 34 : index
    %38 = vector.load %arg15[%c0_37, %c34] : memref<16x290xf32, #tpu.memory_space<vmem>>, vector<16x256xf32>
    %c1_38 = arith.constant 1 : index
    %c0_39 = arith.constant 0 : index
    %39 = vector.load %arg2[%c1_38, %c0_39] : memref<2x256xf32, #tpu.memory_space<vmem>>, vector<1x256xf32>
    %40 = vector.broadcast %39 : vector<1x256xf32> to vector<16x256xf32>
    %41 = arith.mulf %38, %40 : vector<16x256xf32>
    %c384 = arith.constant 384 : index
    %c0_40 = arith.constant 0 : index
    %42 = vector.load %arg14[%c384, %c0_40] : memref<432x256xf32, #tpu.memory_space<vmem>>, vector<16x256xf32>
    tpu.vector_store %arg14[%c384, %c0_40], %41 {strides = array<i32>} : memref<432x256xf32, #tpu.memory_space<vmem>>, vector<16x256xf32>,
    %c0_41 = arith.constant 0 : index
    %c0_42 = arith.constant 0 : index
    %43 = vector.load %arg3[%c0_41, %c0_42] : memref<8x432xf32, #tpu.memory_space<vmem>>, vector<8x432xf32>
    %c0_43 = arith.constant 0 : index
    %c0_44 = arith.constant 0 : index
    %44 = vector.load %arg14[%c0_43, %c0_44] : memref<432x256xf32, #tpu.memory_space<vmem>>, vector<432x256xf32>
    %cst_45 = arith.constant dense<0.000000e+00> : vector<8x256xf32>
    %45 = tpu.matmul %43, %44, %cst_45 {dimension_numbers = #tpu.dot_dimension_numbers<[1], [0], [0], [1], [0, 0, 1, 1], [], []>} : vector<8x432xf32>, vector<432x256xf32>, vector<8x256xf32> -> vector<8x256xf32>
    %c0_46 = arith.constant 0 : index
    %c0_47 = arith.constant 0 : index
    %46 = vector.load %arg4[%c0_46, %c0_47] : memref<8x1xf32, #tpu.memory_space<vmem>>, vector<8x1xf32>
    %47 = vector.broadcast %46 : vector<8x1xf32> to vector<8x256xf32>
    %48 = arith.addf %45, %47 : vector<8x256xf32>
    %cst_48 = arith.constant 0.000000e+00 : f32
    %49 = vector.broadcast %cst_48 : f32 to vector<8x256xf32>
    %50 = arith.cmpf oge, %48, %49 : vector<8x256xf32>
    %cst_49 = arith.constant 2.000000e-01 : f32
    %51 = vector.broadcast %cst_49 : f32 to vector<8x256xf32>
    %52 = arith.mulf %51, %48 : vector<8x256xf32>
    %53 = arith.select %50, %48, %52 : vector<8x256xi1>, vector<8x256xf32>
    %c0_50 = arith.constant 0 : index
    %c17_51 = arith.constant 17 : index
    %54 = vector.load %arg15[%c0_50, %c17_51] : memref<16x290xf32, #tpu.memory_space<vmem>>, vector<8x256xf32>
    tpu.vector_store %arg15[%c0_50, %c17_51], %53 {strides = array<i32>} : memref<16x290xf32, #tpu.memory_space<vmem>>, vector<8x256xf32>,
    %c0_52 = arith.constant 0 : index
    %c0_53 = arith.constant 0 : index
    %55 = vector.load %arg15[%c0_52, %c0_53] : memref<16x290xf32, #tpu.memory_space<vmem>>, vector<8x256xf32>
    %c0_54 = arith.constant 0 : index
    %c0_55 = arith.constant 0 : index
    %56 = vector.load %arg2[%c0_54, %c0_55] : memref<2x256xf32, #tpu.memory_space<vmem>>, vector<1x256xf32>
    %57 = vector.broadcast %56 : vector<1x256xf32> to vector<8x256xf32>
    %58 = arith.mulf %55, %57 : vector<8x256xf32>
    %c16_56 = arith.constant 16 : index
    %c0_57 = arith.constant 0 : index
    %59 = vector.load %arg14[%c16_56, %c0_57] : memref<432x256xf32, #tpu.memory_space<vmem>>, vector<8x256xf32>
    tpu.vector_store %arg14[%c16_56, %c0_57], %58 {strides = array<i32>} : memref<432x256xf32, #tpu.memory_space<vmem>>, vector<8x256xf32>,
    %c0_58 = arith.constant 0 : index
    %c1_59 = arith.constant 1 : index
    %60 = vector.load %arg15[%c0_58, %c1_59] : memref<16x290xf32, #tpu.memory_space<vmem>>, vector<8x256xf32>
    %c64 = arith.constant 64 : index
    %c0_60 = arith.constant 0 : index
    %61 = vector.load %arg14[%c64, %c0_60] : memref<432x256xf32, #tpu.memory_space<vmem>>, vector<8x256xf32>
    tpu.vector_store %arg14[%c64, %c0_60], %60 {strides = array<i32>} : memref<432x256xf32, #tpu.memory_space<vmem>>, vector<8x256xf32>,
    %c0_61 = arith.constant 0 : index
    %c2_62 = arith.constant 2 : index
    %62 = vector.load %arg15[%c0_61, %c2_62] : memref<16x290xf32, #tpu.memory_space<vmem>>, vector<8x256xf32>
    %c1_63 = arith.constant 1 : index
    %c0_64 = arith.constant 0 : index
    %63 = vector.load %arg2[%c1_63, %c0_64] : memref<2x256xf32, #tpu.memory_space<vmem>>, vector<1x256xf32>
    %64 = vector.broadcast %63 : vector<1x256xf32> to vector<8x256xf32>
    %65 = arith.mulf %62, %64 : vector<8x256xf32>
    %c112 = arith.constant 112 : index
    %c0_65 = arith.constant 0 : index
    %66 = vector.load %arg14[%c112, %c0_65] : memref<432x256xf32, #tpu.memory_space<vmem>>, vector<8x256xf32>
    tpu.vector_store %arg14[%c112, %c0_65], %65 {strides = array<i32>} : memref<432x256xf32, #tpu.memory_space<vmem>>, vector<8x256xf32>,
    %c0_66 = arith.constant 0 : index
    %c16_67 = arith.constant 16 : index
    %67 = vector.load %arg15[%c0_66, %c16_67] : memref<16x290xf32, #tpu.memory_space<vmem>>, vector<8x256xf32>
    %c0_68 = arith.constant 0 : index
    %c0_69 = arith.constant 0 : index
    %68 = vector.load %arg2[%c0_68, %c0_69] : memref<2x256xf32, #tpu.memory_space<vmem>>, vector<1x256xf32>
    %69 = vector.broadcast %68 : vector<1x256xf32> to vector<8x256xf32>
    %70 = arith.mulf %67, %69 : vector<8x256xf32>
    %c160 = arith.constant 160 : index
    %c0_70 = arith.constant 0 : index
    %71 = vector.load %arg14[%c160, %c0_70] : memref<432x256xf32, #tpu.memory_space<vmem>>, vector<8x256xf32>
    tpu.vector_store %arg14[%c160, %c0_70], %70 {strides = array<i32>} : memref<432x256xf32, #tpu.memory_space<vmem>>, vector<8x256xf32>,
    %c0_71 = arith.constant 0 : index
    %c17_72 = arith.constant 17 : index
    %72 = vector.load %arg15[%c0_71, %c17_72] : memref<16x290xf32, #tpu.memory_space<vmem>>, vector<8x256xf32>
    %c208 = arith.constant 208 : index
    %c0_73 = arith.constant 0 : index
    %73 = vector.load %arg14[%c208, %c0_73] : memref<432x256xf32, #tpu.memory_space<vmem>>, vector<8x256xf32>
    tpu.vector_store %arg14[%c208, %c0_73], %72 {strides = array<i32>} : memref<432x256xf32, #tpu.memory_space<vmem>>, vector<8x256xf32>,
    %c0_74 = arith.constant 0 : index
    %c18_75 = arith.constant 18 : index
    %74 = vector.load %arg15[%c0_74, %c18_75] : memref<16x290xf32, #tpu.memory_space<vmem>>, vector<8x256xf32>
    %c1_76 = arith.constant 1 : index
    %c0_77 = arith.constant 0 : index
    %75 = vector.load %arg2[%c1_76, %c0_77] : memref<2x256xf32, #tpu.memory_space<vmem>>, vector<1x256xf32>
    %76 = vector.broadcast %75 : vector<1x256xf32> to vector<8x256xf32>
    %77 = arith.mulf %74, %76 : vector<8x256xf32>
    %c256 = arith.constant 256 : index
    %c0_78 = arith.constant 0 : index
    %78 = vector.load %arg14[%c256, %c0_78] : memref<432x256xf32, #tpu.memory_space<vmem>>, vector<8x256xf32>
    tpu.vector_store %arg14[%c256, %c0_78], %77 {strides = array<i32>} : memref<432x256xf32, #tpu.memory_space<vmem>>, vector<8x256xf32>,
    %c0_79 = arith.constant 0 : index
    %c32_80 = arith.constant 32 : index
    %79 = vector.load %arg15[%c0_79, %c32_80] : memref<16x290xf32, #tpu.memory_space<vmem>>, vector<8x256xf32>
    %c0_81 = arith.constant 0 : index
    %c0_82 = arith.constant 0 : index
    %80 = vector.load %arg2[%c0_81, %c0_82] : memref<2x256xf32, #tpu.memory_space<vmem>>, vector<1x256xf32>
    %81 = vector.broadcast %80 : vector<1x256xf32> to vector<8x256xf32>
    %82 = arith.mulf %79, %81 : vector<8x256xf32>
    %c304 = arith.constant 304 : index
    %c0_83 = arith.constant 0 : index
    %83 = vector.load %arg14[%c304, %c0_83] : memref<432x256xf32, #tpu.memory_space<vmem>>, vector<8x256xf32>
    tpu.vector_store %arg14[%c304, %c0_83], %82 {strides = array<i32>} : memref<432x256xf32, #tpu.memory_space<vmem>>, vector<8x256xf32>,
    %c0_84 = arith.constant 0 : index
    %c33_85 = arith.constant 33 : index
    %84 = vector.load %arg15[%c0_84, %c33_85] : memref<16x290xf32, #tpu.memory_space<vmem>>, vector<8x256xf32>
    %c352 = arith.constant 352 : index
    %c0_86 = arith.constant 0 : index
    %85 = vector.load %arg14[%c352, %c0_86] : memref<432x256xf32, #tpu.memory_space<vmem>>, vector<8x256xf32>
    tpu.vector_store %arg14[%c352, %c0_86], %84 {strides = array<i32>} : memref<432x256xf32, #tpu.memory_space<vmem>>, vector<8x256xf32>,
    %c0_87 = arith.constant 0 : index
    %c34_88 = arith.constant 34 : index
    %86 = vector.load %arg15[%c0_87, %c34_88] : memref<16x290xf32, #tpu.memory_space<vmem>>, vector<8x256xf32>
    %c1_89 = arith.constant 1 : index
    %c0_90 = arith.constant 0 : index
    %87 = vector.load %arg2[%c1_89, %c0_90] : memref<2x256xf32, #tpu.memory_space<vmem>>, vector<1x256xf32>
    %88 = vector.broadcast %87 : vector<1x256xf32> to vector<8x256xf32>
    %89 = arith.mulf %86, %88 : vector<8x256xf32>
    %c400 = arith.constant 400 : index
    %c0_91 = arith.constant 0 : index
    %90 = vector.load %arg14[%c400, %c0_91] : memref<432x256xf32, #tpu.memory_space<vmem>>, vector<8x256xf32>
    tpu.vector_store %arg14[%c400, %c0_91], %89 {strides = array<i32>} : memref<432x256xf32, #tpu.memory_space<vmem>>, vector<8x256xf32>,
    %c0_92 = arith.constant 0 : index
    %c0_93 = arith.constant 0 : index
    %91 = vector.load %arg5[%c0_92, %c0_93] : memref<8x432xf32, #tpu.memory_space<vmem>>, vector<8x432xf32>
    %c0_94 = arith.constant 0 : index
    %c0_95 = arith.constant 0 : index
    %92 = vector.load %arg14[%c0_94, %c0_95] : memref<432x256xf32, #tpu.memory_space<vmem>>, vector<432x256xf32>
    %cst_96 = arith.constant dense<0.000000e+00> : vector<8x256xf32>
    %93 = tpu.matmul %91, %92, %cst_96 {dimension_numbers = #tpu.dot_dimension_numbers<[1], [0], [0], [1], [0, 0, 1, 1], [], []>} : vector<8x432xf32>, vector<432x256xf32>, vector<8x256xf32> -> vector<8x256xf32>
    %c0_97 = arith.constant 0 : index
    %c0_98 = arith.constant 0 : index
    %94 = vector.load %arg6[%c0_97, %c0_98] : memref<8x1xf32, #tpu.memory_space<vmem>>, vector<8x1xf32>
    %95 = vector.broadcast %94 : vector<8x1xf32> to vector<8x256xf32>
    %96 = arith.addf %93, %95 : vector<8x256xf32>
    %cst_99 = arith.constant 0.000000e+00 : f32
    %97 = vector.broadcast %cst_99 : f32 to vector<8x256xf32>
    %98 = arith.cmpf oge, %96, %97 : vector<8x256xf32>
    %cst_100 = arith.constant 2.000000e-01 : f32
    %99 = vector.broadcast %cst_100 : f32 to vector<8x256xf32>
    %100 = arith.mulf %99, %96 : vector<8x256xf32>
    %101 = arith.select %98, %96, %100 : vector<8x256xi1>, vector<8x256xf32>
    %c0_101 = arith.constant 0 : index
    %c17_102 = arith.constant 17 : index
    %102 = vector.load %arg15[%c0_101, %c17_102] : memref<16x290xf32, #tpu.memory_space<vmem>>, vector<8x256xf32>
    tpu.vector_store %arg15[%c0_101, %c17_102], %101 {strides = array<i32>} : memref<16x290xf32, #tpu.memory_space<vmem>>, vector<8x256xf32>,
    %c0_103 = arith.constant 0 : index
    %c0_104 = arith.constant 0 : index
    %103 = vector.load %arg15[%c0_103, %c0_104] : memref<16x290xf32, #tpu.memory_space<vmem>>, vector<8x256xf32>
    %c0_105 = arith.constant 0 : index
    %c0_106 = arith.constant 0 : index
    %104 = vector.load %arg2[%c0_105, %c0_106] : memref<2x256xf32, #tpu.memory_space<vmem>>, vector<1x256xf32>
    %105 = vector.broadcast %104 : vector<1x256xf32> to vector<8x256xf32>
    %106 = arith.mulf %103, %105 : vector<8x256xf32>
    %c24 = arith.constant 24 : index
    %c0_107 = arith.constant 0 : index
    %107 = vector.load %arg14[%c24, %c0_107] : memref<432x256xf32, #tpu.memory_space<vmem>>, vector<8x256xf32>
    tpu.vector_store %arg14[%c24, %c0_107], %106 {strides = array<i32>} : memref<432x256xf32, #tpu.memory_space<vmem>>, vector<8x256xf32>,
    %c0_108 = arith.constant 0 : index
    %c1_109 = arith.constant 1 : index
    %108 = vector.load %arg15[%c0_108, %c1_109] : memref<16x290xf32, #tpu.memory_space<vmem>>, vector<8x256xf32>
    %c72 = arith.constant 72 : index
    %c0_110 = arith.constant 0 : index
    %109 = vector.load %arg14[%c72, %c0_110] : memref<432x256xf32, #tpu.memory_space<vmem>>, vector<8x256xf32>
    tpu.vector_store %arg14[%c72, %c0_110], %108 {strides = array<i32>} : memref<432x256xf32, #tpu.memory_space<vmem>>, vector<8x256xf32>,
    %c0_111 = arith.constant 0 : index
    %c2_112 = arith.constant 2 : index
    %110 = vector.load %arg15[%c0_111, %c2_112] : memref<16x290xf32, #tpu.memory_space<vmem>>, vector<8x256xf32>
    %c1_113 = arith.constant 1 : index
    %c0_114 = arith.constant 0 : index
    %111 = vector.load %arg2[%c1_113, %c0_114] : memref<2x256xf32, #tpu.memory_space<vmem>>, vector<1x256xf32>
    %112 = vector.broadcast %111 : vector<1x256xf32> to vector<8x256xf32>
    %113 = arith.mulf %110, %112 : vector<8x256xf32>
    %c120 = arith.constant 120 : index
    %c0_115 = arith.constant 0 : index
    %114 = vector.load %arg14[%c120, %c0_115] : memref<432x256xf32, #tpu.memory_space<vmem>>, vector<8x256xf32>
    tpu.vector_store %arg14[%c120, %c0_115], %113 {strides = array<i32>} : memref<432x256xf32, #tpu.memory_space<vmem>>, vector<8x256xf32>,
    %c0_116 = arith.constant 0 : index
    %c16_117 = arith.constant 16 : index
    %115 = vector.load %arg15[%c0_116, %c16_117] : memref<16x290xf32, #tpu.memory_space<vmem>>, vector<8x256xf32>
    %c0_118 = arith.constant 0 : index
    %c0_119 = arith.constant 0 : index
    %116 = vector.load %arg2[%c0_118, %c0_119] : memref<2x256xf32, #tpu.memory_space<vmem>>, vector<1x256xf32>
    %117 = vector.broadcast %116 : vector<1x256xf32> to vector<8x256xf32>
    %118 = arith.mulf %115, %117 : vector<8x256xf32>
    %c168 = arith.constant 168 : index
    %c0_120 = arith.constant 0 : index
    %119 = vector.load %arg14[%c168, %c0_120] : memref<432x256xf32, #tpu.memory_space<vmem>>, vector<8x256xf32>
    tpu.vector_store %arg14[%c168, %c0_120], %118 {strides = array<i32>} : memref<432x256xf32, #tpu.memory_space<vmem>>, vector<8x256xf32>,
    %c0_121 = arith.constant 0 : index
    %c17_122 = arith.constant 17 : index
    %120 = vector.load %arg15[%c0_121, %c17_122] : memref<16x290xf32, #tpu.memory_space<vmem>>, vector<8x256xf32>
    %c216 = arith.constant 216 : index
    %c0_123 = arith.constant 0 : index
    %121 = vector.load %arg14[%c216, %c0_123] : memref<432x256xf32, #tpu.memory_space<vmem>>, vector<8x256xf32>
    tpu.vector_store %arg14[%c216, %c0_123], %120 {strides = array<i32>} : memref<432x256xf32, #tpu.memory_space<vmem>>, vector<8x256xf32>,
    %c0_124 = arith.constant 0 : index
    %c18_125 = arith.constant 18 : index
    %122 = vector.load %arg15[%c0_124, %c18_125] : memref<16x290xf32, #tpu.memory_space<vmem>>, vector<8x256xf32>
    %c1_126 = arith.constant 1 : index
    %c0_127 = arith.constant 0 : index
    %123 = vector.load %arg2[%c1_126, %c0_127] : memref<2x256xf32, #tpu.memory_space<vmem>>, vector<1x256xf32>
    %124 = vector.broadcast %123 : vector<1x256xf32> to vector<8x256xf32>
    %125 = arith.mulf %122, %124 : vector<8x256xf32>
    %c264 = arith.constant 264 : index
    %c0_128 = arith.constant 0 : index
    %126 = vector.load %arg14[%c264, %c0_128] : memref<432x256xf32, #tpu.memory_space<vmem>>, vector<8x256xf32>
    tpu.vector_store %arg14[%c264, %c0_128], %125 {strides = array<i32>} : memref<432x256xf32, #tpu.memory_space<vmem>>, vector<8x256xf32>,
    %c0_129 = arith.constant 0 : index
    %c32_130 = arith.constant 32 : index
    %127 = vector.load %arg15[%c0_129, %c32_130] : memref<16x290xf32, #tpu.memory_space<vmem>>, vector<8x256xf32>
    %c0_131 = arith.constant 0 : index
    %c0_132 = arith.constant 0 : index
    %128 = vector.load %arg2[%c0_131, %c0_132] : memref<2x256xf32, #tpu.memory_space<vmem>>, vector<1x256xf32>
    %129 = vector.broadcast %128 : vector<1x256xf32> to vector<8x256xf32>
    %130 = arith.mulf %127, %129 : vector<8x256xf32>
    %c312 = arith.constant 312 : index
    %c0_133 = arith.constant 0 : index
    %131 = vector.load %arg14[%c312, %c0_133] : memref<432x256xf32, #tpu.memory_space<vmem>>, vector<8x256xf32>
    tpu.vector_store %arg14[%c312, %c0_133], %130 {strides = array<i32>} : memref<432x256xf32, #tpu.memory_space<vmem>>, vector<8x256xf32>,
    %c0_134 = arith.constant 0 : index
    %c33_135 = arith.constant 33 : index
    %132 = vector.load %arg15[%c0_134, %c33_135] : memref<16x290xf32, #tpu.memory_space<vmem>>, vector<8x256xf32>
    %c360 = arith.constant 360 : index
    %c0_136 = arith.constant 0 : index
    %133 = vector.load %arg14[%c360, %c0_136] : memref<432x256xf32, #tpu.memory_space<vmem>>, vector<8x256xf32>
    tpu.vector_store %arg14[%c360, %c0_136], %132 {strides = array<i32>} : memref<432x256xf32, #tpu.memory_space<vmem>>, vector<8x256xf32>,
    %c0_137 = arith.constant 0 : index
    %c34_138 = arith.constant 34 : index
    %134 = vector.load %arg15[%c0_137, %c34_138] : memref<16x290xf32, #tpu.memory_space<vmem>>, vector<8x256xf32>
    %c1_139 = arith.constant 1 : index
    %c0_140 = arith.constant 0 : index
    %135 = vector.load %arg2[%c1_139, %c0_140] : memref<2x256xf32, #tpu.memory_space<vmem>>, vector<1x256xf32>
    %136 = vector.broadcast %135 : vector<1x256xf32> to vector<8x256xf32>
    %137 = arith.mulf %134, %136 : vector<8x256xf32>
    %c408 = arith.constant 408 : index
    %c0_141 = arith.constant 0 : index
    %138 = vector.load %arg14[%c408, %c0_141] : memref<432x256xf32, #tpu.memory_space<vmem>>, vector<8x256xf32>
    tpu.vector_store %arg14[%c408, %c0_141], %137 {strides = array<i32>} : memref<432x256xf32, #tpu.memory_space<vmem>>, vector<8x256xf32>,
    %c0_142 = arith.constant 0 : index
    %c0_143 = arith.constant 0 : index
    %139 = vector.load %arg7[%c0_142, %c0_143] : memref<8x432xf32, #tpu.memory_space<vmem>>, vector<8x432xf32>
    %c0_144 = arith.constant 0 : index
    %c0_145 = arith.constant 0 : index
    %140 = vector.load %arg14[%c0_144, %c0_145] : memref<432x256xf32, #tpu.memory_space<vmem>>, vector<432x256xf32>
    %cst_146 = arith.constant dense<0.000000e+00> : vector<8x256xf32>
    %141 = tpu.matmul %139, %140, %cst_146 {dimension_numbers = #tpu.dot_dimension_numbers<[1], [0], [0], [1], [0, 0, 1, 1], [], []>} : vector<8x432xf32>, vector<432x256xf32>, vector<8x256xf32> -> vector<8x256xf32>
    %c0_147 = arith.constant 0 : index
    %c0_148 = arith.constant 0 : index
    %142 = vector.load %arg8[%c0_147, %c0_148] : memref<8x1xf32, #tpu.memory_space<vmem>>, vector<8x1xf32>
    %143 = vector.broadcast %142 : vector<8x1xf32> to vector<8x256xf32>
    %144 = arith.addf %141, %143 : vector<8x256xf32>
    %cst_149 = arith.constant 0.000000e+00 : f32
    %145 = vector.broadcast %cst_149 : f32 to vector<8x256xf32>
    %146 = arith.cmpf oge, %144, %145 : vector<8x256xf32>
    %cst_150 = arith.constant 2.000000e-01 : f32
    %147 = vector.broadcast %cst_150 : f32 to vector<8x256xf32>
    %148 = arith.mulf %147, %144 : vector<8x256xf32>
    %149 = arith.select %146, %144, %148 : vector<8x256xi1>, vector<8x256xf32>
    %c0_151 = arith.constant 0 : index
    %c17_152 = arith.constant 17 : index
    %150 = vector.load %arg15[%c0_151, %c17_152] : memref<16x290xf32, #tpu.memory_space<vmem>>, vector<8x256xf32>
    tpu.vector_store %arg15[%c0_151, %c17_152], %149 {strides = array<i32>} : memref<16x290xf32, #tpu.memory_space<vmem>>, vector<8x256xf32>,
    %c0_153 = arith.constant 0 : index
    %c0_154 = arith.constant 0 : index
    %151 = vector.load %arg15[%c0_153, %c0_154] : memref<16x290xf32, #tpu.memory_space<vmem>>, vector<8x256xf32>
    %c0_155 = arith.constant 0 : index
    %c0_156 = arith.constant 0 : index
    %152 = vector.load %arg2[%c0_155, %c0_156] : memref<2x256xf32, #tpu.memory_space<vmem>>, vector<1x256xf32>
    %153 = vector.broadcast %152 : vector<1x256xf32> to vector<8x256xf32>
    %154 = arith.mulf %151, %153 : vector<8x256xf32>
    %c32_157 = arith.constant 32 : index
    %c0_158 = arith.constant 0 : index
    %155 = vector.load %arg14[%c32_157, %c0_158] : memref<432x256xf32, #tpu.memory_space<vmem>>, vector<8x256xf32>
    tpu.vector_store %arg14[%c32_157, %c0_158], %154 {strides = array<i32>} : memref<432x256xf32, #tpu.memory_space<vmem>>, vector<8x256xf32>,
    %c0_159 = arith.constant 0 : index
    %c1_160 = arith.constant 1 : index
    %156 = vector.load %arg15[%c0_159, %c1_160] : memref<16x290xf32, #tpu.memory_space<vmem>>, vector<8x256xf32>
    %c80 = arith.constant 80 : index
    %c0_161 = arith.constant 0 : index
    %157 = vector.load %arg14[%c80, %c0_161] : memref<432x256xf32, #tpu.memory_space<vmem>>, vector<8x256xf32>
    tpu.vector_store %arg14[%c80, %c0_161], %156 {strides = array<i32>} : memref<432x256xf32, #tpu.memory_space<vmem>>, vector<8x256xf32>,
    %c0_162 = arith.constant 0 : index
    %c2_163 = arith.constant 2 : index
    %158 = vector.load %arg15[%c0_162, %c2_163] : memref<16x290xf32, #tpu.memory_space<vmem>>, vector<8x256xf32>
    %c1_164 = arith.constant 1 : index
    %c0_165 = arith.constant 0 : index
    %159 = vector.load %arg2[%c1_164, %c0_165] : memref<2x256xf32, #tpu.memory_space<vmem>>, vector<1x256xf32>
    %160 = vector.broadcast %159 : vector<1x256xf32> to vector<8x256xf32>
    %161 = arith.mulf %158, %160 : vector<8x256xf32>
    %c128 = arith.constant 128 : index
    %c0_166 = arith.constant 0 : index
    %162 = vector.load %arg14[%c128, %c0_166] : memref<432x256xf32, #tpu.memory_space<vmem>>, vector<8x256xf32>
    tpu.vector_store %arg14[%c128, %c0_166], %161 {strides = array<i32>} : memref<432x256xf32, #tpu.memory_space<vmem>>, vector<8x256xf32>,
    %c0_167 = arith.constant 0 : index
    %c16_168 = arith.constant 16 : index
    %163 = vector.load %arg15[%c0_167, %c16_168] : memref<16x290xf32, #tpu.memory_space<vmem>>, vector<8x256xf32>
    %c0_169 = arith.constant 0 : index
    %c0_170 = arith.constant 0 : index
    %164 = vector.load %arg2[%c0_169, %c0_170] : memref<2x256xf32, #tpu.memory_space<vmem>>, vector<1x256xf32>
    %165 = vector.broadcast %164 : vector<1x256xf32> to vector<8x256xf32>
    %166 = arith.mulf %163, %165 : vector<8x256xf32>
    %c176 = arith.constant 176 : index
    %c0_171 = arith.constant 0 : index
    %167 = vector.load %arg14[%c176, %c0_171] : memref<432x256xf32, #tpu.memory_space<vmem>>, vector<8x256xf32>
    tpu.vector_store %arg14[%c176, %c0_171], %166 {strides = array<i32>} : memref<432x256xf32, #tpu.memory_space<vmem>>, vector<8x256xf32>,
    %c0_172 = arith.constant 0 : index
    %c17_173 = arith.constant 17 : index
    %168 = vector.load %arg15[%c0_172, %c17_173] : memref<16x290xf32, #tpu.memory_space<vmem>>, vector<8x256xf32>
    %c224 = arith.constant 224 : index
    %c0_174 = arith.constant 0 : index
    %169 = vector.load %arg14[%c224, %c0_174] : memref<432x256xf32, #tpu.memory_space<vmem>>, vector<8x256xf32>
    tpu.vector_store %arg14[%c224, %c0_174], %168 {strides = array<i32>} : memref<432x256xf32, #tpu.memory_space<vmem>>, vector<8x256xf32>,
    %c0_175 = arith.constant 0 : index
    %c18_176 = arith.constant 18 : index
    %170 = vector.load %arg15[%c0_175, %c18_176] : memref<16x290xf32, #tpu.memory_space<vmem>>, vector<8x256xf32>
    %c1_177 = arith.constant 1 : index
    %c0_178 = arith.constant 0 : index
    %171 = vector.load %arg2[%c1_177, %c0_178] : memref<2x256xf32, #tpu.memory_space<vmem>>, vector<1x256xf32>
    %172 = vector.broadcast %171 : vector<1x256xf32> to vector<8x256xf32>
    %173 = arith.mulf %170, %172 : vector<8x256xf32>
    %c272 = arith.constant 272 : index
    %c0_179 = arith.constant 0 : index
    %174 = vector.load %arg14[%c272, %c0_179] : memref<432x256xf32, #tpu.memory_space<vmem>>, vector<8x256xf32>
    tpu.vector_store %arg14[%c272, %c0_179], %173 {strides = array<i32>} : memref<432x256xf32, #tpu.memory_space<vmem>>, vector<8x256xf32>,
    %c0_180 = arith.constant 0 : index
    %c32_181 = arith.constant 32 : index
    %175 = vector.load %arg15[%c0_180, %c32_181] : memref<16x290xf32, #tpu.memory_space<vmem>>, vector<8x256xf32>
    %c0_182 = arith.constant 0 : index
    %c0_183 = arith.constant 0 : index
    %176 = vector.load %arg2[%c0_182, %c0_183] : memref<2x256xf32, #tpu.memory_space<vmem>>, vector<1x256xf32>
    %177 = vector.broadcast %176 : vector<1x256xf32> to vector<8x256xf32>
    %178 = arith.mulf %175, %177 : vector<8x256xf32>
    %c320 = arith.constant 320 : index
    %c0_184 = arith.constant 0 : index
    %179 = vector.load %arg14[%c320, %c0_184] : memref<432x256xf32, #tpu.memory_space<vmem>>, vector<8x256xf32>
    tpu.vector_store %arg14[%c320, %c0_184], %178 {strides = array<i32>} : memref<432x256xf32, #tpu.memory_space<vmem>>, vector<8x256xf32>,
    %c0_185 = arith.constant 0 : index
    %c33_186 = arith.constant 33 : index
    %180 = vector.load %arg15[%c0_185, %c33_186] : memref<16x290xf32, #tpu.memory_space<vmem>>, vector<8x256xf32>
    %c368 = arith.constant 368 : index
    %c0_187 = arith.constant 0 : index
    %181 = vector.load %arg14[%c368, %c0_187] : memref<432x256xf32, #tpu.memory_space<vmem>>, vector<8x256xf32>
    tpu.vector_store %arg14[%c368, %c0_187], %180 {strides = array<i32>} : memref<432x256xf32, #tpu.memory_space<vmem>>, vector<8x256xf32>,
    %c0_188 = arith.constant 0 : index
    %c34_189 = arith.constant 34 : index
    %182 = vector.load %arg15[%c0_188, %c34_189] : memref<16x290xf32, #tpu.memory_space<vmem>>, vector<8x256xf32>
    %c1_190 = arith.constant 1 : index
    %c0_191 = arith.constant 0 : index
    %183 = vector.load %arg2[%c1_190, %c0_191] : memref<2x256xf32, #tpu.memory_space<vmem>>, vector<1x256xf32>
    %184 = vector.broadcast %183 : vector<1x256xf32> to vector<8x256xf32>
    %185 = arith.mulf %182, %184 : vector<8x256xf32>
    %c416 = arith.constant 416 : index
    %c0_192 = arith.constant 0 : index
    %186 = vector.load %arg14[%c416, %c0_192] : memref<432x256xf32, #tpu.memory_space<vmem>>, vector<8x256xf32>
    tpu.vector_store %arg14[%c416, %c0_192], %185 {strides = array<i32>} : memref<432x256xf32, #tpu.memory_space<vmem>>, vector<8x256xf32>,
    %c0_193 = arith.constant 0 : index
    %c0_194 = arith.constant 0 : index
    %187 = vector.load %arg9[%c0_193, %c0_194] : memref<8x432xf32, #tpu.memory_space<vmem>>, vector<8x432xf32>
    %c0_195 = arith.constant 0 : index
    %c0_196 = arith.constant 0 : index
    %188 = vector.load %arg14[%c0_195, %c0_196] : memref<432x256xf32, #tpu.memory_space<vmem>>, vector<432x256xf32>
    %cst_197 = arith.constant dense<0.000000e+00> : vector<8x256xf32>
    %189 = tpu.matmul %187, %188, %cst_197 {dimension_numbers = #tpu.dot_dimension_numbers<[1], [0], [0], [1], [0, 0, 1, 1], [], []>} : vector<8x432xf32>, vector<432x256xf32>, vector<8x256xf32> -> vector<8x256xf32>
    %c0_198 = arith.constant 0 : index
    %c0_199 = arith.constant 0 : index
    %190 = vector.load %arg10[%c0_198, %c0_199] : memref<8x1xf32, #tpu.memory_space<vmem>>, vector<8x1xf32>
    %191 = vector.broadcast %190 : vector<8x1xf32> to vector<8x256xf32>
    %192 = arith.addf %189, %191 : vector<8x256xf32>
    %cst_200 = arith.constant 0.000000e+00 : f32
    %193 = vector.broadcast %cst_200 : f32 to vector<8x256xf32>
    %194 = arith.cmpf oge, %192, %193 : vector<8x256xf32>
    %cst_201 = arith.constant 2.000000e-01 : f32
    %195 = vector.broadcast %cst_201 : f32 to vector<8x256xf32>
    %196 = arith.mulf %195, %192 : vector<8x256xf32>
    %197 = arith.select %194, %192, %196 : vector<8x256xi1>, vector<8x256xf32>
    %c0_202 = arith.constant 0 : index
    %c17_203 = arith.constant 17 : index
    %198 = vector.load %arg15[%c0_202, %c17_203] : memref<16x290xf32, #tpu.memory_space<vmem>>, vector<8x256xf32>
    tpu.vector_store %arg15[%c0_202, %c17_203], %197 {strides = array<i32>} : memref<16x290xf32, #tpu.memory_space<vmem>>, vector<8x256xf32>,
    %c0_204 = arith.constant 0 : index
    %c0_205 = arith.constant 0 : index
    %199 = vector.load %arg15[%c0_204, %c0_205] : memref<16x290xf32, #tpu.memory_space<vmem>>, vector<8x256xf32>
    %c0_206 = arith.constant 0 : index
    %c0_207 = arith.constant 0 : index
    %200 = vector.load %arg2[%c0_206, %c0_207] : memref<2x256xf32, #tpu.memory_space<vmem>>, vector<1x256xf32>
    %201 = vector.broadcast %200 : vector<1x256xf32> to vector<8x256xf32>
    %202 = arith.mulf %199, %201 : vector<8x256xf32>
    %c40 = arith.constant 40 : index
    %c0_208 = arith.constant 0 : index
    %203 = vector.load %arg14[%c40, %c0_208] : memref<432x256xf32, #tpu.memory_space<vmem>>, vector<8x256xf32>
    tpu.vector_store %arg14[%c40, %c0_208], %202 {strides = array<i32>} : memref<432x256xf32, #tpu.memory_space<vmem>>, vector<8x256xf32>,
    %c0_209 = arith.constant 0 : index
    %c1_210 = arith.constant 1 : index
    %204 = vector.load %arg15[%c0_209, %c1_210] : memref<16x290xf32, #tpu.memory_space<vmem>>, vector<8x256xf32>
    %c88 = arith.constant 88 : index
    %c0_211 = arith.constant 0 : index
    %205 = vector.load %arg14[%c88, %c0_211] : memref<432x256xf32, #tpu.memory_space<vmem>>, vector<8x256xf32>
    tpu.vector_store %arg14[%c88, %c0_211], %204 {strides = array<i32>} : memref<432x256xf32, #tpu.memory_space<vmem>>, vector<8x256xf32>,
    %c0_212 = arith.constant 0 : index
    %c2_213 = arith.constant 2 : index
    %206 = vector.load %arg15[%c0_212, %c2_213] : memref<16x290xf32, #tpu.memory_space<vmem>>, vector<8x256xf32>
    %c1_214 = arith.constant 1 : index
    %c0_215 = arith.constant 0 : index
    %207 = vector.load %arg2[%c1_214, %c0_215] : memref<2x256xf32, #tpu.memory_space<vmem>>, vector<1x256xf32>
    %208 = vector.broadcast %207 : vector<1x256xf32> to vector<8x256xf32>
    %209 = arith.mulf %206, %208 : vector<8x256xf32>
    %c136 = arith.constant 136 : index
    %c0_216 = arith.constant 0 : index
    %210 = vector.load %arg14[%c136, %c0_216] : memref<432x256xf32, #tpu.memory_space<vmem>>, vector<8x256xf32>
    tpu.vector_store %arg14[%c136, %c0_216], %209 {strides = array<i32>} : memref<432x256xf32, #tpu.memory_space<vmem>>, vector<8x256xf32>,
    %c0_217 = arith.constant 0 : index
    %c16_218 = arith.constant 16 : index
    %211 = vector.load %arg15[%c0_217, %c16_218] : memref<16x290xf32, #tpu.memory_space<vmem>>, vector<8x256xf32>
    %c0_219 = arith.constant 0 : index
    %c0_220 = arith.constant 0 : index
    %212 = vector.load %arg2[%c0_219, %c0_220] : memref<2x256xf32, #tpu.memory_space<vmem>>, vector<1x256xf32>
    %213 = vector.broadcast %212 : vector<1x256xf32> to vector<8x256xf32>
    %214 = arith.mulf %211, %213 : vector<8x256xf32>
    %c184 = arith.constant 184 : index
    %c0_221 = arith.constant 0 : index
    %215 = vector.load %arg14[%c184, %c0_221] : memref<432x256xf32, #tpu.memory_space<vmem>>, vector<8x256xf32>
    tpu.vector_store %arg14[%c184, %c0_221], %214 {strides = array<i32>} : memref<432x256xf32, #tpu.memory_space<vmem>>, vector<8x256xf32>,
    %c0_222 = arith.constant 0 : index
    %c17_223 = arith.constant 17 : index
    %216 = vector.load %arg15[%c0_222, %c17_223] : memref<16x290xf32, #tpu.memory_space<vmem>>, vector<8x256xf32>
    %c232 = arith.constant 232 : index
    %c0_224 = arith.constant 0 : index
    %217 = vector.load %arg14[%c232, %c0_224] : memref<432x256xf32, #tpu.memory_space<vmem>>, vector<8x256xf32>
    tpu.vector_store %arg14[%c232, %c0_224], %216 {strides = array<i32>} : memref<432x256xf32, #tpu.memory_space<vmem>>, vector<8x256xf32>,
    %c0_225 = arith.constant 0 : index
    %c18_226 = arith.constant 18 : index
    %218 = vector.load %arg15[%c0_225, %c18_226] : memref<16x290xf32, #tpu.memory_space<vmem>>, vector<8x256xf32>
    %c1_227 = arith.constant 1 : index
    %c0_228 = arith.constant 0 : index
    %219 = vector.load %arg2[%c1_227, %c0_228] : memref<2x256xf32, #tpu.memory_space<vmem>>, vector<1x256xf32>
    %220 = vector.broadcast %219 : vector<1x256xf32> to vector<8x256xf32>
    %221 = arith.mulf %218, %220 : vector<8x256xf32>
    %c280 = arith.constant 280 : index
    %c0_229 = arith.constant 0 : index
    %222 = vector.load %arg14[%c280, %c0_229] : memref<432x256xf32, #tpu.memory_space<vmem>>, vector<8x256xf32>
    tpu.vector_store %arg14[%c280, %c0_229], %221 {strides = array<i32>} : memref<432x256xf32, #tpu.memory_space<vmem>>, vector<8x256xf32>,
    %c0_230 = arith.constant 0 : index
    %c32_231 = arith.constant 32 : index
    %223 = vector.load %arg15[%c0_230, %c32_231] : memref<16x290xf32, #tpu.memory_space<vmem>>, vector<8x256xf32>
    %c0_232 = arith.constant 0 : index
    %c0_233 = arith.constant 0 : index
    %224 = vector.load %arg2[%c0_232, %c0_233] : memref<2x256xf32, #tpu.memory_space<vmem>>, vector<1x256xf32>
    %225 = vector.broadcast %224 : vector<1x256xf32> to vector<8x256xf32>
    %226 = arith.mulf %223, %225 : vector<8x256xf32>
    %c328 = arith.constant 328 : index
    %c0_234 = arith.constant 0 : index
    %227 = vector.load %arg14[%c328, %c0_234] : memref<432x256xf32, #tpu.memory_space<vmem>>, vector<8x256xf32>
    tpu.vector_store %arg14[%c328, %c0_234], %226 {strides = array<i32>} : memref<432x256xf32, #tpu.memory_space<vmem>>, vector<8x256xf32>,
    %c0_235 = arith.constant 0 : index
    %c33_236 = arith.constant 33 : index
    %228 = vector.load %arg15[%c0_235, %c33_236] : memref<16x290xf32, #tpu.memory_space<vmem>>, vector<8x256xf32>
    %c376 = arith.constant 376 : index
    %c0_237 = arith.constant 0 : index
    %229 = vector.load %arg14[%c376, %c0_237] : memref<432x256xf32, #tpu.memory_space<vmem>>, vector<8x256xf32>
    tpu.vector_store %arg14[%c376, %c0_237], %228 {strides = array<i32>} : memref<432x256xf32, #tpu.memory_space<vmem>>, vector<8x256xf32>,
    %c0_238 = arith.constant 0 : index
    %c34_239 = arith.constant 34 : index
    %230 = vector.load %arg15[%c0_238, %c34_239] : memref<16x290xf32, #tpu.memory_space<vmem>>, vector<8x256xf32>
    %c1_240 = arith.constant 1 : index
    %c0_241 = arith.constant 0 : index
    %231 = vector.load %arg2[%c1_240, %c0_241] : memref<2x256xf32, #tpu.memory_space<vmem>>, vector<1x256xf32>
    %232 = vector.broadcast %231 : vector<1x256xf32> to vector<8x256xf32>
    %233 = arith.mulf %230, %232 : vector<8x256xf32>
    %c424 = arith.constant 424 : index
    %c0_242 = arith.constant 0 : index
    %234 = vector.load %arg14[%c424, %c0_242] : memref<432x256xf32, #tpu.memory_space<vmem>>, vector<8x256xf32>
    tpu.vector_store %arg14[%c424, %c0_242], %233 {strides = array<i32>} : memref<432x256xf32, #tpu.memory_space<vmem>>, vector<8x256xf32>,
    %c0_243 = arith.constant 0 : index
    %c0_244 = arith.constant 0 : index
    %235 = vector.load %arg11[%c0_243, %c0_244] : memref<16x432xf32, #tpu.memory_space<vmem>>, vector<16x432xf32>
    %c0_245 = arith.constant 0 : index
    %c0_246 = arith.constant 0 : index
    %236 = vector.load %arg14[%c0_245, %c0_246] : memref<432x256xf32, #tpu.memory_space<vmem>>, vector<432x256xf32>
    %cst_247 = arith.constant dense<0.000000e+00> : vector<16x256xf32>
    %237 = tpu.matmul %235, %236, %cst_247 {dimension_numbers = #tpu.dot_dimension_numbers<[1], [0], [0], [1], [0, 0, 1, 1], [], []>} : vector<16x432xf32>, vector<432x256xf32>, vector<16x256xf32> -> vector<16x256xf32>
    %c0_248 = arith.constant 0 : index
    %c0_249 = arith.constant 0 : index
    %238 = vector.load %arg12[%c0_248, %c0_249] : memref<16x1xf32, #tpu.memory_space<vmem>>, vector<16x1xf32>
    %239 = vector.broadcast %238 : vector<16x1xf32> to vector<16x256xf32>
    %240 = arith.addf %237, %239 : vector<16x256xf32>
    %cst_250 = arith.constant 2.000000e-01 : f32
    %241 = vector.broadcast %cst_250 : f32 to vector<16x256xf32>
    %242 = arith.mulf %241, %240 : vector<16x256xf32>
    %243 = arith.addf %5, %242 : vector<16x256xf32>
    %c0_251 = arith.constant 0 : index
    %c0_252 = arith.constant 0 : index
    %c0_253 = arith.constant 0 : index
    %244 = vector.load %arg13[%c0_251, %c0_252, %c0_253] : memref<1x16x256xf32, #tpu.memory_space<vmem>>, vector<1x16x256xf32>
    %245 = vector.shape_cast %244 : vector<1x16x256xf32> to vector<16x256xf32>
    %246 = vector.shape_cast %243 : vector<16x256xf32> to vector<1x16x256xf32>
    tpu.vector_store %arg13[%c0_251, %c0_252, %c0_253], %246 {strides = array<i32>} : memref<1x16x256xf32, #tpu.memory_space<vmem>>, vector<1x16x256xf32>,
    return
  }
  func.func @transform_0(%arg0: i32) -> (i32, i32, i32) {
    %c0_i32 = arith.constant 0 : i32
    %c0_i32_0 = arith.constant 0 : i32
    %c0_i32_1 = arith.constant 0 : i32
    return %arg0, %c0_i32, %c0_i32_0 : i32, i32, i32
  }
  func.func @transform_1(%arg0: i32) -> (i32, i32) {
    %c0_i32 = arith.constant 0 : i32
    %c0_i32_0 = arith.constant 0 : i32
    %c0_i32_1 = arith.constant 0 : i32
    return %c0_i32, %c0_i32_0 : i32, i32
  }
  func.func @transform_2(%arg0: i32) -> (i32, i32) {
    %c0_i32 = arith.constant 0 : i32
    %c0_i32_0 = arith.constant 0 : i32
    %c0_i32_1 = arith.constant 0 : i32
    return %c0_i32, %c0_i32_0 : i32, i32
  }
  func.func @transform_3(%arg0: i32) -> (i32, i32) {
    %c0_i32 = arith.constant 0 : i32
    %c0_i32_0 = arith.constant 0 : i32
    %c0_i32_1 = arith.constant 0 : i32
    return %c0_i32, %c0_i32_0 : i32, i32
  }
  func.func @transform_4(%arg0: i32) -> (i32, i32) {
    %c0_i32 = arith.constant 0 : i32
    %c0_i32_0 = arith.constant 0 : i32
    %c0_i32_1 = arith.constant 0 : i32
    return %c0_i32, %c0_i32_0 : i32, i32
  }
  func.func @transform_5(%arg0: i32) -> (i32, i32) {
    %c0_i32 = arith.constant 0 : i32
    %c0_i32_0 = arith.constant 0 : i32
    %c0_i32_1 = arith.constant 0 : i32
    return %c0_i32, %c0_i32_0 : i32, i32
  }
  func.func @transform_6(%arg0: i32) -> (i32, i32) {
    %c0_i32 = arith.constant 0 : i32
    %c0_i32_0 = arith.constant 0 : i32
    %c0_i32_1 = arith.constant 0 : i32
    return %c0_i32, %c0_i32_0 : i32, i32
  }
  func.func @transform_7(%arg0: i32) -> (i32, i32) {
    %c0_i32 = arith.constant 0 : i32
    %c0_i32_0 = arith.constant 0 : i32
    %c0_i32_1 = arith.constant 0 : i32
    return %c0_i32, %c0_i32_0 : i32, i32
  }
  func.func @transform_8(%arg0: i32) -> (i32, i32) {
    %c0_i32 = arith.constant 0 : i32
    %c0_i32_0 = arith.constant 0 : i32
    %c0_i32_1 = arith.constant 0 : i32
    return %c0_i32, %c0_i32_0 : i32, i32
  }
  func.func @transform_9(%arg0: i32) -> (i32, i32) {
    %c0_i32 = arith.constant 0 : i32
    %c0_i32_0 = arith.constant 0 : i32
    %c0_i32_1 = arith.constant 0 : i32
    return %c0_i32, %c0_i32_0 : i32, i32
  }
  func.func @transform_10(%arg0: i32) -> (i32, i32) {
    %c0_i32 = arith.constant 0 : i32
    %c0_i32_0 = arith.constant 0 : i32
    %c0_i32_1 = arith.constant 0 : i32
    return %c0_i32, %c0_i32_0 : i32, i32
  }
  func.func @transform_11(%arg0: i32) -> (i32, i32) {
    %c0_i32 = arith.constant 0 : i32
    %c0_i32_0 = arith.constant 0 : i32
    %c0_i32_1 = arith.constant 0 : i32
    return %c0_i32, %c0_i32_0 : i32, i32
  }
  func.func @transform_12(%arg0: i32) -> (i32, i32, i32) {
    %c0_i32 = arith.constant 0 : i32
    %c0_i32_0 = arith.constant 0 : i32
    %c0_i32_1 = arith.constant 0 : i32
    return %arg0, %c0_i32, %c0_i32_0 : i32, i32, i32
  }
}

</mosaic_0001>

<llo_original>
// kernel: tpu_custom_call.1
$region0: #{tpu_custom_call.1}
  #allocation0 [shape = 'u32[]', space=smem, size = 0x4, offset = 0x4, fixed_abs, tag = 'smem constant byte address 0x4 - core index']
  #allocation1 [shape = 'u32[144,128]{1,0:T(1,128)}', space=vmem, size = 0x12000, scoped, tag = 'internal scratch']
  #allocation2 [shape = 'f32[432,256]{1,0:T(8,128)}', space=vmem, size = 0x6c000, scoped, tag = 'scratch operand']
  #allocation3 [shape = 'f32[16,290]{1,0:T(8,128)}', space=vmem, size = 0x6000, scoped, tag = 'scratch operand']
  %s0 = inlined_call_operand.hbm [shape: f32[2,16,256], index: 0, kind: input, shape index: {}]
  %s1 = inlined_call_operand.vmem [shape: f32[2,256], index: 1, kind: input, shape index: {}]
  %s2 = inlined_call_operand.hbm [shape: f32[8,432], index: 2, kind: input, shape index: {}]
  %s3 = inlined_call_operand.vmem [shape: f32[8,1], index: 3, kind: input, shape index: {}]
  %s4 = inlined_call_operand.hbm [shape: f32[8,432], index: 4, kind: input, shape index: {}]
  %s5 = inlined_call_operand.vmem [shape: f32[8,1], index: 5, kind: input, shape index: {}]
  %s6 = inlined_call_operand.hbm [shape: f32[8,432], index: 6, kind: input, shape index: {}]
  %s7 = inlined_call_operand.vmem [shape: f32[8,1], index: 7, kind: input, shape index: {}]
  %s8 = inlined_call_operand.hbm [shape: f32[8,432], index: 8, kind: input, shape index: {}]
  %s9 = inlined_call_operand.vmem [shape: f32[8,1], index: 9, kind: input, shape index: {}]
  %s10 = inlined_call_operand.vmem [shape: f32[16,432], index: 10, kind: input, shape index: {}]
  %s11 = inlined_call_operand.vmem [shape: f32[16,1], index: 11, kind: input, shape index: {}]
  %s12 = inlined_call_operand.hbm [shape: f32[2,16,256], index: 12, kind: output, shape index: {}]
  %s13 = sld [smem:[#allocation0]]
  $region101: #{tpu_custom_call.1} parent=0
    _
  %s15 = ssub.s32 1, %s13
  %s16 = scalar_select 0, %s15, %s13
  $region1: #{tpu_custom_call.1} parent=0
    #allocation4 [shape = 'u8[32768]{0}', space=vmem, size = 0x8000, scoped, tag = 'input window, operand 0']
    #allocation5 [shape = 's32[2]{0}', space=sflag, size = 0x8, scoped, tag = 'scoped memory for tpu_custom_call.1']
    #allocation6 [shape = 's32[2]{0}', space=sflag, size = 0x8, scoped, tag = 'scoped memory for tpu_custom_call.1']
    #allocation7 [shape = 'u8[16384]{0}', space=vmem, size = 0x4000, scoped, tag = 'input window, operand 2, single buffered']
    #allocation8 [shape = 's32[1]{0}', space=sflag, size = 0x4, scoped, tag = 'scoped memory for tpu_custom_call.1']
    #allocation9 [shape = 'u8[16384]{0}', space=vmem, size = 0x4000, scoped, tag = 'input window, operand 4, single buffered']
    #allocation10 [shape = 'u8[16384]{0}', space=vmem, size = 0x4000, scoped, tag = 'input window, operand 6, single buffered']
    #allocation11 [shape = 's32[1]{0}', space=sflag, size = 0x4, scoped, tag = 'scoped memory for tpu_custom_call.1']
    #allocation12 [shape = 'u8[16384]{0}', space=vmem, size = 0x4000, scoped, tag = 'input window, operand 8, single buffered']
    #allocation13 [shape = 'u8[32768]{0}', space=vmem, size = 0x8000, scoped, tag = 'output window, operand 0']
    %17 = vsyncpa [#allocation5], 0
    %s18 = scalar_lea.sflag [#allocation5], 1
    %19 = vsyncpa %s18, 0
    %20 = vsyncpa [#allocation8], 0
    %21 = vsyncpa [#allocation11], 0
    %22 = vsyncpa [#allocation6], 0
    %s23 = scalar_lea.sflag [#allocation6], 1
    %24 = vsyncpa %s23, 0
    loop: start=0, step=1, limit=4
    $region2: #{tpu_custom_call.1} parent=1 // loop_pre_header
      _
    $region3: #{tpu_custom_call.1} parent=1 // loop_header
      %s26 = sphi 0, %s30
      %p27 = scmp.ge.s32.totalorder %s26, 4
      %s36 = sphi 0, %s38
      %s39 = sphi 0, %s36
      %s40 = sphi 0, %s39
      %s56 = sphi 0, %s40
      %s60 = sphi 0, %s60
      %s62 = sphi 0, %s60
      %s63 = sphi 0, %s62
      %s77 = sphi 0, %s63
      %s81 = sphi 0, %s81
      %s83 = sphi 0, %s81
      %s84 = sphi 0, %s83
      %s98 = sphi 0, %s84
      %s102 = sphi 0, %s102
      %s104 = sphi 0, %s102
      %s105 = sphi 0, %s104
      %s119 = sphi 0, %s105
      %s123 = sphi 0, %s123
      %s125 = sphi 0, %s123
      %s126 = sphi 0, %s125
      %s140 = sphi 0, %s126
      %s144 = sphi 0, %s144
      %s146 = sphi 0, %s144
      %s147 = sphi 0, %s146
      %s161 = sphi 0, %s147
      %s165 = sphi 0, %s165
      %s167 = sphi 0, %s165
      %s168 = sphi 0, %s167
      %s182 = sphi 0, %s168
      %s186 = sphi 0, %s186
      %s188 = sphi 0, %s186
      %s189 = sphi 0, %s188
      %s203 = sphi 0, %s189
      %s207 = sphi 0, %s207
      %s209 = sphi 0, %s207
      %s210 = sphi 0, %s209
      %s224 = sphi 0, %s210
      %s228 = sphi 0, %s228
      %s230 = sphi 0, %s228
      %s231 = sphi 0, %s230
      %s245 = sphi 0, %s231
      %s249 = sphi 0, %s249
      %s251 = sphi 0, %s249
      %s252 = sphi 0, %s251
      %s266 = sphi 0, %s252
      %s270 = sphi 0, %s270
      %s272 = sphi 0, %s270
      %s273 = sphi 0, %s272
      %s287 = sphi 0, %s273
      %s293 = sphi 0, %s295
      %s296 = sphi 0, %s293
      %s297 = sphi 0, %s296
      %s313 = sphi 0, %s297
    $region4: #{tpu_custom_call.1} parent=1 // loop_header_branch
      %29 = sbr.rel (%p27) target = $region8
    $region5: #{tpu_custom_call.1} parent=1 // loop_body
      %s31 = ssub.s32 %s26, 1
      %s32 = ssub.s32 %s26, 2
      %s33 = sadd.s32 %s26, 1
      %s34 = ssub.s32 %s26, %s33
      %p35 = scmp.eq.s32.totalorder %s34, 0
      %s37 = sadd.s32 %s36, 1
      %s38 = scalar_select %p35, %s36, %s37
      %p41 = pneg %p35
      %p42 = scmp.eq.s32.totalorder %s26, 1
      %p43 = por %p41, %p42
      %p44 = scmp.ne.s32.totalorder %s36, %s39
      %p45 = scmp.eq.s32.totalorder %s26, 0
      %p46 = por %p44, %p45
      %p47 = scmp.ne.s32.totalorder %s36, %s39
      %p48 = scmp.eq.s32.totalorder %s31, 1
      %p49 = por %p47, %p48
      %p50 = scmp.ne.s32.totalorder %s39, %s40
      %p51 = scmp.eq.s32.totalorder %s31, 0
      %p52 = por %p50, %p51
      %p53 = scmp.ne.s32.totalorder %s39, %s40
      %p54 = scmp.eq.s32.totalorder %s32, 1
      %p55 = por %p53, %p54
      %p57 = scmp.ne.s32.totalorder %s40, %s56
      %p58 = scmp.eq.s32.totalorder %s32, 0
      %p59 = por %p57, %p58
      %s61 = sadd.s32 %s60, 1
      %p64 = scmp.eq.s32.totalorder %s26, 1
      %p65 = scmp.ne.s32.totalorder %s60, %s62
      %p66 = scmp.eq.s32.totalorder %s26, 0
      %p67 = por %p65, %p66
      %p68 = scmp.ne.s32.totalorder %s60, %s62
      %p69 = scmp.eq.s32.totalorder %s31, 1
      %p70 = por %p68, %p69
      %p71 = scmp.ne.s32.totalorder %s62, %s63
      %p72 = scmp.eq.s32.totalorder %s31, 0
      %p73 = por %p71, %p72
      %p74 = scmp.ne.s32.totalorder %s62, %s63
      %p75 = scmp.eq.s32.totalorder %s32, 1
      %p76 = por %p74, %p75
      %p78 = scmp.ne.s32.totalorder %s63, %s77
      %p79 = scmp.eq.s32.totalorder %s32, 0
      %p80 = por %p78, %p79
      %s82 = sadd.s32 %s81, 1
      %p85 = scmp.eq.s32.totalorder %s26, 1
      %p86 = scmp.ne.s32.totalorder %s81, %s83
      %p87 = scmp.eq.s32.totalorder %s26, 0
      %p88 = por %p86, %p87
      %p89 = scmp.ne.s32.totalorder %s81, %s83
      %p90 = scmp.eq.s32.totalorder %s31, 1
      %p91 = por %p89, %p90
      %p92 = scmp.ne.s32.totalorder %s83, %s84
      %p93 = scmp.eq.s32.totalorder %s31, 0
      %p94 = por %p92, %p93
      %p95 = scmp.ne.s32.totalorder %s83, %s84
      %p96 = scmp.eq.s32.totalorder %s32, 1
      %p97 = por %p95, %p96
      %p99 = scmp.ne.s32.totalorder %s84, %s98
      %p100 = scmp.eq.s32.totalorder %s32, 0
      %p101 = por %p99, %p100
      %s103 = sadd.s32 %s102, 1
      %p106 = scmp.eq.s32.totalorder %s26, 1
      %p107 = scmp.ne.s32.totalorder %s102, %s104
      %p108 = scmp.eq.s32.totalorder %s26, 0
      %p109 = por %p107, %p108
      %p110 = scmp.ne.s32.totalorder %s102, %s104
      %p111 = scmp.eq.s32.totalorder %s31, 1
      %p112 = por %p110, %p111
      %p113 = scmp.ne.s32.totalorder %s104, %s105
      %p114 = scmp.eq.s32.totalorder %s31, 0
      %p115 = por %p113, %p114
      %p116 = scmp.ne.s32.totalorder %s104, %s105
      %p117 = scmp.eq.s32.totalorder %s32, 1
      %p118 = por %p116, %p117
      %p120 = scmp.ne.s32.totalorder %s105, %s119
      %p121 = scmp.eq.s32.totalorder %s32, 0
      %p122 = por %p120, %p121
      %s124 = sadd.s32 %s123, 1
      %p127 = scmp.eq.s32.totalorder %s26, 1
      %p128 = scmp.ne.s32.totalorder %s123, %s125
      %p129 = scmp.eq.s32.totalorder %s26, 0
      %p130 = por %p128, %p129
      %p131 = scmp.ne.s32.totalorder %s123, %s125
      %p132 = scmp.eq.s32.totalorder %s31, 1
      %p133 = por %p131, %p132
      %p134 = scmp.ne.s32.totalorder %s125, %s126
      %p135 = scmp.eq.s32.totalorder %s31, 0
      %p136 = por %p134, %p135
      %p137 = scmp.ne.s32.totalorder %s125, %s126
      %p138 = scmp.eq.s32.totalorder %s32, 1
      %p139 = por %p137, %p138
      %p141 = scmp.ne.s32.totalorder %s126, %s140
      %p142 = scmp.eq.s32.totalorder %s32, 0
      %p143 = por %p141, %p142
      %s145 = sadd.s32 %s144, 1
      %p148 = scmp.eq.s32.totalorder %s26, 1
      %p149 = scmp.ne.s32.totalorder %s144, %s146
      %p150 = scmp.eq.s32.totalorder %s26, 0
      %p151 = por %p149, %p150
      %p152 = scmp.ne.s32.totalorder %s144, %s146
      %p153 = scmp.eq.s32.totalorder %s31, 1
      %p154 = por %p152, %p153
      %p155 = scmp.ne.s32.totalorder %s146, %s147
      %p156 = scmp.eq.s32.totalorder %s31, 0
      %p157 = por %p155, %p156
      %p158 = scmp.ne.s32.totalorder %s146, %s147
      %p159 = scmp.eq.s32.totalorder %s32, 1
      %p160 = por %p158, %p159
      %p162 = scmp.ne.s32.totalorder %s147, %s161
      %p163 = scmp.eq.s32.totalorder %s32, 0
      %p164 = por %p162, %p163
      %s166 = sadd.s32 %s165, 1
      %p169 = scmp.eq.s32.totalorder %s26, 1
      %p170 = scmp.ne.s32.totalorder %s165, %s167
      %p171 = scmp.eq.s32.totalorder %s26, 0
      %p172 = por %p170, %p171
      %p173 = scmp.ne.s32.totalorder %s165, %s167
      %p174 = scmp.eq.s32.totalorder %s31, 1
      %p175 = por %p173, %p174
      %p176 = scmp.ne.s32.totalorder %s167, %s168
      %p177 = scmp.eq.s32.totalorder %s31, 0
      %p178 = por %p176, %p177
      %p179 = scmp.ne.s32.totalorder %s167, %s168
      %p180 = scmp.eq.s32.totalorder %s32, 1
      %p181 = por %p179, %p180
      %p183 = scmp.ne.s32.totalorder %s168, %s182
      %p184 = scmp.eq.s32.totalorder %s32, 0
      %p185 = por %p183, %p184
      %s187 = sadd.s32 %s186, 1
      %p190 = scmp.eq.s32.totalorder %s26, 1
      %p191 = scmp.ne.s32.totalorder %s186, %s188
      %p192 = scmp.eq.s32.totalorder %s26, 0
      %p193 = por %p191, %p192
      %p194 = scmp.ne.s32.totalorder %s186, %s188
      %p195 = scmp.eq.s32.totalorder %s31, 1
      %p196 = por %p194, %p195
      %p197 = scmp.ne.s32.totalorder %s188, %s189
      %p198 = scmp.eq.s32.totalorder %s31, 0
      %p199 = por %p197, %p198
      %p200 = scmp.ne.s32.totalorder %s188, %s189
      %p201 = scmp.eq.s32.totalorder %s32, 1
      %p202 = por %p200, %p201
      %p204 = scmp.ne.s32.totalorder %s189, %s203
      %p205 = scmp.eq.s32.totalorder %s32, 0
      %p206 = por %p204, %p205
      %s208 = sadd.s32 %s207, 1
      %p211 = scmp.eq.s32.totalorder %s26, 1
      %p212 = scmp.ne.s32.totalorder %s207, %s209
      %p213 = scmp.eq.s32.totalorder %s26, 0
      %p214 = por %p212, %p213
      %p215 = scmp.ne.s32.totalorder %s207, %s209
      %p216 = scmp.eq.s32.totalorder %s31, 1
      %p217 = por %p215, %p216
      %p218 = scmp.ne.s32.totalorder %s209, %s210
      %p219 = scmp.eq.s32.totalorder %s31, 0
      %p220 = por %p218, %p219
      %p221 = scmp.ne.s32.totalorder %s209, %s210
      %p222 = scmp.eq.s32.totalorder %s32, 1
      %p223 = por %p221, %p222
      %p225 = scmp.ne.s32.totalorder %s210, %s224
      %p226 = scmp.eq.s32.totalorder %s32, 0
      %p227 = por %p225, %p226
      %s229 = sadd.s32 %s228, 1
      %p232 = scmp.eq.s32.totalorder %s26, 1
      %p233 = scmp.ne.s32.totalorder %s228, %s230
      %p234 = scmp.eq.s32.totalorder %s26, 0
      %p235 = por %p233, %p234
      %p236 = scmp.ne.s32.totalorder %s228, %s230
      %p237 = scmp.eq.s32.totalorder %s31, 1
      %p238 = por %p236, %p237
      %p239 = scmp.ne.s32.totalorder %s230, %s231
      %p240 = scmp.eq.s32.totalorder %s31, 0
      %p241 = por %p239, %p240
      %p242 = scmp.ne.s32.totalorder %s230, %s231
      %p243 = scmp.eq.s32.totalorder %s32, 1
      %p244 = por %p242, %p243
      %p246 = scmp.ne.s32.totalorder %s231, %s245
      %p247 = scmp.eq.s32.totalorder %s32, 0
      %p248 = por %p246, %p247
      %s250 = sadd.s32 %s249, 1
      %p253 = scmp.eq.s32.totalorder %s26, 1
      %p254 = scmp.ne.s32.totalorder %s249, %s251
      %p255 = scmp.eq.s32.totalorder %s26, 0
      %p256 = por %p254, %p255
      %p257 = scmp.ne.s32.totalorder %s249, %s251
      %p258 = scmp.eq.s32.totalorder %s31, 1
      %p259 = por %p257, %p258
      %p260 = scmp.ne.s32.totalorder %s251, %s252
      %p261 = scmp.eq.s32.totalorder %s31, 0
      %p262 = por %p260, %p261
      %p263 = scmp.ne.s32.totalorder %s251, %s252
      %p264 = scmp.eq.s32.totalorder %s32, 1
      %p265 = por %p263, %p264
      %p267 = scmp.ne.s32.totalorder %s252, %s266
      %p268 = scmp.eq.s32.totalorder %s32, 0
      %p269 = por %p267, %p268
      %s271 = sadd.s32 %s270, 1
      %p274 = scmp.eq.s32.totalorder %s26, 1
      %p275 = scmp.ne.s32.totalorder %s270, %s272
      %p276 = scmp.eq.s32.totalorder %s26, 0
      %p277 = por %p275, %p276
      %p278 = scmp.ne.s32.totalorder %s270, %s272
      %p279 = scmp.eq.s32.totalorder %s31, 1
      %p280 = por %p278, %p279
      %p281 = scmp.ne.s32.totalorder %s272, %s273
      %p282 = scmp.eq.s32.totalorder %s31, 0
      %p283 = por %p281, %p282
      %p284 = scmp.ne.s32.totalorder %s272, %s273
      %p285 = scmp.eq.s32.totalorder %s32, 1
      %p286 = por %p284, %p285
      %p288 = scmp.ne.s32.totalorder %s273, %s287
      %p289 = scmp.eq.s32.totalorder %s32, 0
      %p290 = por %p288, %p289
      %s291 = ssub.s32 %s26, %s33
      %p292 = scmp.eq.s32.totalorder %s291, 0
      %s294 = sadd.s32 %s293, 1
      %s295 = scalar_select %p292, %s293, %s294
      %p298 = pneg %p292
      %p299 = scmp.eq.s32.totalorder %s26, 1
      %p300 = por %p298, %p299
      %p301 = scmp.ne.s32.totalorder %s293, %s296
      %p302 = scmp.eq.s32.totalorder %s26, 0
      %p303 = por %p301, %p302
      %p304 = scmp.ne.s32.totalorder %s293, %s296
      %p305 = scmp.eq.s32.totalorder %s31, 1
      %p306 = por %p304, %p305
      %p307 = scmp.ne.s32.totalorder %s296, %s297
      %p308 = scmp.eq.s32.totalorder %s31, 0
      %p309 = por %p307, %p308
      %p310 = scmp.ne.s32.totalorder %s296, %s297
      %p311 = scmp.eq.s32.totalorder %s32, 1
      %p312 = por %p310, %p311
      %p314 = scmp.ne.s32.totalorder %s297, %s313
      %p315 = scmp.eq.s32.totalorder %s32, 0
      %p316 = por %p314, %p315
      %p317 = scmp.le.s32.totalorder 1, %s26
      %p318 = scmp.lt.s32.totalorder %s26, 3
      %p319 = pnand %p317, %p318
      %p320 = pneg %p319
      // Predicated region
      $region9: #{tpu_custom_call.1} parent=5 // pred_check
        _
      $region10: #{tpu_custom_call.1} parent=5 // pred_check_branch
        %322 = sbr.rel (%p319) target = $region12
      $region11: #{tpu_custom_call.1} parent=5 // pred_region
        %s323 = ssub.s32 %s26, 1
        // Predicated region
        $region13: #{tpu_custom_call.1} parent=11 // pred_check
          %p324 = pneg %p73
        $region14: #{tpu_custom_call.1} parent=11 // pred_check_branch
          %326 = sbr.rel (%p324) target = $region16
        $region15: #{tpu_custom_call.1} parent=11 // pred_region
          _
        $region16: #{tpu_custom_call.1} parent=11 // pred_fallthru
          _
        // Predicated region
        $region17: #{tpu_custom_call.1} parent=11 // pred_check
          %p327 = pneg %p94
        $region18: #{tpu_custom_call.1} parent=11 // pred_check_branch
          %329 = sbr.rel (%p327) target = $region20
        $region19: #{tpu_custom_call.1} parent=11 // pred_region
          %s331 = ssub.s32 512, 512
          %332 = vsyncadd [#allocation8], %s331
          %s334 = sshll.u32 [#allocation7], 4
          %s335 = int_to_ptr.vmem [resolvable:$true] %s334
          %337 = dma.hbm_to_vmem [thread:$0]  %s2, 512, %s335, [#allocation8]
        $region20: #{tpu_custom_call.1} parent=11 // pred_fallthru
          _
        // Predicated region
        $region21: #{tpu_custom_call.1} parent=11 // pred_check
          %p338 = pneg %p115
        $region22: #{tpu_custom_call.1} parent=11 // pred_check_branch
          %340 = sbr.rel (%p338) target = $region24
        $region23: #{tpu_custom_call.1} parent=11 // pred_region
          _
        $region24: #{tpu_custom_call.1} parent=11 // pred_fallthru
          _
        // Predicated region
        $region25: #{tpu_custom_call.1} parent=11 // pred_check
          %p341 = pneg %p136
        $region26: #{tpu_custom_call.1} parent=11 // pred_check_branch
          %343 = sbr.rel (%p341) target = $region28
        $region27: #{tpu_custom_call.1} parent=11 // pred_region
          %s345 = ssub.s32 512, 512
          %346 = vsyncadd [#allocation8], %s345
          %s348 = sshll.u32 [#allocation9], 4
          %s349 = int_to_ptr.vmem [resolvable:$true] %s348
          %351 = dma.hbm_to_vmem [thread:$0]  %s4, 512, %s349, [#allocation8]
        $region28: #{tpu_custom_call.1} parent=11 // pred_fallthru
          _
        // Predicated region
        $region29: #{tpu_custom_call.1} parent=11 // pred_check
          %p352 = pneg %p157
        $region30: #{tpu_custom_call.1} parent=11 // pred_check_branch
          %354 = sbr.rel (%p352) target = $region32
        $region31: #{tpu_custom_call.1} parent=11 // pred_region
          _
        $region32: #{tpu_custom_call.1} parent=11 // pred_fallthru
          _
        // Predicated region
        $region33: #{tpu_custom_call.1} parent=11 // pred_check
          %p355 = pneg %p178
        $region34: #{tpu_custom_call.1} parent=11 // pred_check_branch
          %357 = sbr.rel (%p355) target = $region36
        $region35: #{tpu_custom_call.1} parent=11 // pred_region
          %s359 = ssub.s32 512, 512
          %360 = vsyncadd [#allocation11], %s359
          %s362 = sshll.u32 [#allocation10], 4
          %s363 = int_to_ptr.vmem [resolvable:$true] %s362
          %365 = dma.hbm_to_vmem [thread:$0]  %s6, 512, %s363, [#allocation11]
        $region36: #{tpu_custom_call.1} parent=11 // pred_fallthru
          _
        // Predicated region
        $region37: #{tpu_custom_call.1} parent=11 // pred_check
          %p366 = pneg %p199
        $region38: #{tpu_custom_call.1} parent=11 // pred_check_branch
          %368 = sbr.rel (%p366) target = $region40
        $region39: #{tpu_custom_call.1} parent=11 // pred_region
          _
        $region40: #{tpu_custom_call.1} parent=11 // pred_fallthru
          _
        // Predicated region
        $region41: #{tpu_custom_call.1} parent=11 // pred_check
          %p369 = pneg %p220
        $region42: #{tpu_custom_call.1} parent=11 // pred_check_branch
          %371 = sbr.rel (%p369) target = $region44
        $region43: #{tpu_custom_call.1} parent=11 // pred_region
          %s373 = ssub.s32 512, 512
          %374 = vsyncadd [#allocation11], %s373
          %s376 = sshll.u32 [#allocation12], 4
          %s377 = int_to_ptr.vmem [resolvable:$true] %s376
          %379 = dma.hbm_to_vmem [thread:$0]  %s8, 512, %s377, [#allocation11]
        $region44: #{tpu_custom_call.1} parent=11 // pred_fallthru
          _
        // Predicated region
        $region45: #{tpu_custom_call.1} parent=11 // pred_check
          %p380 = pneg %p241
        $region46: #{tpu_custom_call.1} parent=11 // pred_check_branch
          %382 = sbr.rel (%p380) target = $region48
        $region47: #{tpu_custom_call.1} parent=11 // pred_region
          _
        $region48: #{tpu_custom_call.1} parent=11 // pred_fallthru
          _
        // Predicated region
        $region49: #{tpu_custom_call.1} parent=11 // pred_check
          %p383 = pneg %p262
        $region50: #{tpu_custom_call.1} parent=11 // pred_check_branch
          %385 = sbr.rel (%p383) target = $region52
        $region51: #{tpu_custom_call.1} parent=11 // pred_region
          _
        $region52: #{tpu_custom_call.1} parent=11 // pred_fallthru
          _
        // Predicated region
        $region53: #{tpu_custom_call.1} parent=11 // pred_check
          %p386 = pneg %p283
        $region54: #{tpu_custom_call.1} parent=11 // pred_check_branch
          %388 = sbr.rel (%p386) target = $region56
        $region55: #{tpu_custom_call.1} parent=11 // pred_region
          _
        $region56: #{tpu_custom_call.1} parent=11 // pred_fallthru
          _
      $region12: #{tpu_custom_call.1} parent=5 // pred_fallthru
        _
      %p389 = scmp.lt.s32.totalorder %s26, 2
      // Predicated region
      $region57: #{tpu_custom_call.1} parent=5 // pred_check
        %p390 = pneg %p389
      $region58: #{tpu_custom_call.1} parent=5 // pred_check_branch
        %392 = sbr.rel (%p390) target = $region60
      $region59: #{tpu_custom_call.1} parent=5 // pred_region
        // Predicated region
        $region61: #{tpu_custom_call.1} parent=59 // pred_check
          %p393 = pneg %p46
        $region62: #{tpu_custom_call.1} parent=59 // pred_check_branch
          %395 = sbr.rel (%p393) target = $region64
        $region63: #{tpu_custom_call.1} parent=59 // pred_region
          %s396 = sand.u32 %s36, 1
          %s397 = scalar_lea.sflag [#allocation5], %s396
          %s398 = sand.u32 %s36, 1
          %s399 = smul.addr %s398, 32
          %s400 = scalar_lea.vmem [#allocation4], %s399
          %s402 = ssub.s32 512, 512
          %403 = vsyncadd %s397, %s402
          %s404 = smul.addr %s26, 4
          %s405 = smul.addr %s404, 128
          %s406 = scalar_lea.hbm %s0, %s405
          %s407 = sshll.u32 %s400, 4
          %s408 = int_to_ptr.vmem [resolvable:$true] %s407
          %413 = dma.hbm_to_vmem [thread:$0]  %s406, 512, %s408, %s397, 256, 256, 16
        $region64: #{tpu_custom_call.1} parent=59 // pred_fallthru
          _
      $region60: #{tpu_custom_call.1} parent=5 // pred_fallthru
        _
      %p414 = scmp.le.s32.totalorder 1, %s26
      %p415 = scmp.lt.s32.totalorder %s26, 3
      %p416 = pnand %p414, %p415
      %p417 = pneg %p416
      // Predicated region
      $region65: #{tpu_custom_call.1} parent=5 // pred_check
        _
      $region66: #{tpu_custom_call.1} parent=5 // pred_check_branch
        %419 = sbr.rel (%p416) target = $region68
      $region67: #{tpu_custom_call.1} parent=5 // pred_region
        %s420 = ssub.s32 %s26, 1
        %s421 = sand.u32 %s39, 1
        %s422 = scalar_lea.sflag [#allocation5], %s421
        %s423 = sand.u32 %s39, 1
        %s424 = smul.addr %s423, 32
        %s425 = scalar_lea.vmem [#allocation4], %s424
        // Predicated region
        $region69: #{tpu_custom_call.1} parent=67 // pred_check
          %p426 = pneg %p52
        $region70: #{tpu_custom_call.1} parent=67 // pred_check_branch
          %428 = sbr.rel (%p426) target = $region72
        $region71: #{tpu_custom_call.1} parent=67 // pred_region
          %429 = dma.done %s422, 512
        $region72: #{tpu_custom_call.1} parent=67 // pred_fallthru
          _
        // Predicated region
        $region73: #{tpu_custom_call.1} parent=67 // pred_check
          %p430 = pneg %p94
        $region74: #{tpu_custom_call.1} parent=67 // pred_check_branch
          %432 = sbr.rel (%p430) target = $region76
        $region75: #{tpu_custom_call.1} parent=67 // pred_region
          %433 = dma.done [#allocation8], 512
        $region76: #{tpu_custom_call.1} parent=67 // pred_fallthru
          _
        // Predicated region
        $region77: #{tpu_custom_call.1} parent=67 // pred_check
          %p434 = pneg %p136
        $region78: #{tpu_custom_call.1} parent=67 // pred_check_branch
          %436 = sbr.rel (%p434) target = $region80
        $region79: #{tpu_custom_call.1} parent=67 // pred_region
          %437 = dma.done [#allocation8], 512
        $region80: #{tpu_custom_call.1} parent=67 // pred_fallthru
          _
        // Predicated region
        $region81: #{tpu_custom_call.1} parent=67 // pred_check
          %p438 = pneg %p178
        $region82: #{tpu_custom_call.1} parent=67 // pred_check_branch
          %440 = sbr.rel (%p438) target = $region84
        $region83: #{tpu_custom_call.1} parent=67 // pred_region
          %441 = dma.done [#allocation11], 512
        $region84: #{tpu_custom_call.1} parent=67 // pred_fallthru
          _
        // Predicated region
        $region85: #{tpu_custom_call.1} parent=67 // pred_check
          %p442 = pneg %p220
        $region86: #{tpu_custom_call.1} parent=67 // pred_check_branch
          %444 = sbr.rel (%p442) target = $region88
        $region87: #{tpu_custom_call.1} parent=67 // pred_region
          %445 = dma.done [#allocation11], 512
        $region88: #{tpu_custom_call.1} parent=67 // pred_fallthru
          _
        %s446 = sand.u32 %s39, 1
        %s447 = scalar_lea.sflag [#allocation5], %s446
        %s448 = sand.u32 %s39, 1
        %s449 = smul.addr %s448, 32
        %s450 = scalar_lea.vmem [#allocation4], %s449
        %p451 = pneg %p52
        %p452 = pneg %p49
        %p453 = pneg %p73
        %p454 = pneg %p70
        %p455 = pneg %p94
        %p456 = pneg %p91
        %p457 = pneg %p115
        %p458 = pneg %p112
        %p459 = pneg %p136
        %p460 = pneg %p133
        %p461 = pneg %p157
        %p462 = pneg %p154
        %p463 = pneg %p178
        %p464 = pneg %p175
        %p465 = pneg %p199
        %p466 = pneg %p196
        %p467 = pneg %p220
        %p468 = pneg %p217
        %p469 = pneg %p241
        %p470 = pneg %p238
        %p471 = pneg %p262
        %p472 = pneg %p259
        %p473 = pneg %p283
        %p474 = pneg %p280
        %p475 = pneg %p309
        %p476 = pneg %p306
        %s477 = sand.u32 %s296, 1
        %s478 = scalar_lea.sflag [#allocation6], %s477
        %s479 = sand.u32 %s296, 1
        %s480 = smul.addr %s479, 32
        %s481 = scalar_lea.vmem [#allocation13], %s480
        %482 = vst [vmem:[#allocation2] sm:$0xff] 0.0
        %483 = vst [vmem:[#allocation2 + $0x8] sm:$0xff] 0.0
        %484 = vst [vmem:[#allocation2 + $0x10] sm:$0xff] 0.0
        %485 = vst [vmem:[#allocation2 + $0x18] sm:$0xff] 0.0
        %486 = vst [vmem:[#allocation2 + $0x20] sm:$0xff] 0.0
        %487 = vst [vmem:[#allocation2 + $0x28] sm:$0xff] 0.0
        %488 = vst [vmem:[#allocation2 + $0x30] sm:$0xff] 0.0
        %489 = vst [vmem:[#allocation2 + $0x38] sm:$0xff] 0.0
        %490 = vst [vmem:[#allocation2 + $0x40] sm:$0xff] 0.0
        %491 = vst [vmem:[#allocation2 + $0x48] sm:$0xff] 0.0
        %492 = vst [vmem:[#allocation2 + $0x50] sm:$0xff] 0.0
        %493 = vst [vmem:[#allocation2 + $0x58] sm:$0xff] 0.0
        %494 = vst [vmem:[#allocation2 + $0x60] sm:$0xff] 0.0
        %495 = vst [vmem:[#allocation2 + $0x68] sm:$0xff] 0.0
        %496 = vst [vmem:[#allocation2 + $0x70] sm:$0xff] 0.0
        %497 = vst [vmem:[#allocation2 + $0x78] sm:$0xff] 0.0
        %498 = vst [vmem:[#allocation2 + $0x80] sm:$0xff] 0.0
        %499 = vst [vmem:[#allocation2 + $0x88] sm:$0xff] 0.0
        %500 = vst [vmem:[#allocation2 + $0x90] sm:$0xff] 0.0
        %501 = vst [vmem:[#allocation2 + $0x98] sm:$0xff] 0.0
        %502 = vst [vmem:[#allocation2 + $0xa0] sm:$0xff] 0.0
        %503 = vst [vmem:[#allocation2 + $0xa8] sm:$0xff] 0.0
        %504 = vst [vmem:[#allocation2 + $0xb0] sm:$0xff] 0.0
        %505 = vst [vmem:[#allocation2 + $0xb8] sm:$0xff] 0.0
        %506 = vst [vmem:[#allocation2 + $0xc0] sm:$0xff] 0.0
        %507 = vst [vmem:[#allocation2 + $0xc8] sm:$0xff] 0.0
        %508 = vst [vmem:[#allocation2 + $0xd0] sm:$0xff] 0.0
        %509 = vst [vmem:[#allocation2 + $0xd8] sm:$0xff] 0.0
        %510 = vst [vmem:[#allocation2 + $0xe0] sm:$0xff] 0.0
        %511 = vst [vmem:[#allocation2 + $0xe8] sm:$0xff] 0.0
        %512 = vst [vmem:[#allocation2 + $0xf0] sm:$0xff] 0.0
        %513 = vst [vmem:[#allocation2 + $0xf8] sm:$0xff] 0.0
        %514 = vst [vmem:[#allocation2 + $0x100] sm:$0xff] 0.0
        %515 = vst [vmem:[#allocation2 + $0x108] sm:$0xff] 0.0
        %516 = vst [vmem:[#allocation2 + $0x110] sm:$0xff] 0.0
        %517 = vst [vmem:[#allocation2 + $0x118] sm:$0xff] 0.0
        %518 = vst [vmem:[#allocation2 + $0x120] sm:$0xff] 0.0
        %519 = vst [vmem:[#allocation2 + $0x128] sm:$0xff] 0.0
        %520 = vst [vmem:[#allocation2 + $0x130] sm:$0xff] 0.0
        %521 = vst [vmem:[#allocation2 + $0x138] sm:$0xff] 0.0
        %522 = vst [vmem:[#allocation2 + $0x140] sm:$0xff] 0.0
        %523 = vst [vmem:[#allocation2 + $0x148] sm:$0xff] 0.0
        %524 = vst [vmem:[#allocation2 + $0x150] sm:$0xff] 0.0
        %525 = vst [vmem:[#allocation2 + $0x158] sm:$0xff] 0.0
        %526 = vst [vmem:[#allocation2 + $0x160] sm:$0xff] 0.0
        %527 = vst [vmem:[#allocation2 + $0x168] sm:$0xff] 0.0
        %528 = vst [vmem:[#allocation2 + $0x170] sm:$0xff] 0.0
        %529 = vst [vmem:[#allocation2 + $0x178] sm:$0xff] 0.0
        %530 = vst [vmem:[#allocation2 + $0x180] sm:$0xff] 0.0
        %531 = vst [vmem:[#allocation2 + $0x188] sm:$0xff] 0.0
        %532 = vst [vmem:[#allocation2 + $0x190] sm:$0xff] 0.0
        %533 = vst [vmem:[#allocation2 + $0x198] sm:$0xff] 0.0
        %534 = vst [vmem:[#allocation2 + $0x1a0] sm:$0xff] 0.0
        %535 = vst [vmem:[#allocation2 + $0x1a8] sm:$0xff] 0.0
        %536 = vst [vmem:[#allocation2 + $0x1b0] sm:$0xff] 0.0
        %537 = vst [vmem:[#allocation2 + $0x1b8] sm:$0xff] 0.0
        %538 = vst [vmem:[#allocation2 + $0x1c0] sm:$0xff] 0.0
        %539 = vst [vmem:[#allocation2 + $0x1c8] sm:$0xff] 0.0
        %540 = vst [vmem:[#allocation2 + $0x1d0] sm:$0xff] 0.0
        %541 = vst [vmem:[#allocation2 + $0x1d8] sm:$0xff] 0.0
        %542 = vst [vmem:[#allocation2 + $0x1e0] sm:$0xff] 0.0
        %543 = vst [vmem:[#allocation2 + $0x1e8] sm:$0xff] 0.0
        %544 = vst [vmem:[#allocation2 + $0x1f0] sm:$0xff] 0.0
        %545 = vst [vmem:[#allocation2 + $0x1f8] sm:$0xff] 0.0
        %546 = vst [vmem:[#allocation2 + $0x200] sm:$0xff] 0.0
        %547 = vst [vmem:[#allocation2 + $0x208] sm:$0xff] 0.0
        %548 = vst [vmem:[#allocation2 + $0x210] sm:$0xff] 0.0
        %549 = vst [vmem:[#allocation2 + $0x218] sm:$0xff] 0.0
        %550 = vst [vmem:[#allocation2 + $0x220] sm:$0xff] 0.0
        %551 = vst [vmem:[#allocation2 + $0x228] sm:$0xff] 0.0
        %552 = vst [vmem:[#allocation2 + $0x230] sm:$0xff] 0.0
        %553 = vst [vmem:[#allocation2 + $0x238] sm:$0xff] 0.0
        %554 = vst [vmem:[#allocation2 + $0x240] sm:$0xff] 0.0
        %555 = vst [vmem:[#allocation2 + $0x248] sm:$0xff] 0.0
        %556 = vst [vmem:[#allocation2 + $0x250] sm:$0xff] 0.0
        %557 = vst [vmem:[#allocation2 + $0x258] sm:$0xff] 0.0
        %558 = vst [vmem:[#allocation2 + $0x260] sm:$0xff] 0.0
        %559 = vst [vmem:[#allocation2 + $0x268] sm:$0xff] 0.0
        %560 = vst [vmem:[#allocation2 + $0x270] sm:$0xff] 0.0
        %561 = vst [vmem:[#allocation2 + $0x278] sm:$0xff] 0.0
        %562 = vst [vmem:[#allocation2 + $0x280] sm:$0xff] 0.0
        %563 = vst [vmem:[#allocation2 + $0x288] sm:$0xff] 0.0
        %564 = vst [vmem:[#allocation2 + $0x290] sm:$0xff] 0.0
        %565 = vst [vmem:[#allocation2 + $0x298] sm:$0xff] 0.0
        %566 = vst [vmem:[#allocation2 + $0x2a0] sm:$0xff] 0.0
        %567 = vst [vmem:[#allocation2 + $0x2a8] sm:$0xff] 0.0
        %568 = vst [vmem:[#allocation2 + $0x2b0] sm:$0xff] 0.0
        %569 = vst [vmem:[#allocation2 + $0x2b8] sm:$0xff] 0.0
        %570 = vst [vmem:[#allocation2 + $0x2c0] sm:$0xff] 0.0
        %571 = vst [vmem:[#allocation2 + $0x2c8] sm:$0xff] 0.0
        %572 = vst [vmem:[#allocation2 + $0x2d0] sm:$0xff] 0.0
        %573 = vst [vmem:[#allocation2 + $0x2d8] sm:$0xff] 0.0
        %574 = vst [vmem:[#allocation2 + $0x2e0] sm:$0xff] 0.0
        %575 = vst [vmem:[#allocation2 + $0x2e8] sm:$0xff] 0.0
        %576 = vst [vmem:[#allocation2 + $0x2f0] sm:$0xff] 0.0
        %577 = vst [vmem:[#allocation2 + $0x2f8] sm:$0xff] 0.0
        %578 = vst [vmem:[#allocation2 + $0x300] sm:$0xff] 0.0
        %579 = vst [vmem:[#allocation2 + $0x308] sm:$0xff] 0.0
        %580 = vst [vmem:[#allocation2 + $0x310] sm:$0xff] 0.0
        %581 = vst [vmem:[#allocation2 + $0x318] sm:$0xff] 0.0
        %582 = vst [vmem:[#allocation2 + $0x320] sm:$0xff] 0.0
        %583 = vst [vmem:[#allocation2 + $0x328] sm:$0xff] 0.0
        %584 = vst [vmem:[#allocation2 + $0x330] sm:$0xff] 0.0
        %585 = vst [vmem:[#allocation2 + $0x338] sm:$0xff] 0.0
        %586 = vst [vmem:[#allocation2 + $0x340] sm:$0xff] 0.0
        %587 = vst [vmem:[#allocation2 + $0x348] sm:$0xff] 0.0
        %588 = vst [vmem:[#allocation2 + $0x350] sm:$0xff] 0.0
        %589 = vst [vmem:[#allocation2 + $0x358] sm:$0xff] 0.0
        %590 = vst [vmem:[#allocation3] sm:$0xff] 0.0
        %591 = vst [vmem:[#allocation3 + $0x8] sm:$0xff] 0.0
        %vm592 = vcmask 277504
        %593 = vst.msk [vmem:[#allocation3 + $0x10] sm:$0xff] %vm592, 0.0
        %594 = vst [vmem:[#allocation3 + $0x18] sm:$0xff] 0.0
        %595 = vst [vmem:[#allocation3 + $0x20] sm:$0xff] 0.0
        %596 = vst.msk [vmem:[#allocation3 + $0x28] sm:$0xff] %vm592, 0.0
        %v597 = vld [vmem:[%s425] sm:$0xff]
        %v598 = vld [vmem:[%s425 + $0x8] sm:$0xff]
        %v599 = vld [vmem:[%s425 + $0x10] sm:$0xff]
        %v600 = vld [vmem:[%s425 + $0x18] sm:$0xff]
        %605 = vrot.lane.b32.xlu0 %v597, 17
        %v606 = vpop.permute.xlu0 %605
        %607 = vrot.lane.b32.xlu0 %v598, 17
        %v608 = vpop.permute.xlu0 %607
        %609 = vrot.lane.b32.xlu0 %v599, 17
        %v610 = vpop.permute.xlu0 %609
        %611 = vrot.lane.b32.xlu0 %v600, 17
        %v612 = vpop.permute.xlu0 %611
        %vm613 = vcmask 138240
        %v614 = vsel %vm613, %v606, %v608
        %v615 = vsel %vm613, %v610, %v612
        %vm622 = vcmask 1047688
        %623 = vst.msk [vmem:[#allocation3] sm:$0xff] %vm622, %v606
        %624 = vst [vmem:[#allocation3 + $0x8] sm:$0xff] %v614
        %625 = vst.msk [vmem:[#allocation3 + $0x10] sm:$0xff] %vm613, %v608
        %626 = vst.msk [vmem:[#allocation3 + $0x18] sm:$0xff] %vm622, %v610
        %627 = vst [vmem:[#allocation3 + $0x20] sm:$0xff] %v615
        %628 = vst.msk [vmem:[#allocation3 + $0x28] sm:$0xff] %vm613, %v612
        %v629 = vld [vmem:[#allocation3] sm:$0xff]
        %v630 = vld [vmem:[#allocation3 + $0x8] sm:$0xff]
        %v631 = vld [vmem:[#allocation3 + $0x18] sm:$0xff]
        %v632 = vld [vmem:[#allocation3 + $0x20] sm:$0xff]
        %v633 = vld [vmem:[%s1] ss:$2 sm:$0x3]
        %v635 = vlaneseq
        %v636 = vshrl.u32 %v635, 7
        %v637 = vsub.s32 0, %v636
        %v638 = vrot.slane %v633, %v637
        %v639 = vlaneseq
        %v640 = vshrl.u32 %v639, 7
        %v641 = vsub.s32 1, %v640
        %v642 = vrot.slane %v633, %v641
        %v645 = vmul.f32 %v629, %v638
        %v646 = vmul.f32 %v630, %v642
        %v647 = vmul.f32 %v631, %v638
        %v648 = vmul.f32 %v632, %v642
        %649 = vst [vmem:[#allocation2] sm:$0xff] %v645
        %650 = vst [vmem:[#allocation2 + $0x8] sm:$0xff] %v646
        %651 = vst [vmem:[#allocation2 + $0x10] sm:$0xff] %v647
        %652 = vst [vmem:[#allocation2 + $0x18] sm:$0xff] %v648
        %v653 = vld [vmem:[#allocation3] sm:$0xff]
        %v654 = vld [vmem:[#allocation3 + $0x8] sm:$0xff]
        %v655 = vld [vmem:[#allocation3 + $0x10] sm:$0xff]
        %v656 = vld [vmem:[#allocation3 + $0x18] sm:$0xff]
        %v657 = vld [vmem:[#allocation3 + $0x20] sm:$0xff]
        %v658 = vld [vmem:[#allocation3 + $0x28] sm:$0xff]
        %665 = vrot.lane.b32.xlu0 %v653, 127
        %v666 = vpop.permute.xlu0 %665
        %667 = vrot.lane.b32.xlu0 %v654, 127
        %v668 = vpop.permute.xlu0 %667
        %669 = vrot.lane.b32.xlu0 %v655, 127
        %v670 = vpop.permute.xlu0 %669
        %671 = vrot.lane.b32.xlu0 %v656, 127
        %v672 = vpop.permute.xlu0 %671
        %673 = vrot.lane.b32.xlu0 %v657, 127
        %v674 = vpop.permute.xlu0 %673
        %675 = vrot.lane.b32.xlu0 %v658, 127
        %v676 = vpop.permute.xlu0 %675
        %vm677 = vcmask 1039360
        %v678 = vsel %vm677, %v666, %v668
        %v679 = vsel %vm677, %v668, %v670
        %v680 = vsel %vm677, %v672, %v674
        %v681 = vsel %vm677, %v674, %v676
        %686 = vst [vmem:[#allocation2 + $0x60] sm:$0xff] %v678
        %687 = vst [vmem:[#allocation2 + $0x68] sm:$0xff] %v679
        %688 = vst [vmem:[#allocation2 + $0x70] sm:$0xff] %v680
        %689 = vst [vmem:[#allocation2 + $0x78] sm:$0xff] %v681
        %v690 = vld [vmem:[#allocation3] sm:$0xff]
        %v691 = vld [vmem:[#allocation3 + $0x8] sm:$0xff]
        %v692 = vld [vmem:[#allocation3 + $0x10] sm:$0xff]
        %v693 = vld [vmem:[#allocation3 + $0x18] sm:$0xff]
        %v694 = vld [vmem:[#allocation3 + $0x20] sm:$0xff]
        %v695 = vld [vmem:[#allocation3 + $0x28] sm:$0xff]
        %s696 = scalar_lea.vmem %s1, 1
        %v697 = vld [vmem:[%s696] ss:$2 sm:$0x3]
        %v699 = vlaneseq
        %v700 = vshrl.u32 %v699, 7
        %v701 = vsub.s32 0, %v700
        %v702 = vrot.slane %v697, %v701
        %v703 = vlaneseq
        %v704 = vshrl.u32 %v703, 7
        %v705 = vsub.s32 1, %v704
        %v706 = vrot.slane %v697, %v705
        %707 = vrot.lane.b32.xlu0 %v702, 2
        %v708 = vpop.permute.xlu0 %707
        %709 = vrot.lane.b32.xlu0 %v706, 2
        %v710 = vpop.permute.xlu0 %709
        %vm711 = vcmask 15360
        %v712 = vsel %vm711, %v708, %v710
        %v716 = vmul.f32 %v690, %v708
        %v717 = vmul.f32 %v691, %v712
        %v718 = vmul.f32 %v692, %v710
        %v719 = vmul.f32 %v693, %v708
        %v720 = vmul.f32 %v694, %v712
        %v721 = vmul.f32 %v695, %v710
        %728 = vrot.lane.b32.xlu0 %v716, 126
        %v729 = vpop.permute.xlu0 %728
        %730 = vrot.lane.b32.xlu0 %v717, 126
        %v731 = vpop.permute.xlu0 %730
        %732 = vrot.lane.b32.xlu0 %v718, 126
        %v733 = vpop.permute.xlu0 %732
        %734 = vrot.lane.b32.xlu0 %v719, 126
        %v735 = vpop.permute.xlu0 %734
        %736 = vrot.lane.b32.xlu0 %v720, 126
        %v737 = vpop.permute.xlu0 %736
        %738 = vrot.lane.b32.xlu0 %v721, 126
        %v739 = vpop.permute.xlu0 %738
        %vm740 = vcmask 1031168
        %v741 = vsel %vm740, %v729, %v731
        %v742 = vsel %vm740, %v731, %v733
        %v743 = vsel %vm740, %v735, %v737
        %v744 = vsel %vm740, %v737, %v739
        %749 = vst [vmem:[#allocation2 + $0xc0] sm:$0xff] %v741
        %750 = vst [vmem:[#allocation2 + $0xc8] sm:$0xff] %v742
        %751 = vst [vmem:[#allocation2 + $0xd0] sm:$0xff] %v743
        %752 = vst [vmem:[#allocation2 + $0xd8] sm:$0xff] %v744
        %v753 = vld [vmem:[#allocation3] sm:$0xff]
        %v754 = vld [vmem:[#allocation3 + $0x8] sm:$0xff]
        %v755 = vld [vmem:[#allocation3 + $0x10] sm:$0xff]
        %v756 = vld [vmem:[#allocation3 + $0x18] sm:$0xff]
        %v757 = vld [vmem:[#allocation3 + $0x20] sm:$0xff]
        %v758 = vld [vmem:[#allocation3 + $0x28] sm:$0xff]
        %v759 = vld [vmem:[%s1] ss:$2 sm:$0x3]
        %v761 = vlaneseq
        %v762 = vshrl.u32 %v761, 7
        %v763 = vsub.s32 0, %v762
        %v764 = vrot.slane %v759, %v763
        %v765 = vlaneseq
        %v766 = vshrl.u32 %v765, 7
        %v767 = vsub.s32 1, %v766
        %v768 = vrot.slane %v759, %v767
        %769 = vrot.lane.b32.xlu0 %v764, 16
        %v770 = vpop.permute.xlu0 %769
        %771 = vrot.lane.b32.xlu0 %v768, 16
        %v772 = vpop.permute.xlu0 %771
        %vm773 = vcmask 130048
        %v774 = vsel %vm773, %v770, %v772
        %v778 = vmul.f32 %v753, %v770
        %v779 = vmul.f32 %v754, %v774
        %v780 = vmul.f32 %v755, %v772
        %v781 = vmul.f32 %v756, %v770
        %v782 = vmul.f32 %v757, %v774
        %v783 = vmul.f32 %v758, %v772
        %790 = vrot.lane.b32.xlu0 %v778, 112
        %v791 = vpop.permute.xlu0 %790
        %792 = vrot.lane.b32.xlu0 %v779, 112
        %v793 = vpop.permute.xlu0 %792
        %794 = vrot.lane.b32.xlu0 %v780, 112
        %v795 = vpop.permute.xlu0 %794
        %796 = vrot.lane.b32.xlu0 %v781, 112
        %v797 = vpop.permute.xlu0 %796
        %798 = vrot.lane.b32.xlu0 %v782, 112
        %v799 = vpop.permute.xlu0 %798
        %800 = vrot.lane.b32.xlu0 %v783, 112
        %v801 = vpop.permute.xlu0 %800
        %vm802 = vcmask 916480
        %v803 = vsel %vm802, %v791, %v793
        %v804 = vsel %vm802, %v793, %v795
        %v805 = vsel %vm802, %v797, %v799
        %v806 = vsel %vm802, %v799, %v801
        %811 = vst [vmem:[#allocation2 + $0x120] sm:$0xff] %v803
        %812 = vst [vmem:[#allocation2 + $0x128] sm:$0xff] %v804
        %813 = vst [vmem:[#allocation2 + $0x130] sm:$0xff] %v805
        %814 = vst [vmem:[#allocation2 + $0x138] sm:$0xff] %v806
        %v815 = vld [vmem:[#allocation3] sm:$0xff]
        %v816 = vld [vmem:[#allocation3 + $0x8] sm:$0xff]
        %v817 = vld [vmem:[#allocation3 + $0x10] sm:$0xff]
        %v818 = vld [vmem:[#allocation3 + $0x18] sm:$0xff]
        %v819 = vld [vmem:[#allocation3 + $0x20] sm:$0xff]
        %v820 = vld [vmem:[#allocation3 + $0x28] sm:$0xff]
        %827 = vrot.lane.b32.xlu0 %v815, 111
        %v828 = vpop.permute.xlu0 %827
        %829 = vrot.lane.b32.xlu0 %v816, 111
        %v830 = vpop.permute.xlu0 %829
        %831 = vrot.lane.b32.xlu0 %v817, 111
        %v832 = vpop.permute.xlu0 %831
        %833 = vrot.lane.b32.xlu0 %v818, 111
        %v834 = vpop.permute.xlu0 %833
        %835 = vrot.lane.b32.xlu0 %v819, 111
        %v836 = vpop.permute.xlu0 %835
        %837 = vrot.lane.b32.xlu0 %v820, 111
        %v838 = vpop.permute.xlu0 %837
        %vm839 = vcmask 908288
        %v840 = vsel %vm839, %v828, %v830
        %v841 = vsel %vm839, %v830, %v832
        %v842 = vsel %vm839, %v834, %v836
        %v843 = vsel %vm839, %v836, %v838
        %848 = vst [vmem:[#allocation2 + $0x180] sm:$0xff] %v840
        %849 = vst [vmem:[#allocation2 + $0x188] sm:$0xff] %v841
        %850 = vst [vmem:[#allocation2 + $0x190] sm:$0xff] %v842
        %851 = vst [vmem:[#allocation2 + $0x198] sm:$0xff] %v843
        %v852 = vld [vmem:[#allocation3] sm:$0xff]
        %v853 = vld [vmem:[#allocation3 + $0x8] sm:$0xff]
        %v854 = vld [vmem:[#allocation3 + $0x10] sm:$0xff]
        %v855 = vld [vmem:[#allocation3 + $0x18] sm:$0xff]
        %v856 = vld [vmem:[#allocation3 + $0x20] sm:$0xff]
        %v857 = vld [vmem:[#allocation3 + $0x28] sm:$0xff]
        %v858 = vld [vmem:[%s696] ss:$2 sm:$0x3]
        %v860 = vlaneseq
        %v861 = vshrl.u32 %v860, 7
        %v862 = vsub.s32 0, %v861
        %v863 = vrot.slane %v858, %v862
        %v864 = vlaneseq
        %v865 = vshrl.u32 %v864, 7
        %v866 = vsub.s32 1, %v865
        %v867 = vrot.slane %v858, %v866
        %868 = vrot.lane.b32.xlu0 %v863, 18
        %v869 = vpop.permute.xlu0 %868
        %870 = vrot.lane.b32.xlu0 %v867, 18
        %v871 = vpop.permute.xlu0 %870
        %vm872 = vcmask 146432
        %v873 = vsel %vm872, %v869, %v871
        %v877 = vmul.f32 %v852, %v869
        %v878 = vmul.f32 %v853, %v873
        %v879 = vmul.f32 %v854, %v871
        %v880 = vmul.f32 %v855, %v869
        %v881 = vmul.f32 %v856, %v873
        %v882 = vmul.f32 %v857, %v871
        %889 = vrot.lane.b32.xlu0 %v877, 110
        %v890 = vpop.permute.xlu0 %889
        %891 = vrot.lane.b32.xlu0 %v878, 110
        %v892 = vpop.permute.xlu0 %891
        %893 = vrot.lane.b32.xlu0 %v879, 110
        %v894 = vpop.permute.xlu0 %893
        %895 = vrot.lane.b32.xlu0 %v880, 110
        %v896 = vpop.permute.xlu0 %895
        %897 = vrot.lane.b32.xlu0 %v881, 110
        %v898 = vpop.permute.xlu0 %897
        %899 = vrot.lane.b32.xlu0 %v882, 110
        %v900 = vpop.permute.xlu0 %899
        %vm901 = vcmask 900096
        %v902 = vsel %vm901, %v890, %v892
        %v903 = vsel %vm901, %v892, %v894
        %v904 = vsel %vm901, %v896, %v898
        %v905 = vsel %vm901, %v898, %v900
        %910 = vst [vmem:[#allocation2 + $0x1e0] sm:$0xff] %v902
        %911 = vst [vmem:[#allocation2 + $0x1e8] sm:$0xff] %v903
        %912 = vst [vmem:[#allocation2 + $0x1f0] sm:$0xff] %v904
        %913 = vst [vmem:[#allocation2 + $0x1f8] sm:$0xff] %v905
        %v914 = vld [vmem:[#allocation3] sm:$0xff]
        %v915 = vld [vmem:[#allocation3 + $0x8] sm:$0xff]
        %v916 = vld [vmem:[#allocation3 + $0x10] sm:$0xff]
        %v917 = vld [vmem:[#allocation3 + $0x18] sm:$0xff]
        %v918 = vld [vmem:[#allocation3 + $0x20] sm:$0xff]
        %v919 = vld [vmem:[#allocation3 + $0x28] sm:$0xff]
        %v920 = vld [vmem:[%s1] ss:$2 sm:$0x3]
        %v922 = vlaneseq
        %v923 = vshrl.u32 %v922, 7
        %v924 = vsub.s32 0, %v923
        %v925 = vrot.slane %v920, %v924
        %v926 = vlaneseq
        %v927 = vshrl.u32 %v926, 7
        %v928 = vsub.s32 1, %v927
        %v929 = vrot.slane %v920, %v928
        %930 = vrot.lane.b32.xlu0 %v925, 32
        %v931 = vpop.permute.xlu0 %930
        %932 = vrot.lane.b32.xlu0 %v929, 32
        %v933 = vpop.permute.xlu0 %932
        %vm934 = vcmask 261120
        %v935 = vsel %vm934, %v931, %v933
        %v939 = vmul.f32 %v914, %v931
        %v940 = vmul.f32 %v915, %v935
        %v941 = vmul.f32 %v916, %v933
        %v942 = vmul.f32 %v917, %v931
        %v943 = vmul.f32 %v918, %v935
        %v944 = vmul.f32 %v919, %v933
        %951 = vrot.lane.b32.xlu0 %v939, 96
        %v952 = vpop.permute.xlu0 %951
        %953 = vrot.lane.b32.xlu0 %v940, 96
        %v954 = vpop.permute.xlu0 %953
        %955 = vrot.lane.b32.xlu0 %v941, 96
        %v956 = vpop.permute.xlu0 %955
        %957 = vrot.lane.b32.xlu0 %v942, 96
        %v958 = vpop.permute.xlu0 %957
        %959 = vrot.lane.b32.xlu0 %v943, 96
        %v960 = vpop.permute.xlu0 %959
        %961 = vrot.lane.b32.xlu0 %v944, 96
        %v962 = vpop.permute.xlu0 %961
        %vm963 = vcmask 785408
        %v964 = vsel %vm963, %v952, %v954
        %v965 = vsel %vm963, %v954, %v956
        %v966 = vsel %vm963, %v958, %v960
        %v967 = vsel %vm963, %v960, %v962
        %972 = vst [vmem:[#allocation2 + $0x240] sm:$0xff] %v964
        %973 = vst [vmem:[#allocation2 + $0x248] sm:$0xff] %v965
        %974 = vst [vmem:[#allocation2 + $0x250] sm:$0xff] %v966
        %975 = vst [vmem:[#allocation2 + $0x258] sm:$0xff] %v967
        %v976 = vld [vmem:[#allocation3] sm:$0xff]
        %v977 = vld [vmem:[#allocation3 + $0x8] sm:$0xff]
        %v978 = vld [vmem:[#allocation3 + $0x10] sm:$0xff]
        %v979 = vld [vmem:[#allocation3 + $0x18] sm:$0xff]
        %v980 = vld [vmem:[#allocation3 + $0x20] sm:$0xff]
        %v981 = vld [vmem:[#allocation3 + $0x28] sm:$0xff]
        %988 = vrot.lane.b32.xlu0 %v976, 95
        %v989 = vpop.permute.xlu0 %988
        %990 = vrot.lane.b32.xlu0 %v977, 95
        %v991 = vpop.permute.xlu0 %990
        %992 = vrot.lane.b32.xlu0 %v978, 95
        %v993 = vpop.permute.xlu0 %992
        %994 = vrot.lane.b32.xlu0 %v979, 95
        %v995 = vpop.permute.xlu0 %994
        %996 = vrot.lane.b32.xlu0 %v980, 95
        %v997 = vpop.permute.xlu0 %996
        %998 = vrot.lane.b32.xlu0 %v981, 95
        %v999 = vpop.permute.xlu0 %998
        %vm1000 = vcmask 777216
        %v1001 = vsel %vm1000, %v989, %v991
        %v1002 = vsel %vm1000, %v991, %v993
        %v1003 = vsel %vm1000, %v995, %v997
        %v1004 = vsel %vm1000, %v997, %v999
        %1009 = vst [vmem:[#allocation2 + $0x2a0] sm:$0xff] %v1001
        %1010 = vst [vmem:[#allocation2 + $0x2a8] sm:$0xff] %v1002
        %1011 = vst [vmem:[#allocation2 + $0x2b0] sm:$0xff] %v1003
        %1012 = vst [vmem:[#allocation2 + $0x2b8] sm:$0xff] %v1004
        %v1013 = vld [vmem:[#allocation3] sm:$0xff]
        %v1014 = vld [vmem:[#allocation3 + $0x8] sm:$0xff]
        %v1015 = vld [vmem:[#allocation3 + $0x10] sm:$0xff]
        %v1016 = vld [vmem:[#allocation3 + $0x18] sm:$0xff]
        %v1017 = vld [vmem:[#allocation3 + $0x20] sm:$0xff]
        %v1018 = vld [vmem:[#allocation3 + $0x28] sm:$0xff]
        %v1019 = vld [vmem:[%s696] ss:$2 sm:$0x3]
        %v1021 = vlaneseq
        %v1022 = vshrl.u32 %v1021, 7
        %v1023 = vsub.s32 0, %v1022
        %v1024 = vrot.slane %v1019, %v1023
        %v1025 = vlaneseq
        %v1026 = vshrl.u32 %v1025, 7
        %v1027 = vsub.s32 1, %v1026
        %v1028 = vrot.slane %v1019, %v1027
        %1029 = vrot.lane.b32.xlu0 %v1024, 34
        %v1030 = vpop.permute.xlu0 %1029
        %1031 = vrot.lane.b32.xlu0 %v1028, 34
        %v1032 = vpop.permute.xlu0 %1031
        %v1033 = vsel %vm592, %v1030, %v1032
        %v1037 = vmul.f32 %v1013, %v1030
        %v1038 = vmul.f32 %v1014, %v1033
        %v1039 = vmul.f32 %v1015, %v1032
        %v1040 = vmul.f32 %v1016, %v1030
        %v1041 = vmul.f32 %v1017, %v1033
        %v1042 = vmul.f32 %v1018, %v1032
        %1049 = vrot.lane.b32.xlu0 %v1037, 94
        %v1050 = vpop.permute.xlu0 %1049
        %1051 = vrot.lane.b32.xlu0 %v1038, 94
        %v1052 = vpop.permute.xlu0 %1051
        %1053 = vrot.lane.b32.xlu0 %v1039, 94
        %v1054 = vpop.permute.xlu0 %1053
        %1055 = vrot.lane.b32.xlu0 %v1040, 94
        %v1056 = vpop.permute.xlu0 %1055
        %1057 = vrot.lane.b32.xlu0 %v1041, 94
        %v1058 = vpop.permute.xlu0 %1057
        %1059 = vrot.lane.b32.xlu0 %v1042, 94
        %v1060 = vpop.permute.xlu0 %1059
        %vm1061 = vcmask 769024
        %v1062 = vsel %vm1061, %v1050, %v1052
        %v1063 = vsel %vm1061, %v1052, %v1054
        %v1064 = vsel %vm1061, %v1056, %v1058
        %v1065 = vsel %vm1061, %v1058, %v1060
        %1070 = vst [vmem:[#allocation2 + $0x300] sm:$0xff] %v1062
        %1071 = vst [vmem:[#allocation2 + $0x308] sm:$0xff] %v1063
        %1072 = vst [vmem:[#allocation2 + $0x310] sm:$0xff] %v1064
        %1073 = vst [vmem:[#allocation2 + $0x318] sm:$0xff] %v1065
        %v1074 = vld [vmem:[#allocation7] sm:$0xff]
        %v1075 = vld [vmem:[#allocation7 + $0x8] sm:$0xff]
        %v1076 = vld [vmem:[#allocation7 + $0x10] sm:$0xff]
        %v1077 = vld [vmem:[#allocation7 + $0x18] sm:$0xff]
        %v1078 = vld [vmem:[#allocation2] sm:$0xff]
        %v1079 = vld [vmem:[#allocation2 + $0x8] sm:$0xff]
        %v1080 = vld [vmem:[#allocation2 + $0x10] sm:$0xff]
        %v1081 = vld [vmem:[#allocation2 + $0x18] sm:$0xff]
        %v1082 = vld [vmem:[#allocation2 + $0x20] sm:$0xff]
        %v1083 = vld [vmem:[#allocation2 + $0x28] sm:$0xff]
        %v1084 = vld [vmem:[#allocation2 + $0x30] sm:$0xff]
        %v1085 = vld [vmem:[#allocation2 + $0x38] sm:$0xff]
        %v1086 = vld [vmem:[#allocation2 + $0x40] sm:$0xff]
        %v1087 = vld [vmem:[#allocation2 + $0x48] sm:$0xff]
        %v1088 = vld [vmem:[#allocation2 + $0x50] sm:$0xff]
        %v1089 = vld [vmem:[#allocation2 + $0x58] sm:$0xff]
        %v1090 = vld [vmem:[#allocation2 + $0x60] sm:$0xff]
        %v1091 = vld [vmem:[#allocation2 + $0x68] sm:$0xff]
        %v1092 = vld [vmem:[#allocation2 + $0x70] sm:$0xff]
        %v1093 = vld [vmem:[#allocation2 + $0x78] sm:$0xff]
        %v1094 = vld [vmem:[#allocation2 + $0x80] sm:$0xff]
        %v1095 = vld [vmem:[#allocation2 + $0x88] sm:$0xff]
        %v1096 = vld [vmem:[#allocation2 + $0x90] sm:$0xff]
        %v1097 = vld [vmem:[#allocation2 + $0x98] sm:$0xff]
        %v1098 = vld [vmem:[#allocation2 + $0xa0] sm:$0xff]
        %v1099 = vld [vmem:[#allocation2 + $0xa8] sm:$0xff]
        %v1100 = vld [vmem:[#allocation2 + $0xb0] sm:$0xff]
        %v1101 = vld [vmem:[#allocation2 + $0xb8] sm:$0xff]
        %v1102 = vld [vmem:[#allocation2 + $0xc0] sm:$0xff]
        %v1103 = vld [vmem:[#allocation2 + $0xc8] sm:$0xff]
        %v1104 = vld [vmem:[#allocation2 + $0xd0] sm:$0xff]
        %v1105 = vld [vmem:[#allocation2 + $0xd8] sm:$0xff]
        %v1106 = vld [vmem:[#allocation2 + $0xe0] sm:$0xff]
        %v1107 = vld [vmem:[#allocation2 + $0xe8] sm:$0xff]
        %v1108 = vld [vmem:[#allocation2 + $0xf0] sm:$0xff]
        %v1109 = vld [vmem:[#allocation2 + $0xf8] sm:$0xff]
        %v1110 = vld [vmem:[#allocation2 + $0x100] sm:$0xff]
        %v1111 = vld [vmem:[#allocation2 + $0x108] sm:$0xff]
        %v1112 = vld [vmem:[#allocation2 + $0x110] sm:$0xff]
        %v1113 = vld [vmem:[#allocation2 + $0x118] sm:$0xff]
        %v1114 = vld [vmem:[#allocation2 + $0x120] sm:$0xff]
        %v1115 = vld [vmem:[#allocation2 + $0x128] sm:$0xff]
        %v1116 = vld [vmem:[#allocation2 + $0x130] sm:$0xff]
        %v1117 = vld [vmem:[#allocation2 + $0x138] sm:$0xff]
        %v1118 = vld [vmem:[#allocation2 + $0x140] sm:$0xff]
        %v1119 = vld [vmem:[#allocation2 + $0x148] sm:$0xff]
        %v1120 = vld [vmem:[#allocation2 + $0x150] sm:$0xff]
        %v1121 = vld [vmem:[#allocation2 + $0x158] sm:$0xff]
        %v1122 = vld [vmem:[#allocation2 + $0x160] sm:$0xff]
        %v1123 = vld [vmem:[#allocation2 + $0x168] sm:$0xff]
        %v1124 = vld [vmem:[#allocation2 + $0x170] sm:$0xff]
        %v1125 = vld [vmem:[#allocation2 + $0x178] sm:$0xff]
        %v1126 = vld [vmem:[#allocation2 + $0x180] sm:$0xff]
        %v1127 = vld [vmem:[#allocation2 + $0x188] sm:$0xff]
        %v1128 = vld [vmem:[#allocation2 + $0x190] sm:$0xff]
        %v1129 = vld [vmem:[#allocation2 + $0x198] sm:$0xff]
        %v1130 = vld [vmem:[#allocation2 + $0x1a0] sm:$0xff]
        %v1131 = vld [vmem:[#allocation2 + $0x1a8] sm:$0xff]
        %v1132 = vld [vmem:[#allocation2 + $0x1b0] sm:$0xff]
        %v1133 = vld [vmem:[#allocation2 + $0x1b8] sm:$0xff]
        %v1134 = vld [vmem:[#allocation2 + $0x1c0] sm:$0xff]
        %v1135 = vld [vmem:[#allocation2 + $0x1c8] sm:$0xff]
        %v1136 = vld [vmem:[#allocation2 + $0x1d0] sm:$0xff]
        %v1137 = vld [vmem:[#allocation2 + $0x1d8] sm:$0xff]
        %v1138 = vld [vmem:[#allocation2 + $0x1e0] sm:$0xff]
        %v1139 = vld [vmem:[#allocation2 + $0x1e8] sm:$0xff]
        %v1140 = vld [vmem:[#allocation2 + $0x1f0] sm:$0xff]
        %v1141 = vld [vmem:[#allocation2 + $0x1f8] sm:$0xff]
        %v1142 = vld [vmem:[#allocation2 + $0x200] sm:$0xff]
        %v1143 = vld [vmem:[#allocation2 + $0x208] sm:$0xff]
        %v1144 = vld [vmem:[#allocation2 + $0x210] sm:$0xff]
        %v1145 = vld [vmem:[#allocation2 + $0x218] sm:$0xff]
        %v1146 = vld [vmem:[#allocation2 + $0x220] sm:$0xff]
        %v1147 = vld [vmem:[#allocation2 + $0x228] sm:$0xff]
        %v1148 = vld [vmem:[#allocation2 + $0x230] sm:$0xff]
        %v1149 = vld [vmem:[#allocation2 + $0x238] sm:$0xff]
        %v1150 = vld [vmem:[#allocation2 + $0x240] sm:$0xff]
        %v1151 = vld [vmem:[#allocation2 + $0x248] sm:$0xff]
        %v1152 = vld [vmem:[#allocation2 + $0x250] sm:$0xff]
        %v1153 = vld [vmem:[#allocation2 + $0x258] sm:$0xff]
        %v1154 = vld [vmem:[#allocation2 + $0x260] sm:$0xff]
        %v1155 = vld [vmem:[#allocation2 + $0x268] sm:$0xff]
        %v1156 = vld [vmem:[#allocation2 + $0x270] sm:$0xff]
        %v1157 = vld [vmem:[#allocation2 + $0x278] sm:$0xff]
        %v1158 = vld [vmem:[#allocation2 + $0x280] sm:$0xff]
        %v1159 = vld [vmem:[#allocation2 + $0x288] sm:$0xff]
        %v1160 = vld [vmem:[#allocation2 + $0x290] sm:$0xff]
        %v1161 = vld [vmem:[#allocation2 + $0x298] sm:$0xff]
        %v1162 = vld [vmem:[#allocation2 + $0x2a0] sm:$0xff]
        %v1163 = vld [vmem:[#allocation2 + $0x2a8] sm:$0xff]
        %v1164 = vld [vmem:[#allocation2 + $0x2b0] sm:$0xff]
        %v1165 = vld [vmem:[#allocation2 + $0x2b8] sm:$0xff]
        %v1166 = vld [vmem:[#allocation2 + $0x2c0] sm:$0xff]
        %v1167 = vld [vmem:[#allocation2 + $0x2c8] sm:$0xff]
        %v1168 = vld [vmem:[#allocation2 + $0x2d0] sm:$0xff]
        %v1169 = vld [vmem:[#allocation2 + $0x2d8] sm:$0xff]
        %v1170 = vld [vmem:[#allocation2 + $0x2e0] sm:$0xff]
        %v1171 = vld [vmem:[#allocation2 + $0x2e8] sm:$0xff]
        %v1172 = vld [vmem:[#allocation2 + $0x2f0] sm:$0xff]
        %v1173 = vld [vmem:[#allocation2 + $0x2f8] sm:$0xff]
        %v1174 = vld [vmem:[#allocation2 + $0x300] sm:$0xff]
        %v1175 = vld [vmem:[#allocation2 + $0x308] sm:$0xff]
        %v1176 = vld [vmem:[#allocation2 + $0x310] sm:$0xff]
        %v1177 = vld [vmem:[#allocation2 + $0x318] sm:$0xff]
        %v1178 = vld [vmem:[#allocation2 + $0x320] sm:$0xff]
        %v1179 = vld [vmem:[#allocation2 + $0x328] sm:$0xff]
        %v1180 = vld [vmem:[#allocation2 + $0x330] sm:$0xff]
        %v1181 = vld [vmem:[#allocation2 + $0x338] sm:$0xff]
        %v1182 = vld [vmem:[#allocation2 + $0x340] sm:$0xff]
        %v1183 = vld [vmem:[#allocation2 + $0x348] sm:$0xff]
        %v1184 = vld [vmem:[#allocation2 + $0x350] sm:$0xff]
        %v1185 = vld [vmem:[#allocation2 + $0x358] sm:$0xff]
        %v1186 = vld [vmem:[%s3] sm:$0xff]
        %1188 = vset.pattern.permute.xlu0 0
        %1189 = vperm.xlu0 %1188, %v1186
        %v1190 = vpop.permute.xlu0 %1189
        %vm1192 = vcmask 392192
        %v1194 = vsel %vm1192, %v1077, 0
        %1196 = vmatprep.subr.mxu0 %v1079
        %1197 = vmatpush1.msra.mxu0 %v1078
        %1198 = vmatprep.subr.mxu0 %v1081
        %1199 = vmatpush1.msra.mxu0 %v1080
        %1200 = vmatprep.subr.mxu0 %v1083
        %1201 = vmatpush1.msra.mxu0 %v1082
        %1202 = vmatprep.subr.mxu0 %v1085
        %1203 = vmatpush1.msra.mxu0 %v1084
        %1204 = vmatprep.subr.mxu0 %v1087
        %1205 = vmatpush1.msra.mxu0 %v1086
        %1206 = vmatprep.subr.mxu0 %v1089
        %1207 = vmatpush1.msra.mxu0 %v1088
        %1208 = vmatprep.subr.mxu0 %v1091
        %1209 = vmatpush1.msra.mxu0 %v1090
        %1210 = vmatprep.subr.mxu0 %v1093
        %1211 = vmatpush1.msra.mxu0 %v1092
        %1212 = vmatprep.subr.mxu0 %v1095
        %1213 = vmatpush1.msra.mxu0 %v1094
        %1214 = vmatprep.subr.mxu0 %v1097
        %1215 = vmatpush1.msra.mxu0 %v1096
        %1216 = vmatprep.subr.mxu0 %v1099
        %1217 = vmatpush1.msra.mxu0 %v1098
        %1218 = vmatprep.subr.mxu0 %v1101
        %1219 = vmatpush1.msra.mxu0 %v1100
        %1220 = vmatprep.subr.mxu0 %v1103
        %1221 = vmatpush1.msra.mxu0 %v1102
        %1222 = vmatprep.subr.mxu0 %v1105
        %1223 = vmatpush1.msra.mxu0 %v1104
        %1224 = vmatprep.subr.mxu0 %v1107
        %1225 = vmatpush1.msra.mxu0 %v1106
        %1226 = vmatprep.subr.mxu0 %v1109
        %1227 = vmatpush1.msra.mxu0 %v1108
        %1228 = vmatprep.subr.mxu0 %v1111
        %1229 = vmatpush1.msra.mxu0 %v1110
        %1230 = vmatprep.subr.mxu0 %v1113
        %1231 = vmatpush1.msra.mxu0 %v1112
        %1232 = vmatprep.subr.mxu0 %v1115
        %1233 = vmatpush1.msra.mxu0 %v1114
        %1234 = vmatprep.subr.mxu0 %v1117
        %1235 = vmatpush1.msra.mxu0 %v1116
        %1236 = vmatprep.subr.mxu0 %v1119
        %1237 = vmatpush1.msra.mxu0 %v1118
        %1238 = vmatprep.subr.mxu0 %v1121
        %1239 = vmatpush1.msra.mxu0 %v1120
        %1240 = vmatprep.subr.mxu0 %v1123
        %1241 = vmatpush1.msra.mxu0 %v1122
        %1242 = vmatprep.subr.mxu0 %v1125
        %1243 = vmatpush1.msra.mxu0 %v1124
        %1244 = vmatprep.subr.mxu0 %v1127
        %1245 = vmatpush1.msra.mxu0 %v1126
        %1246 = vmatprep.subr.mxu0 %v1129
        %1247 = vmatpush1.msra.mxu0 %v1128
        %1248 = vmatprep.subr.mxu0 %v1131
        %1249 = vmatpush1.msra.mxu0 %v1130
        %1250 = vmatprep.subr.mxu0 %v1133
        %1251 = vmatpush1.msra.mxu0 %v1132
        %1252 = vmatprep.subr.mxu0 %v1135
        %1253 = vmatpush1.msra.mxu0 %v1134
        %1254 = vmatprep.subr.mxu0 %v1137
        %1255 = vmatpush1.msra.mxu0 %v1136
        %1256 = vmatprep.subr.mxu0 %v1139
        %1257 = vmatpush1.msra.mxu0 %v1138
        %1258 = vmatprep.subr.mxu0 %v1141
        %1259 = vmatpush1.msra.mxu0 %v1140
        %1260 = vmatprep.mubr.f32.mxu0 %v1075
        %1261 = vmatmul.mubr.f32.gmra.mrb[0].mxu0 %v1074
        %v1262 = vpop.f32.mrb[0].mxu0
        %v1263 = vadd.f32 %v1190, %v1262
        %v1264 = vpop.f32.mrb[0].mxu0
        %v1265 = vadd.f32 %v1190, %v1264
        %1266 = vdwg.mxu0
        %1267 = vmatprep.subr.mxu0 %v1143
        %1268 = vmatpush1.msra.mxu0 %v1142
        %1269 = vmatprep.subr.mxu0 %v1145
        %1270 = vmatpush1.msra.mxu0 %v1144
        %1271 = vmatprep.subr.mxu0 %v1147
        %1272 = vmatpush1.msra.mxu0 %v1146
        %1273 = vmatprep.subr.mxu0 %v1149
        %1274 = vmatpush1.msra.mxu0 %v1148
        %1275 = vmatprep.subr.mxu0 %v1151
        %1276 = vmatpush1.msra.mxu0 %v1150
        %1277 = vmatprep.subr.mxu0 %v1153
        %1278 = vmatpush1.msra.mxu0 %v1152
        %1279 = vmatprep.subr.mxu0 %v1155
        %1280 = vmatpush1.msra.mxu0 %v1154
        %1281 = vmatprep.subr.mxu0 %v1157
        %1282 = vmatpush1.msra.mxu0 %v1156
        %1283 = vmatprep.subr.mxu0 %v1159
        %1284 = vmatpush1.msra.mxu0 %v1158
        %1285 = vmatprep.subr.mxu0 %v1161
        %1286 = vmatpush1.msra.mxu0 %v1160
        %1287 = vmatprep.subr.mxu0 %v1163
        %1288 = vmatpush1.msra.mxu0 %v1162
        %1289 = vmatprep.subr.mxu0 %v1165
        %1290 = vmatpush1.msra.mxu0 %v1164
        %1291 = vmatprep.subr.mxu0 %v1167
        %1292 = vmatpush1.msra.mxu0 %v1166
        %1293 = vmatprep.subr.mxu0 %v1169
        %1294 = vmatpush1.msra.mxu0 %v1168
        %1295 = vmatprep.subr.mxu0 %v1171
        %1296 = vmatpush1.msra.mxu0 %v1170
        %1297 = vmatprep.subr.mxu0 %v1173
        %1298 = vmatpush1.msra.mxu0 %v1172
        %1299 = vmatprep.subr.mxu0 %v1175
        %1300 = vmatpush1.msra.mxu0 %v1174
        %1301 = vmatprep.subr.mxu0 %v1177
        %1302 = vmatpush1.msra.mxu0 %v1176
        %1303 = vmatprep.subr.mxu0 %v1179
        %1304 = vmatpush1.msra.mxu0 %v1178
        %1305 = vmatprep.subr.mxu0 %v1181
        %1306 = vmatpush1.msra.mxu0 %v1180
        %1307 = vmatprep.subr.mxu0 %v1183
        %1308 = vmatpush1.msra.mxu0 %v1182
        %1309 = vmatprep.subr.mxu0 %v1185
        %1310 = vmatpush1.msra.mxu0 %v1184
        %1311 = vmatprep.subr.mxu0 0.0
        %1312 = vmatpush1.msra.mxu0 0.0
        %1313 = vmatprep.subr.mxu0 0.0
        %1314 = vmatpush1.msra.mxu0 0.0
        %1315 = vmatprep.subr.mxu0 0.0
        %1316 = vmatpush1.msra.mxu0 0.0
        %1317 = vmatprep.subr.mxu0 0.0
        %1318 = vmatpush1.msra.mxu0 0.0
        %1319 = vmatprep.subr.mxu0 0.0
        %1320 = vmatpush1.msra.mxu0 0.0
        %1321 = vmatprep.subr.mxu0 0.0
        %1322 = vmatpush1.msra.mxu0 0.0
        %1323 = vmatprep.subr.mxu0 0.0
        %1324 = vmatpush1.msra.mxu0 0.0
        %1325 = vmatprep.subr.mxu0 0.0
        %1326 = vmatpush1.msra.mxu0 0.0
        %1327 = vmatprep.subr.mxu0 0.0
        %1328 = vmatpush1.msra.mxu0 0.0
        %1329 = vmatprep.subr.mxu0 0.0
        %1330 = vmatpush1.msra.mxu0 0.0
        %1331 = vmatprep.mubr.f32.mxu0 %v1194
        %1332 = vmatmul.mubr.f32.gmra.mrb[0].mxu0 %v1076
        %v1333 = vpop.f32.mrb[0].mxu0
        %v1334 = vadd.f32 %v1263, %v1333
        %v1335 = vpop.f32.mrb[0].mxu0
        %v1336 = vadd.f32 %v1265, %v1335
        %1337 = vdwg.mxu0
        %vm1338 = vcmp.ge.f32.partialorder %v1334, 0.0
        %vm1339 = vcmp.ge.f32.partialorder %v1336, 0.0
        %v1340 = vmul.f32 %v1334, 0.2
        %v1341 = vmul.f32 %v1336, 0.2
        %v1342 = vsel %vm1338, %v1334, %v1340
        %v1343 = vsel %vm1339, %v1336, %v1341
        %1346 = vrot.lane.b32.xlu0 %v1342, 17
        %v1347 = vpop.permute.xlu0 %1346
        %1348 = vrot.lane.b32.xlu0 %v1343, 17
        %v1349 = vpop.permute.xlu0 %1348
        %v1350 = vsel %vm613, %v1347, %v1349
        %1354 = vst.msk [vmem:[#allocation3] sm:$0xff] %vm622, %v1347
        %1355 = vst [vmem:[#allocation3 + $0x8] sm:$0xff] %v1350
        %1356 = vst.msk [vmem:[#allocation3 + $0x10] sm:$0xff] %vm613, %v1349
        %v1357 = vld [vmem:[#allocation3] sm:$0xff]
        %v1358 = vld [vmem:[#allocation3 + $0x8] sm:$0xff]
        %v1359 = vld [vmem:[%s1] ss:$2 sm:$0x3]
        %v1361 = vlaneseq
        %v1362 = vshrl.u32 %v1361, 7
        %v1363 = vsub.s32 0, %v1362
        %v1364 = vrot.slane %v1359, %v1363
        %v1365 = vlaneseq
        %v1366 = vshrl.u32 %v1365, 7
        %v1367 = vsub.s32 1, %v1366
        %v1368 = vrot.slane %v1359, %v1367
        %v1371 = vmul.f32 %v1357, %v1364
        %v1372 = vmul.f32 %v1358, %v1368
        %1373 = vst [vmem:[#allocation2 + $0x20] sm:$0xff] %v1371
        %1374 = vst [vmem:[#allocation2 + $0x28] sm:$0xff] %v1372
        %v1375 = vld [vmem:[#allocation3] sm:$0xff]
        %v1376 = vld [vmem:[#allocation3 + $0x8] sm:$0xff]
        %v1377 = vld [vmem:[#allocation3 + $0x10] sm:$0xff]
        %1381 = vrot.lane.b32.xlu0 %v1375, 127
        %v1382 = vpop.permute.xlu0 %1381
        %1383 = vrot.lane.b32.xlu0 %v1376, 127
        %v1384 = vpop.permute.xlu0 %1383
        %1385 = vrot.lane.b32.xlu0 %v1377, 127
        %v1386 = vpop.permute.xlu0 %1385
        %v1387 = vsel %vm677, %v1382, %v1384
        %v1388 = vsel %vm677, %v1384, %v1386
        %1391 = vst [vmem:[#allocation2 + $0x80] sm:$0xff] %v1387
        %1392 = vst [vmem:[#allocation2 + $0x88] sm:$0xff] %v1388
        %v1393 = vld [vmem:[#allocation3] sm:$0xff]
        %v1394 = vld [vmem:[#allocation3 + $0x8] sm:$0xff]
        %v1395 = vld [vmem:[#allocation3 + $0x10] sm:$0xff]
        %v1396 = vld [vmem:[%s696] ss:$2 sm:$0x3]
        %v1398 = vlaneseq
        %v1399 = vshrl.u32 %v1398, 7
        %v1400 = vsub.s32 0, %v1399
        %v1401 = vrot.slane %v1396, %v1400
        %v1402 = vlaneseq
        %v1403 = vshrl.u32 %v1402, 7
        %v1404 = vsub.s32 1, %v1403
        %v1405 = vrot.slane %v1396, %v1404
        %1406 = vrot.lane.b32.xlu0 %v1401, 2
        %v1407 = vpop.permute.xlu0 %1406
        %1408 = vrot.lane.b32.xlu0 %v1405, 2
        %v1409 = vpop.permute.xlu0 %1408
        %v1410 = vsel %vm711, %v1407, %v1409
        %v1414 = vmul.f32 %v1393, %v1407
        %v1415 = vmul.f32 %v1394, %v1410
        %v1416 = vmul.f32 %v1395, %v1409
        %1420 = vrot.lane.b32.xlu0 %v1414, 126
        %v1421 = vpop.permute.xlu0 %1420
        %1422 = vrot.lane.b32.xlu0 %v1415, 126
        %v1423 = vpop.permute.xlu0 %1422
        %1424 = vrot.lane.b32.xlu0 %v1416, 126
        %v1425 = vpop.permute.xlu0 %1424
        %v1426 = vsel %vm740, %v1421, %v1423
        %v1427 = vsel %vm740, %v1423, %v1425
        %1430 = vst [vmem:[#allocation2 + $0xe0] sm:$0xff] %v1426
        %1431 = vst [vmem:[#allocation2 + $0xe8] sm:$0xff] %v1427
        %v1432 = vld [vmem:[#allocation3] sm:$0xff]
        %v1433 = vld [vmem:[#allocation3 + $0x8] sm:$0xff]
        %v1434 = vld [vmem:[#allocation3 + $0x10] sm:$0xff]
        %v1435 = vld [vmem:[%s1] ss:$2 sm:$0x3]
        %v1437 = vlaneseq
        %v1438 = vshrl.u32 %v1437, 7
        %v1439 = vsub.s32 0, %v1438
        %v1440 = vrot.slane %v1435, %v1439
        %v1441 = vlaneseq
        %v1442 = vshrl.u32 %v1441, 7
        %v1443 = vsub.s32 1, %v1442
        %v1444 = vrot.slane %v1435, %v1443
        %1445 = vrot.lane.b32.xlu0 %v1440, 16
        %v1446 = vpop.permute.xlu0 %1445
        %1447 = vrot.lane.b32.xlu0 %v1444, 16
        %v1448 = vpop.permute.xlu0 %1447
        %v1449 = vsel %vm773, %v1446, %v1448
        %v1453 = vmul.f32 %v1432, %v1446
        %v1454 = vmul.f32 %v1433, %v1449
        %v1455 = vmul.f32 %v1434, %v1448
        %1459 = vrot.lane.b32.xlu0 %v1453, 112
        %v1460 = vpop.permute.xlu0 %1459
        %1461 = vrot.lane.b32.xlu0 %v1454, 112
        %v1462 = vpop.permute.xlu0 %1461
        %1463 = vrot.lane.b32.xlu0 %v1455, 112
        %v1464 = vpop.permute.xlu0 %1463
        %v1465 = vsel %vm802, %v1460, %v1462
        %v1466 = vsel %vm802, %v1462, %v1464
        %1469 = vst [vmem:[#allocation2 + $0x140] sm:$0xff] %v1465
        %1470 = vst [vmem:[#allocation2 + $0x148] sm:$0xff] %v1466
        %v1471 = vld [vmem:[#allocation3] sm:$0xff]
        %v1472 = vld [vmem:[#allocation3 + $0x8] sm:$0xff]
        %v1473 = vld [vmem:[#allocation3 + $0x10] sm:$0xff]
        %1477 = vrot.lane.b32.xlu0 %v1471, 111
        %v1478 = vpop.permute.xlu0 %1477
        %1479 = vrot.lane.b32.xlu0 %v1472, 111
        %v1480 = vpop.permute.xlu0 %1479
        %1481 = vrot.lane.b32.xlu0 %v1473, 111
        %v1482 = vpop.permute.xlu0 %1481
        %v1483 = vsel %vm839, %v1478, %v1480
        %v1484 = vsel %vm839, %v1480, %v1482
        %1487 = vst [vmem:[#allocation2 + $0x1a0] sm:$0xff] %v1483
        %1488 = vst [vmem:[#allocation2 + $0x1a8] sm:$0xff] %v1484
        %v1489 = vld [vmem:[#allocation3] sm:$0xff]
        %v1490 = vld [vmem:[#allocation3 + $0x8] sm:$0xff]
        %v1491 = vld [vmem:[#allocation3 + $0x10] sm:$0xff]
        %v1492 = vld [vmem:[%s696] ss:$2 sm:$0x3]
        %v1494 = vlaneseq
        %v1495 = vshrl.u32 %v1494, 7
        %v1496 = vsub.s32 0, %v1495
        %v1497 = vrot.slane %v1492, %v1496
        %v1498 = vlaneseq
        %v1499 = vshrl.u32 %v1498, 7
        %v1500 = vsub.s32 1, %v1499
        %v1501 = vrot.slane %v1492, %v1500
        %1502 = vrot.lane.b32.xlu0 %v1497, 18
        %v1503 = vpop.permute.xlu0 %1502
        %1504 = vrot.lane.b32.xlu0 %v1501, 18
        %v1505 = vpop.permute.xlu0 %1504
        %v1506 = vsel %vm872, %v1503, %v1505
        %v1510 = vmul.f32 %v1489, %v1503
        %v1511 = vmul.f32 %v1490, %v1506
        %v1512 = vmul.f32 %v1491, %v1505
        %1516 = vrot.lane.b32.xlu0 %v1510, 110
        %v1517 = vpop.permute.xlu0 %1516
        %1518 = vrot.lane.b32.xlu0 %v1511, 110
        %v1519 = vpop.permute.xlu0 %1518
        %1520 = vrot.lane.b32.xlu0 %v1512, 110
        %v1521 = vpop.permute.xlu0 %1520
        %v1522 = vsel %vm901, %v1517, %v1519
        %v1523 = vsel %vm901, %v1519, %v1521
        %1526 = vst [vmem:[#allocation2 + $0x200] sm:$0xff] %v1522
        %1527 = vst [vmem:[#allocation2 + $0x208] sm:$0xff] %v1523
        %v1528 = vld [vmem:[#allocation3] sm:$0xff]
        %v1529 = vld [vmem:[#allocation3 + $0x8] sm:$0xff]
        %v1530 = vld [vmem:[#allocation3 + $0x10] sm:$0xff]
        %v1531 = vld [vmem:[%s1] ss:$2 sm:$0x3]
        %v1533 = vlaneseq
        %v1534 = vshrl.u32 %v1533, 7
        %v1535 = vsub.s32 0, %v1534
        %v1536 = vrot.slane %v1531, %v1535
        %v1537 = vlaneseq
        %v1538 = vshrl.u32 %v1537, 7
        %v1539 = vsub.s32 1, %v1538
        %v1540 = vrot.slane %v1531, %v1539
        %1541 = vrot.lane.b32.xlu0 %v1536, 32
        %v1542 = vpop.permute.xlu0 %1541
        %1543 = vrot.lane.b32.xlu0 %v1540, 32
        %v1544 = vpop.permute.xlu0 %1543
        %v1545 = vsel %vm934, %v1542, %v1544
        %v1549 = vmul.f32 %v1528, %v1542
        %v1550 = vmul.f32 %v1529, %v1545
        %v1551 = vmul.f32 %v1530, %v1544
        %1555 = vrot.lane.b32.xlu0 %v1549, 96
        %v1556 = vpop.permute.xlu0 %1555
        %1557 = vrot.lane.b32.xlu0 %v1550, 96
        %v1558 = vpop.permute.xlu0 %1557
        %1559 = vrot.lane.b32.xlu0 %v1551, 96
        %v1560 = vpop.permute.xlu0 %1559
        %v1561 = vsel %vm963, %v1556, %v1558
        %v1562 = vsel %vm963, %v1558, %v1560
        %1565 = vst [vmem:[#allocation2 + $0x260] sm:$0xff] %v1561
        %1566 = vst [vmem:[#allocation2 + $0x268] sm:$0xff] %v1562
        %v1567 = vld [vmem:[#allocation3] sm:$0xff]
        %v1568 = vld [vmem:[#allocation3 + $0x8] sm:$0xff]
        %v1569 = vld [vmem:[#allocation3 + $0x10] sm:$0xff]
        %1573 = vrot.lane.b32.xlu0 %v1567, 95
        %v1574 = vpop.permute.xlu0 %1573
        %1575 = vrot.lane.b32.xlu0 %v1568, 95
        %v1576 = vpop.permute.xlu0 %1575
        %1577 = vrot.lane.b32.xlu0 %v1569, 95
        %v1578 = vpop.permute.xlu0 %1577
        %v1579 = vsel %vm1000, %v1574, %v1576
        %v1580 = vsel %vm1000, %v1576, %v1578
        %1583 = vst [vmem:[#allocation2 + $0x2c0] sm:$0xff] %v1579
        %1584 = vst [vmem:[#allocation2 + $0x2c8] sm:$0xff] %v1580
        %v1585 = vld [vmem:[#allocation3] sm:$0xff]
        %v1586 = vld [vmem:[#allocation3 + $0x8] sm:$0xff]
        %v1587 = vld [vmem:[#allocation3 + $0x10] sm:$0xff]
        %v1588 = vld [vmem:[%s696] ss:$2 sm:$0x3]
        %v1590 = vlaneseq
        %v1591 = vshrl.u32 %v1590, 7
        %v1592 = vsub.s32 0, %v1591
        %v1593 = vrot.slane %v1588, %v1592
        %v1594 = vlaneseq
        %v1595 = vshrl.u32 %v1594, 7
        %v1596 = vsub.s32 1, %v1595
        %v1597 = vrot.slane %v1588, %v1596
        %1598 = vrot.lane.b32.xlu0 %v1593, 34
        %v1599 = vpop.permute.xlu0 %1598
        %1600 = vrot.lane.b32.xlu0 %v1597, 34
        %v1601 = vpop.permute.xlu0 %1600
        %v1602 = vsel %vm592, %v1599, %v1601
        %v1606 = vmul.f32 %v1585, %v1599
        %v1607 = vmul.f32 %v1586, %v1602
        %v1608 = vmul.f32 %v1587, %v1601
        %1612 = vrot.lane.b32.xlu0 %v1606, 94
        %v1613 = vpop.permute.xlu0 %1612
        %1614 = vrot.lane.b32.xlu0 %v1607, 94
        %v1615 = vpop.permute.xlu0 %1614
        %1616 = vrot.lane.b32.xlu0 %v1608, 94
        %v1617 = vpop.permute.xlu0 %1616
        %v1618 = vsel %vm1061, %v1613, %v1615
        %v1619 = vsel %vm1061, %v1615, %v1617
        %1622 = vst [vmem:[#allocation2 + $0x320] sm:$0xff] %v1618
        %1623 = vst [vmem:[#allocation2 + $0x328] sm:$0xff] %v1619
        %v1624 = vld [vmem:[#allocation9] sm:$0xff]
        %v1625 = vld [vmem:[#allocation9 + $0x8] sm:$0xff]
        %v1626 = vld [vmem:[#allocation9 + $0x10] sm:$0xff]
        %v1627 = vld [vmem:[#allocation9 + $0x18] sm:$0xff]
        %v1628 = vld [vmem:[#allocation2] sm:$0xff]
        %v1629 = vld [vmem:[#allocation2 + $0x8] sm:$0xff]
        %v1630 = vld [vmem:[#allocation2 + $0x10] sm:$0xff]
        %v1631 = vld [vmem:[#allocation2 + $0x18] sm:$0xff]
        %v1632 = vld [vmem:[#allocation2 + $0x20] sm:$0xff]
        %v1633 = vld [vmem:[#allocation2 + $0x28] sm:$0xff]
        %v1634 = vld [vmem:[#allocation2 + $0x30] sm:$0xff]
        %v1635 = vld [vmem:[#allocation2 + $0x38] sm:$0xff]
        %v1636 = vld [vmem:[#allocation2 + $0x40] sm:$0xff]
        %v1637 = vld [vmem:[#allocation2 + $0x48] sm:$0xff]
        %v1638 = vld [vmem:[#allocation2 + $0x50] sm:$0xff]
        %v1639 = vld [vmem:[#allocation2 + $0x58] sm:$0xff]
        %v1640 = vld [vmem:[#allocation2 + $0x60] sm:$0xff]
        %v1641 = vld [vmem:[#allocation2 + $0x68] sm:$0xff]
        %v1642 = vld [vmem:[#allocation2 + $0x70] sm:$0xff]
        %v1643 = vld [vmem:[#allocation2 + $0x78] sm:$0xff]
        %v1644 = vld [vmem:[#allocation2 + $0x80] sm:$0xff]
        %v1645 = vld [vmem:[#allocation2 + $0x88] sm:$0xff]
        %v1646 = vld [vmem:[#allocation2 + $0x90] sm:$0xff]
        %v1647 = vld [vmem:[#allocation2 + $0x98] sm:$0xff]
        %v1648 = vld [vmem:[#allocation2 + $0xa0] sm:$0xff]
        %v1649 = vld [vmem:[#allocation2 + $0xa8] sm:$0xff]
        %v1650 = vld [vmem:[#allocation2 + $0xb0] sm:$0xff]
        %v1651 = vld [vmem:[#allocation2 + $0xb8] sm:$0xff]
        %v1652 = vld [vmem:[#allocation2 + $0xc0] sm:$0xff]
        %v1653 = vld [vmem:[#allocation2 + $0xc8] sm:$0xff]
        %v1654 = vld [vmem:[#allocation2 + $0xd0] sm:$0xff]
        %v1655 = vld [vmem:[#allocation2 + $0xd8] sm:$0xff]
        %v1656 = vld [vmem:[#allocation2 + $0xe0] sm:$0xff]
        %v1657 = vld [vmem:[#allocation2 + $0xe8] sm:$0xff]
        %v1658 = vld [vmem:[#allocation2 + $0xf0] sm:$0xff]
        %v1659 = vld [vmem:[#allocation2 + $0xf8] sm:$0xff]
        %v1660 = vld [vmem:[#allocation2 + $0x100] sm:$0xff]
        %v1661 = vld [vmem:[#allocation2 + $0x108] sm:$0xff]
        %v1662 = vld [vmem:[#allocation2 + $0x110] sm:$0xff]
        %v1663 = vld [vmem:[#allocation2 + $0x118] sm:$0xff]
        %v1664 = vld [vmem:[#allocation2 + $0x120] sm:$0xff]
        %v1665 = vld [vmem:[#allocation2 + $0x128] sm:$0xff]
        %v1666 = vld [vmem:[#allocation2 + $0x130] sm:$0xff]
        %v1667 = vld [vmem:[#allocation2 + $0x138] sm:$0xff]
        %v1668 = vld [vmem:[#allocation2 + $0x140] sm:$0xff]
        %v1669 = vld [vmem:[#allocation2 + $0x148] sm:$0xff]
        %v1670 = vld [vmem:[#allocation2 + $0x150] sm:$0xff]
        %v1671 = vld [vmem:[#allocation2 + $0x158] sm:$0xff]
        %v1672 = vld [vmem:[#allocation2 + $0x160] sm:$0xff]
        %v1673 = vld [vmem:[#allocation2 + $0x168] sm:$0xff]
        %v1674 = vld [vmem:[#allocation2 + $0x170] sm:$0xff]
        %v1675 = vld [vmem:[#allocation2 + $0x178] sm:$0xff]
        %v1676 = vld [vmem:[#allocation2 + $0x180] sm:$0xff]
        %v1677 = vld [vmem:[#allocation2 + $0x188] sm:$0xff]
        %v1678 = vld [vmem:[#allocation2 + $0x190] sm:$0xff]
        %v1679 = vld [vmem:[#allocation2 + $0x198] sm:$0xff]
        %v1680 = vld [vmem:[#allocation2 + $0x1a0] sm:$0xff]
        %v1681 = vld [vmem:[#allocation2 + $0x1a8] sm:$0xff]
        %v1682 = vld [vmem:[#allocation2 + $0x1b0] sm:$0xff]
        %v1683 = vld [vmem:[#allocation2 + $0x1b8] sm:$0xff]
        %v1684 = vld [vmem:[#allocation2 + $0x1c0] sm:$0xff]
        %v1685 = vld [vmem:[#allocation2 + $0x1c8] sm:$0xff]
        %v1686 = vld [vmem:[#allocation2 + $0x1d0] sm:$0xff]
        %v1687 = vld [vmem:[#allocation2 + $0x1d8] sm:$0xff]
        %v1688 = vld [vmem:[#allocation2 + $0x1e0] sm:$0xff]
        %v1689 = vld [vmem:[#allocation2 + $0x1e8] sm:$0xff]
        %v1690 = vld [vmem:[#allocation2 + $0x1f0] sm:$0xff]
        %v1691 = vld [vmem:[#allocation2 + $0x1f8] sm:$0xff]
        %v1692 = vld [vmem:[#allocation2 + $0x200] sm:$0xff]
        %v1693 = vld [vmem:[#allocation2 + $0x208] sm:$0xff]
        %v1694 = vld [vmem:[#allocation2 + $0x210] sm:$0xff]
        %v1695 = vld [vmem:[#allocation2 + $0x218] sm:$0xff]
        %v1696 = vld [vmem:[#allocation2 + $0x220] sm:$0xff]
        %v1697 = vld [vmem:[#allocation2 + $0x228] sm:$0xff]
        %v1698 = vld [vmem:[#allocation2 + $0x230] sm:$0xff]
        %v1699 = vld [vmem:[#allocation2 + $0x238] sm:$0xff]
        %v1700 = vld [vmem:[#allocation2 + $0x240] sm:$0xff]
        %v1701 = vld [vmem:[#allocation2 + $0x248] sm:$0xff]
        %v1702 = vld [vmem:[#allocation2 + $0x250] sm:$0xff]
        %v1703 = vld [vmem:[#allocation2 + $0x258] sm:$0xff]
        %v1704 = vld [vmem:[#allocation2 + $0x260] sm:$0xff]
        %v1705 = vld [vmem:[#allocation2 + $0x268] sm:$0xff]
        %v1706 = vld [vmem:[#allocation2 + $0x270] sm:$0xff]
        %v1707 = vld [vmem:[#allocation2 + $0x278] sm:$0xff]
        %v1708 = vld [vmem:[#allocation2 + $0x280] sm:$0xff]
        %v1709 = vld [vmem:[#allocation2 + $0x288] sm:$0xff]
        %v1710 = vld [vmem:[#allocation2 + $0x290] sm:$0xff]
        %v1711 = vld [vmem:[#allocation2 + $0x298] sm:$0xff]
        %v1712 = vld [vmem:[#allocation2 + $0x2a0] sm:$0xff]
        %v1713 = vld [vmem:[#allocation2 + $0x2a8] sm:$0xff]
        %v1714 = vld [vmem:[#allocation2 + $0x2b0] sm:$0xff]
        %v1715 = vld [vmem:[#allocation2 + $0x2b8] sm:$0xff]
        %v1716 = vld [vmem:[#allocation2 + $0x2c0] sm:$0xff]
        %v1717 = vld [vmem:[#allocation2 + $0x2c8] sm:$0xff]
        %v1718 = vld [vmem:[#allocation2 + $0x2d0] sm:$0xff]
        %v1719 = vld [vmem:[#allocation2 + $0x2d8] sm:$0xff]
        %v1720 = vld [vmem:[#allocation2 + $0x2e0] sm:$0xff]
        %v1721 = vld [vmem:[#allocation2 + $0x2e8] sm:$0xff]
        %v1722 = vld [vmem:[#allocation2 + $0x2f0] sm:$0xff]
        %v1723 = vld [vmem:[#allocation2 + $0x2f8] sm:$0xff]
        %v1724 = vld [vmem:[#allocation2 + $0x300] sm:$0xff]
        %v1725 = vld [vmem:[#allocation2 + $0x308] sm:$0xff]
        %v1726 = vld [vmem:[#allocation2 + $0x310] sm:$0xff]
        %v1727 = vld [vmem:[#allocation2 + $0x318] sm:$0xff]
        %v1728 = vld [vmem:[#allocation2 + $0x320] sm:$0xff]
        %v1729 = vld [vmem:[#allocation2 + $0x328] sm:$0xff]
        %v1730 = vld [vmem:[#allocation2 + $0x330] sm:$0xff]
        %v1731 = vld [vmem:[#allocation2 + $0x338] sm:$0xff]
        %v1732 = vld [vmem:[#allocation2 + $0x340] sm:$0xff]
        %v1733 = vld [vmem:[#allocation2 + $0x348] sm:$0xff]
        %v1734 = vld [vmem:[#allocation2 + $0x350] sm:$0xff]
        %v1735 = vld [vmem:[#allocation2 + $0x358] sm:$0xff]
        %v1736 = vld [vmem:[%s5] sm:$0xff]
        %1738 = vset.pattern.permute.xlu0 0
        %1739 = vperm.xlu0 %1738, %v1736
        %v1740 = vpop.permute.xlu0 %1739
        %v1743 = vsel %vm1192, %v1627, 0
        %1745 = vmatprep.subr.mxu0 %v1629
        %1746 = vmatpush1.msra.mxu0 %v1628
        %1747 = vmatprep.subr.mxu0 %v1631
        %1748 = vmatpush1.msra.mxu0 %v1630
        %1749 = vmatprep.subr.mxu0 %v1633
        %1750 = vmatpush1.msra.mxu0 %v1632
        %1751 = vmatprep.subr.mxu0 %v1635
        %1752 = vmatpush1.msra.mxu0 %v1634
        %1753 = vmatprep.subr.mxu0 %v1637
        %1754 = vmatpush1.msra.mxu0 %v1636
        %1755 = vmatprep.subr.mxu0 %v1639
        %1756 = vmatpush1.msra.mxu0 %v1638
        %1757 = vmatprep.subr.mxu0 %v1641
        %1758 = vmatpush1.msra.mxu0 %v1640
        %1759 = vmatprep.subr.mxu0 %v1643
        %1760 = vmatpush1.msra.mxu0 %v1642
        %1761 = vmatprep.subr.mxu0 %v1645
        %1762 = vmatpush1.msra.mxu0 %v1644
        %1763 = vmatprep.subr.mxu0 %v1647
        %1764 = vmatpush1.msra.mxu0 %v1646
        %1765 = vmatprep.subr.mxu0 %v1649
        %1766 = vmatpush1.msra.mxu0 %v1648
        %1767 = vmatprep.subr.mxu0 %v1651
        %1768 = vmatpush1.msra.mxu0 %v1650
        %1769 = vmatprep.subr.mxu0 %v1653
        %1770 = vmatpush1.msra.mxu0 %v1652
        %1771 = vmatprep.subr.mxu0 %v1655
        %1772 = vmatpush1.msra.mxu0 %v1654
        %1773 = vmatprep.subr.mxu0 %v1657
        %1774 = vmatpush1.msra.mxu0 %v1656
        %1775 = vmatprep.subr.mxu0 %v1659
        %1776 = vmatpush1.msra.mxu0 %v1658
        %1777 = vmatprep.subr.mxu0 %v1661
        %1778 = vmatpush1.msra.mxu0 %v1660
        %1779 = vmatprep.subr.mxu0 %v1663
        %1780 = vmatpush1.msra.mxu0 %v1662
        %1781 = vmatprep.subr.mxu0 %v1665
        %1782 = vmatpush1.msra.mxu0 %v1664
        %1783 = vmatprep.subr.mxu0 %v1667
        %1784 = vmatpush1.msra.mxu0 %v1666
        %1785 = vmatprep.subr.mxu0 %v1669
        %1786 = vmatpush1.msra.mxu0 %v1668
        %1787 = vmatprep.subr.mxu0 %v1671
        %1788 = vmatpush1.msra.mxu0 %v1670
        %1789 = vmatprep.subr.mxu0 %v1673
        %1790 = vmatpush1.msra.mxu0 %v1672
        %1791 = vmatprep.subr.mxu0 %v1675
        %1792 = vmatpush1.msra.mxu0 %v1674
        %1793 = vmatprep.subr.mxu0 %v1677
        %1794 = vmatpush1.msra.mxu0 %v1676
        %1795 = vmatprep.subr.mxu0 %v1679
        %1796 = vmatpush1.msra.mxu0 %v1678
        %1797 = vmatprep.subr.mxu0 %v1681
        %1798 = vmatpush1.msra.mxu0 %v1680
        %1799 = vmatprep.subr.mxu0 %v1683
        %1800 = vmatpush1.msra.mxu0 %v1682
        %1801 = vmatprep.subr.mxu0 %v1685
        %1802 = vmatpush1.msra.mxu0 %v1684
        %1803 = vmatprep.subr.mxu0 %v1687
        %1804 = vmatpush1.msra.mxu0 %v1686
        %1805 = vmatprep.subr.mxu0 %v1689
        %1806 = vmatpush1.msra.mxu0 %v1688
        %1807 = vmatprep.subr.mxu0 %v1691
        %1808 = vmatpush1.msra.mxu0 %v1690
        %1809 = vmatprep.mubr.f32.mxu0 %v1625
        %1810 = vmatmul.mubr.f32.gmra.mrb[0].mxu0 %v1624
        %v1811 = vpop.f32.mrb[0].mxu0
        %v1812 = vadd.f32 %v1740, %v1811
        %v1813 = vpop.f32.mrb[0].mxu0
        %v1814 = vadd.f32 %v1740, %v1813
        %1815 = vdwg.mxu0
        %1816 = vmatprep.subr.mxu0 %v1693
        %1817 = vmatpush1.msra.mxu0 %v1692
        %1818 = vmatprep.subr.mxu0 %v1695
        %1819 = vmatpush1.msra.mxu0 %v1694
        %1820 = vmatprep.subr.mxu0 %v1697
        %1821 = vmatpush1.msra.mxu0 %v1696
        %1822 = vmatprep.subr.mxu0 %v1699
        %1823 = vmatpush1.msra.mxu0 %v1698
        %1824 = vmatprep.subr.mxu0 %v1701
        %1825 = vmatpush1.msra.mxu0 %v1700
        %1826 = vmatprep.subr.mxu0 %v1703
        %1827 = vmatpush1.msra.mxu0 %v1702
        %1828 = vmatprep.subr.mxu0 %v1705
        %1829 = vmatpush1.msra.mxu0 %v1704
        %1830 = vmatprep.subr.mxu0 %v1707
        %1831 = vmatpush1.msra.mxu0 %v1706
        %1832 = vmatprep.subr.mxu0 %v1709
        %1833 = vmatpush1.msra.mxu0 %v1708
        %1834 = vmatprep.subr.mxu0 %v1711
        %1835 = vmatpush1.msra.mxu0 %v1710
        %1836 = vmatprep.subr.mxu0 %v1713
        %1837 = vmatpush1.msra.mxu0 %v1712
        %1838 = vmatprep.subr.mxu0 %v1715
        %1839 = vmatpush1.msra.mxu0 %v1714
        %1840 = vmatprep.subr.mxu0 %v1717
        %1841 = vmatpush1.msra.mxu0 %v1716
        %1842 = vmatprep.subr.mxu0 %v1719
        %1843 = vmatpush1.msra.mxu0 %v1718
        %1844 = vmatprep.subr.mxu0 %v1721
        %1845 = vmatpush1.msra.mxu0 %v1720
        %1846 = vmatprep.subr.mxu0 %v1723
        %1847 = vmatpush1.msra.mxu0 %v1722
        %1848 = vmatprep.subr.mxu0 %v1725
        %1849 = vmatpush1.msra.mxu0 %v1724
        %1850 = vmatprep.subr.mxu0 %v1727
        %1851 = vmatpush1.msra.mxu0 %v1726
        %1852 = vmatprep.subr.mxu0 %v1729
        %1853 = vmatpush1.msra.mxu0 %v1728
        %1854 = vmatprep.subr.mxu0 %v1731
        %1855 = vmatpush1.msra.mxu0 %v1730
        %1856 = vmatprep.subr.mxu0 %v1733
        %1857 = vmatpush1.msra.mxu0 %v1732
        %1858 = vmatprep.subr.mxu0 %v1735
        %1859 = vmatpush1.msra.mxu0 %v1734
        %1860 = vmatprep.subr.mxu0 0.0
        %1861 = vmatpush1.msra.mxu0 0.0
        %1862 = vmatprep.subr.mxu0 0.0
        %1863 = vmatpush1.msra.mxu0 0.0
        %1864 = vmatprep.subr.mxu0 0.0
        %1865 = vmatpush1.msra.mxu0 0.0
        %1866 = vmatprep.subr.mxu0 0.0
        %1867 = vmatpush1.msra.mxu0 0.0
        %1868 = vmatprep.subr.mxu0 0.0
        %1869 = vmatpush1.msra.mxu0 0.0
        %1870 = vmatprep.subr.mxu0 0.0
        %1871 = vmatpush1.msra.mxu0 0.0
        %1872 = vmatprep.subr.mxu0 0.0
        %1873 = vmatpush1.msra.mxu0 0.0
        %1874 = vmatprep.subr.mxu0 0.0
        %1875 = vmatpush1.msra.mxu0 0.0
        %1876 = vmatprep.subr.mxu0 0.0
        %1877 = vmatpush1.msra.mxu0 0.0
        %1878 = vmatprep.subr.mxu0 0.0
        %1879 = vmatpush1.msra.mxu0 0.0
        %1880 = vmatprep.mubr.f32.mxu0 %v1743
        %1881 = vmatmul.mubr.f32.gmra.mrb[0].mxu0 %v1626
        %v1882 = vpop.f32.mrb[0].mxu0
        %v1883 = vadd.f32 %v1812, %v1882
        %v1884 = vpop.f32.mrb[0].mxu0
        %v1885 = vadd.f32 %v1814, %v1884
        %1886 = vdwg.mxu0
        %vm1887 = vcmp.ge.f32.partialorder %v1883, 0.0
        %vm1888 = vcmp.ge.f32.partialorder %v1885, 0.0
        %v1889 = vmul.f32 %v1883, 0.2
        %v1890 = vmul.f32 %v1885, 0.2
        %v1891 = vsel %vm1887, %v1883, %v1889
        %v1892 = vsel %vm1888, %v1885, %v1890
        %1895 = vrot.lane.b32.xlu0 %v1891, 17
        %v1896 = vpop.permute.xlu0 %1895
        %1897 = vrot.lane.b32.xlu0 %v1892, 17
        %v1898 = vpop.permute.xlu0 %1897
        %v1899 = vsel %vm613, %v1896, %v1898
        %1903 = vst.msk [vmem:[#allocation3] sm:$0xff] %vm622, %v1896
        %1904 = vst [vmem:[#allocation3 + $0x8] sm:$0xff] %v1899
        %1905 = vst.msk [vmem:[#allocation3 + $0x10] sm:$0xff] %vm613, %v1898
        %v1906 = vld [vmem:[#allocation3] sm:$0xff]
        %v1907 = vld [vmem:[#allocation3 + $0x8] sm:$0xff]
        %v1908 = vld [vmem:[%s1] ss:$2 sm:$0x3]
        %v1910 = vlaneseq
        %v1911 = vshrl.u32 %v1910, 7
        %v1912 = vsub.s32 0, %v1911
        %v1913 = vrot.slane %v1908, %v1912
        %v1914 = vlaneseq
        %v1915 = vshrl.u32 %v1914, 7
        %v1916 = vsub.s32 1, %v1915
        %v1917 = vrot.slane %v1908, %v1916
        %v1920 = vmul.f32 %v1906, %v1913
        %v1921 = vmul.f32 %v1907, %v1917
        %1922 = vst [vmem:[#allocation2 + $0x30] sm:$0xff] %v1920
        %1923 = vst [vmem:[#allocation2 + $0x38] sm:$0xff] %v1921
        %v1924 = vld [vmem:[#allocation3] sm:$0xff]
        %v1925 = vld [vmem:[#allocation3 + $0x8] sm:$0xff]
        %v1926 = vld [vmem:[#allocation3 + $0x10] sm:$0xff]
        %1930 = vrot.lane.b32.xlu0 %v1924, 127
        %v1931 = vpop.permute.xlu0 %1930
        %1932 = vrot.lane.b32.xlu0 %v1925, 127
        %v1933 = vpop.permute.xlu0 %1932
        %1934 = vrot.lane.b32.xlu0 %v1926, 127
        %v1935 = vpop.permute.xlu0 %1934
        %v1936 = vsel %vm677, %v1931, %v1933
        %v1937 = vsel %vm677, %v1933, %v1935
        %1940 = vst [vmem:[#allocation2 + $0x90] sm:$0xff] %v1936
        %1941 = vst [vmem:[#allocation2 + $0x98] sm:$0xff] %v1937
        %v1942 = vld [vmem:[#allocation3] sm:$0xff]
        %v1943 = vld [vmem:[#allocation3 + $0x8] sm:$0xff]
        %v1944 = vld [vmem:[#allocation3 + $0x10] sm:$0xff]
        %v1945 = vld [vmem:[%s696] ss:$2 sm:$0x3]
        %v1947 = vlaneseq
        %v1948 = vshrl.u32 %v1947, 7
        %v1949 = vsub.s32 0, %v1948
        %v1950 = vrot.slane %v1945, %v1949
        %v1951 = vlaneseq
        %v1952 = vshrl.u32 %v1951, 7
        %v1953 = vsub.s32 1, %v1952
        %v1954 = vrot.slane %v1945, %v1953
        %1955 = vrot.lane.b32.xlu0 %v1950, 2
        %v1956 = vpop.permute.xlu0 %1955
        %1957 = vrot.lane.b32.xlu0 %v1954, 2
        %v1958 = vpop.permute.xlu0 %1957
        %v1959 = vsel %vm711, %v1956, %v1958
        %v1963 = vmul.f32 %v1942, %v1956
        %v1964 = vmul.f32 %v1943, %v1959
        %v1965 = vmul.f32 %v1944, %v1958
        %1969 = vrot.lane.b32.xlu0 %v1963, 126
        %v1970 = vpop.permute.xlu0 %1969
        %1971 = vrot.lane.b32.xlu0 %v1964, 126
        %v1972 = vpop.permute.xlu0 %1971
        %1973 = vrot.lane.b32.xlu0 %v1965, 126
        %v1974 = vpop.permute.xlu0 %1973
        %v1975 = vsel %vm740, %v1970, %v1972
        %v1976 = vsel %vm740, %v1972, %v1974
        %1979 = vst [vmem:[#allocation2 + $0xf0] sm:$0xff] %v1975
        %1980 = vst [vmem:[#allocation2 + $0xf8] sm:$0xff] %v1976
        %v1981 = vld [vmem:[#allocation3] sm:$0xff]
        %v1982 = vld [vmem:[#allocation3 + $0x8] sm:$0xff]
        %v1983 = vld [vmem:[#allocation3 + $0x10] sm:$0xff]
        %v1984 = vld [vmem:[%s1] ss:$2 sm:$0x3]
        %v1986 = vlaneseq
        %v1987 = vshrl.u32 %v1986, 7
        %v1988 = vsub.s32 0, %v1987
        %v1989 = vrot.slane %v1984, %v1988
        %v1990 = vlaneseq
        %v1991 = vshrl.u32 %v1990, 7
        %v1992 = vsub.s32 1, %v1991
        %v1993 = vrot.slane %v1984, %v1992
        %1994 = vrot.lane.b32.xlu0 %v1989, 16
        %v1995 = vpop.permute.xlu0 %1994
        %1996 = vrot.lane.b32.xlu0 %v1993, 16
        %v1997 = vpop.permute.xlu0 %1996
        %v1998 = vsel %vm773, %v1995, %v1997
        %v2002 = vmul.f32 %v1981, %v1995
        %v2003 = vmul.f32 %v1982, %v1998
        %v2004 = vmul.f32 %v1983, %v1997
        %2008 = vrot.lane.b32.xlu0 %v2002, 112
        %v2009 = vpop.permute.xlu0 %2008
        %2010 = vrot.lane.b32.xlu0 %v2003, 112
        %v2011 = vpop.permute.xlu0 %2010
        %2012 = vrot.lane.b32.xlu0 %v2004, 112
        %v2013 = vpop.permute.xlu0 %2012
        %v2014 = vsel %vm802, %v2009, %v2011
        %v2015 = vsel %vm802, %v2011, %v2013
        %2018 = vst [vmem:[#allocation2 + $0x150] sm:$0xff] %v2014
        %2019 = vst [vmem:[#allocation2 + $0x158] sm:$0xff] %v2015
        %v2020 = vld [vmem:[#allocation3] sm:$0xff]
        %v2021 = vld [vmem:[#allocation3 + $0x8] sm:$0xff]
        %v2022 = vld [vmem:[#allocation3 + $0x10] sm:$0xff]
        %2026 = vrot.lane.b32.xlu0 %v2020, 111
        %v2027 = vpop.permute.xlu0 %2026
        %2028 = vrot.lane.b32.xlu0 %v2021, 111
        %v2029 = vpop.permute.xlu0 %2028
        %2030 = vrot.lane.b32.xlu0 %v2022, 111
        %v2031 = vpop.permute.xlu0 %2030
        %v2032 = vsel %vm839, %v2027, %v2029
        %v2033 = vsel %vm839, %v2029, %v2031
        %2036 = vst [vmem:[#allocation2 + $0x1b0] sm:$0xff] %v2032
        %2037 = vst [vmem:[#allocation2 + $0x1b8] sm:$0xff] %v2033
        %v2038 = vld [vmem:[#allocation3] sm:$0xff]
        %v2039 = vld [vmem:[#allocation3 + $0x8] sm:$0xff]
        %v2040 = vld [vmem:[#allocation3 + $0x10] sm:$0xff]
        %v2041 = vld [vmem:[%s696] ss:$2 sm:$0x3]
        %v2043 = vlaneseq
        %v2044 = vshrl.u32 %v2043, 7
        %v2045 = vsub.s32 0, %v2044
        %v2046 = vrot.slane %v2041, %v2045
        %v2047 = vlaneseq
        %v2048 = vshrl.u32 %v2047, 7
        %v2049 = vsub.s32 1, %v2048
        %v2050 = vrot.slane %v2041, %v2049
        %2051 = vrot.lane.b32.xlu0 %v2046, 18
        %v2052 = vpop.permute.xlu0 %2051
        %2053 = vrot.lane.b32.xlu0 %v2050, 18
        %v2054 = vpop.permute.xlu0 %2053
        %v2055 = vsel %vm872, %v2052, %v2054
        %v2059 = vmul.f32 %v2038, %v2052
        %v2060 = vmul.f32 %v2039, %v2055
        %v2061 = vmul.f32 %v2040, %v2054
        %2065 = vrot.lane.b32.xlu0 %v2059, 110
        %v2066 = vpop.permute.xlu0 %2065
        %2067 = vrot.lane.b32.xlu0 %v2060, 110
        %v2068 = vpop.permute.xlu0 %2067
        %2069 = vrot.lane.b32.xlu0 %v2061, 110
        %v2070 = vpop.permute.xlu0 %2069
        %v2071 = vsel %vm901, %v2066, %v2068
        %v2072 = vsel %vm901, %v2068, %v2070
        %2075 = vst [vmem:[#allocation2 + $0x210] sm:$0xff] %v2071
        %2076 = vst [vmem:[#allocation2 + $0x218] sm:$0xff] %v2072
        %v2077 = vld [vmem:[#allocation3] sm:$0xff]
        %v2078 = vld [vmem:[#allocation3 + $0x8] sm:$0xff]
        %v2079 = vld [vmem:[#allocation3 + $0x10] sm:$0xff]
        %v2080 = vld [vmem:[%s1] ss:$2 sm:$0x3]
        %v2082 = vlaneseq
        %v2083 = vshrl.u32 %v2082, 7
        %v2084 = vsub.s32 0, %v2083
        %v2085 = vrot.slane %v2080, %v2084
        %v2086 = vlaneseq
        %v2087 = vshrl.u32 %v2086, 7
        %v2088 = vsub.s32 1, %v2087
        %v2089 = vrot.slane %v2080, %v2088
        %2090 = vrot.lane.b32.xlu0 %v2085, 32
        %v2091 = vpop.permute.xlu0 %2090
        %2092 = vrot.lane.b32.xlu0 %v2089, 32
        %v2093 = vpop.permute.xlu0 %2092
        %v2094 = vsel %vm934, %v2091, %v2093
        %v2098 = vmul.f32 %v2077, %v2091
        %v2099 = vmul.f32 %v2078, %v2094
        %v2100 = vmul.f32 %v2079, %v2093
        %2104 = vrot.lane.b32.xlu0 %v2098, 96
        %v2105 = vpop.permute.xlu0 %2104
        %2106 = vrot.lane.b32.xlu0 %v2099, 96
        %v2107 = vpop.permute.xlu0 %2106
        %2108 = vrot.lane.b32.xlu0 %v2100, 96
        %v2109 = vpop.permute.xlu0 %2108
        %v2110 = vsel %vm963, %v2105, %v2107
        %v2111 = vsel %vm963, %v2107, %v2109
        %2114 = vst [vmem:[#allocation2 + $0x270] sm:$0xff] %v2110
        %2115 = vst [vmem:[#allocation2 + $0x278] sm:$0xff] %v2111
        %v2116 = vld [vmem:[#allocation3] sm:$0xff]
        %v2117 = vld [vmem:[#allocation3 + $0x8] sm:$0xff]
        %v2118 = vld [vmem:[#allocation3 + $0x10] sm:$0xff]
        %2122 = vrot.lane.b32.xlu0 %v2116, 95
        %v2123 = vpop.permute.xlu0 %2122
        %2124 = vrot.lane.b32.xlu0 %v2117, 95
        %v2125 = vpop.permute.xlu0 %2124
        %2126 = vrot.lane.b32.xlu0 %v2118, 95
        %v2127 = vpop.permute.xlu0 %2126
        %v2128 = vsel %vm1000, %v2123, %v2125
        %v2129 = vsel %vm1000, %v2125, %v2127
        %2132 = vst [vmem:[#allocation2 + $0x2d0] sm:$0xff] %v2128
        %2133 = vst [vmem:[#allocation2 + $0x2d8] sm:$0xff] %v2129
        %v2134 = vld [vmem:[#allocation3] sm:$0xff]
        %v2135 = vld [vmem:[#allocation3 + $0x8] sm:$0xff]
        %v2136 = vld [vmem:[#allocation3 + $0x10] sm:$0xff]
        %v2137 = vld [vmem:[%s696] ss:$2 sm:$0x3]
        %v2139 = vlaneseq
        %v2140 = vshrl.u32 %v2139, 7
        %v2141 = vsub.s32 0, %v2140
        %v2142 = vrot.slane %v2137, %v2141
        %v2143 = vlaneseq
        %v2144 = vshrl.u32 %v2143, 7
        %v2145 = vsub.s32 1, %v2144
        %v2146 = vrot.slane %v2137, %v2145
        %2147 = vrot.lane.b32.xlu0 %v2142, 34
        %v2148 = vpop.permute.xlu0 %2147
        %2149 = vrot.lane.b32.xlu0 %v2146, 34
        %v2150 = vpop.permute.xlu0 %2149
        %v2151 = vsel %vm592, %v2148, %v2150
        %v2155 = vmul.f32 %v2134, %v2148
        %v2156 = vmul.f32 %v2135, %v2151
        %v2157 = vmul.f32 %v2136, %v2150
        %2161 = vrot.lane.b32.xlu0 %v2155, 94
        %v2162 = vpop.permute.xlu0 %2161
        %2163 = vrot.lane.b32.xlu0 %v2156, 94
        %v2164 = vpop.permute.xlu0 %2163
        %2165 = vrot.lane.b32.xlu0 %v2157, 94
        %v2166 = vpop.permute.xlu0 %2165
        %v2167 = vsel %vm1061, %v2162, %v2164
        %v2168 = vsel %vm1061, %v2164, %v2166
        %2171 = vst [vmem:[#allocation2 + $0x330] sm:$0xff] %v2167
        %2172 = vst [vmem:[#allocation2 + $0x338] sm:$0xff] %v2168
        %v2173 = vld [vmem:[#allocation10] sm:$0xff]
        %v2174 = vld [vmem:[#allocation10 + $0x8] sm:$0xff]
        %v2175 = vld [vmem:[#allocation10 + $0x10] sm:$0xff]
        %v2176 = vld [vmem:[#allocation10 + $0x18] sm:$0xff]
        %v2177 = vld [vmem:[#allocation2] sm:$0xff]
        %v2178 = vld [vmem:[#allocation2 + $0x8] sm:$0xff]
        %v2179 = vld [vmem:[#allocation2 + $0x10] sm:$0xff]
        %v2180 = vld [vmem:[#allocation2 + $0x18] sm:$0xff]
        %v2181 = vld [vmem:[#allocation2 + $0x20] sm:$0xff]
        %v2182 = vld [vmem:[#allocation2 + $0x28] sm:$0xff]
        %v2183 = vld [vmem:[#allocation2 + $0x30] sm:$0xff]
        %v2184 = vld [vmem:[#allocation2 + $0x38] sm:$0xff]
        %v2185 = vld [vmem:[#allocation2 + $0x40] sm:$0xff]
        %v2186 = vld [vmem:[#allocation2 + $0x48] sm:$0xff]
        %v2187 = vld [vmem:[#allocation2 + $0x50] sm:$0xff]
        %v2188 = vld [vmem:[#allocation2 + $0x58] sm:$0xff]
        %v2189 = vld [vmem:[#allocation2 + $0x60] sm:$0xff]
        %v2190 = vld [vmem:[#allocation2 + $0x68] sm:$0xff]
        %v2191 = vld [vmem:[#allocation2 + $0x70] sm:$0xff]
        %v2192 = vld [vmem:[#allocation2 + $0x78] sm:$0xff]
        %v2193 = vld [vmem:[#allocation2 + $0x80] sm:$0xff]
        %v2194 = vld [vmem:[#allocation2 + $0x88] sm:$0xff]
        %v2195 = vld [vmem:[#allocation2 + $0x90] sm:$0xff]
        %v2196 = vld [vmem:[#allocation2 + $0x98] sm:$0xff]
        %v2197 = vld [vmem:[#allocation2 + $0xa0] sm:$0xff]
        %v2198 = vld [vmem:[#allocation2 + $0xa8] sm:$0xff]
        %v2199 = vld [vmem:[#allocation2 + $0xb0] sm:$0xff]
        %v2200 = vld [vmem:[#allocation2 + $0xb8] sm:$0xff]
        %v2201 = vld [vmem:[#allocation2 + $0xc0] sm:$0xff]
        %v2202 = vld [vmem:[#allocation2 + $0xc8] sm:$0xff]
        %v2203 = vld [vmem:[#allocation2 + $0xd0] sm:$0xff]
        %v2204 = vld [vmem:[#allocation2 + $0xd8] sm:$0xff]
        %v2205 = vld [vmem:[#allocation2 + $0xe0] sm:$0xff]
        %v2206 = vld [vmem:[#allocation2 + $0xe8] sm:$0xff]
        %v2207 = vld [vmem:[#allocation2 + $0xf0] sm:$0xff]
        %v2208 = vld [vmem:[#allocation2 + $0xf8] sm:$0xff]
        %v2209 = vld [vmem:[#allocation2 + $0x100] sm:$0xff]
        %v2210 = vld [vmem:[#allocation2 + $0x108] sm:$0xff]
        %v2211 = vld [vmem:[#allocation2 + $0x110] sm:$0xff]
        %v2212 = vld [vmem:[#allocation2 + $0x118] sm:$0xff]
        %v2213 = vld [vmem:[#allocation2 + $0x120] sm:$0xff]
        %v2214 = vld [vmem:[#allocation2 + $0x128] sm:$0xff]
        %v2215 = vld [vmem:[#allocation2 + $0x130] sm:$0xff]
        %v2216 = vld [vmem:[#allocation2 + $0x138] sm:$0xff]
        %v2217 = vld [vmem:[#allocation2 + $0x140] sm:$0xff]
        %v2218 = vld [vmem:[#allocation2 + $0x148] sm:$0xff]
        %v2219 = vld [vmem:[#allocation2 + $0x150] sm:$0xff]
        %v2220 = vld [vmem:[#allocation2 + $0x158] sm:$0xff]
        %v2221 = vld [vmem:[#allocation2 + $0x160] sm:$0xff]
        %v2222 = vld [vmem:[#allocation2 + $0x168] sm:$0xff]
        %v2223 = vld [vmem:[#allocation2 + $0x170] sm:$0xff]
        %v2224 = vld [vmem:[#allocation2 + $0x178] sm:$0xff]
        %v2225 = vld [vmem:[#allocation2 + $0x180] sm:$0xff]
        %v2226 = vld [vmem:[#allocation2 + $0x188] sm:$0xff]
        %v2227 = vld [vmem:[#allocation2 + $0x190] sm:$0xff]
        %v2228 = vld [vmem:[#allocation2 + $0x198] sm:$0xff]
        %v2229 = vld [vmem:[#allocation2 + $0x1a0] sm:$0xff]
        %v2230 = vld [vmem:[#allocation2 + $0x1a8] sm:$0xff]
        %v2231 = vld [vmem:[#allocation2 + $0x1b0] sm:$0xff]
        %v2232 = vld [vmem:[#allocation2 + $0x1b8] sm:$0xff]
        %v2233 = vld [vmem:[#allocation2 + $0x1c0] sm:$0xff]
        %v2234 = vld [vmem:[#allocation2 + $0x1c8] sm:$0xff]
        %v2235 = vld [vmem:[#allocation2 + $0x1d0] sm:$0xff]
        %v2236 = vld [vmem:[#allocation2 + $0x1d8] sm:$0xff]
        %v2237 = vld [vmem:[#allocation2 + $0x1e0] sm:$0xff]
        %v2238 = vld [vmem:[#allocation2 + $0x1e8] sm:$0xff]
        %v2239 = vld [vmem:[#allocation2 + $0x1f0] sm:$0xff]
        %v2240 = vld [vmem:[#allocation2 + $0x1f8] sm:$0xff]
        %v2241 = vld [vmem:[#allocation2 + $0x200] sm:$0xff]
        %v2242 = vld [vmem:[#allocation2 + $0x208] sm:$0xff]
        %v2243 = vld [vmem:[#allocation2 + $0x210] sm:$0xff]
        %v2244 = vld [vmem:[#allocation2 + $0x218] sm:$0xff]
        %v2245 = vld [vmem:[#allocation2 + $0x220] sm:$0xff]
        %v2246 = vld [vmem:[#allocation2 + $0x228] sm:$0xff]
        %v2247 = vld [vmem:[#allocation2 + $0x230] sm:$0xff]
        %v2248 = vld [vmem:[#allocation2 + $0x238] sm:$0xff]
        %v2249 = vld [vmem:[#allocation2 + $0x240] sm:$0xff]
        %v2250 = vld [vmem:[#allocation2 + $0x248] sm:$0xff]
        %v2251 = vld [vmem:[#allocation2 + $0x250] sm:$0xff]
        %v2252 = vld [vmem:[#allocation2 + $0x258] sm:$0xff]
        %v2253 = vld [vmem:[#allocation2 + $0x260] sm:$0xff]
        %v2254 = vld [vmem:[#allocation2 + $0x268] sm:$0xff]
        %v2255 = vld [vmem:[#allocation2 + $0x270] sm:$0xff]
        %v2256 = vld [vmem:[#allocation2 + $0x278] sm:$0xff]
        %v2257 = vld [vmem:[#allocation2 + $0x280] sm:$0xff]
        %v2258 = vld [vmem:[#allocation2 + $0x288] sm:$0xff]
        %v2259 = vld [vmem:[#allocation2 + $0x290] sm:$0xff]
        %v2260 = vld [vmem:[#allocation2 + $0x298] sm:$0xff]
        %v2261 = vld [vmem:[#allocation2 + $0x2a0] sm:$0xff]
        %v2262 = vld [vmem:[#allocation2 + $0x2a8] sm:$0xff]
        %v2263 = vld [vmem:[#allocation2 + $0x2b0] sm:$0xff]
        %v2264 = vld [vmem:[#allocation2 + $0x2b8] sm:$0xff]
        %v2265 = vld [vmem:[#allocation2 + $0x2c0] sm:$0xff]
        %v2266 = vld [vmem:[#allocation2 + $0x2c8] sm:$0xff]
        %v2267 = vld [vmem:[#allocation2 + $0x2d0] sm:$0xff]
        %v2268 = vld [vmem:[#allocation2 + $0x2d8] sm:$0xff]
        %v2269 = vld [vmem:[#allocation2 + $0x2e0] sm:$0xff]
        %v2270 = vld [vmem:[#allocation2 + $0x2e8] sm:$0xff]
        %v2271 = vld [vmem:[#allocation2 + $0x2f0] sm:$0xff]
        %v2272 = vld [vmem:[#allocation2 + $0x2f8] sm:$0xff]
        %v2273 = vld [vmem:[#allocation2 + $0x300] sm:$0xff]
        %v2274 = vld [vmem:[#allocation2 + $0x308] sm:$0xff]
        %v2275 = vld [vmem:[#allocation2 + $0x310] sm:$0xff]
        %v2276 = vld [vmem:[#allocation2 + $0x318] sm:$0xff]
        %v2277 = vld [vmem:[#allocation2 + $0x320] sm:$0xff]
        %v2278 = vld [vmem:[#allocation2 + $0x328] sm:$0xff]
        %v2279 = vld [vmem:[#allocation2 + $0x330] sm:$0xff]
        %v2280 = vld [vmem:[#allocation2 + $0x338] sm:$0xff]
        %v2281 = vld [vmem:[#allocation2 + $0x340] sm:$0xff]
        %v2282 = vld [vmem:[#allocation2 + $0x348] sm:$0xff]
        %v2283 = vld [vmem:[#allocation2 + $0x350] sm:$0xff]
        %v2284 = vld [vmem:[#allocation2 + $0x358] sm:$0xff]
        %v2285 = vld [vmem:[%s7] sm:$0xff]
        %2287 = vset.pattern.permute.xlu0 0
        %2288 = vperm.xlu0 %2287, %v2285
        %v2289 = vpop.permute.xlu0 %2288
        %v2292 = vsel %vm1192, %v2176, 0
        %2294 = vmatprep.subr.mxu0 %v2178
        %2295 = vmatpush1.msra.mxu0 %v2177
        %2296 = vmatprep.subr.mxu0 %v2180
        %2297 = vmatpush1.msra.mxu0 %v2179
        %2298 = vmatprep.subr.mxu0 %v2182
        %2299 = vmatpush1.msra.mxu0 %v2181
        %2300 = vmatprep.subr.mxu0 %v2184
        %2301 = vmatpush1.msra.mxu0 %v2183
        %2302 = vmatprep.subr.mxu0 %v2186
        %2303 = vmatpush1.msra.mxu0 %v2185
        %2304 = vmatprep.subr.mxu0 %v2188
        %2305 = vmatpush1.msra.mxu0 %v2187
        %2306 = vmatprep.subr.mxu0 %v2190
        %2307 = vmatpush1.msra.mxu0 %v2189
        %2308 = vmatprep.subr.mxu0 %v2192
        %2309 = vmatpush1.msra.mxu0 %v2191
        %2310 = vmatprep.subr.mxu0 %v2194
        %2311 = vmatpush1.msra.mxu0 %v2193
        %2312 = vmatprep.subr.mxu0 %v2196
        %2313 = vmatpush1.msra.mxu0 %v2195
        %2314 = vmatprep.subr.mxu0 %v2198
        %2315 = vmatpush1.msra.mxu0 %v2197
        %2316 = vmatprep.subr.mxu0 %v2200
        %2317 = vmatpush1.msra.mxu0 %v2199
        %2318 = vmatprep.subr.mxu0 %v2202
        %2319 = vmatpush1.msra.mxu0 %v2201
        %2320 = vmatprep.subr.mxu0 %v2204
        %2321 = vmatpush1.msra.mxu0 %v2203
        %2322 = vmatprep.subr.mxu0 %v2206
        %2323 = vmatpush1.msra.mxu0 %v2205
        %2324 = vmatprep.subr.mxu0 %v2208
        %2325 = vmatpush1.msra.mxu0 %v2207
        %2326 = vmatprep.subr.mxu0 %v2210
        %2327 = vmatpush1.msra.mxu0 %v2209
        %2328 = vmatprep.subr.mxu0 %v2212
        %2329 = vmatpush1.msra.mxu0 %v2211
        %2330 = vmatprep.subr.mxu0 %v2214
        %2331 = vmatpush1.msra.mxu0 %v2213
        %2332 = vmatprep.subr.mxu0 %v2216
        %2333 = vmatpush1.msra.mxu0 %v2215
        %2334 = vmatprep.subr.mxu0 %v2218
        %2335 = vmatpush1.msra.mxu0 %v2217
        %2336 = vmatprep.subr.mxu0 %v2220
        %2337 = vmatpush1.msra.mxu0 %v2219
        %2338 = vmatprep.subr.mxu0 %v2222
        %2339 = vmatpush1.msra.mxu0 %v2221
        %2340 = vmatprep.subr.mxu0 %v2224
        %2341 = vmatpush1.msra.mxu0 %v2223
        %2342 = vmatprep.subr.mxu0 %v2226
        %2343 = vmatpush1.msra.mxu0 %v2225
        %2344 = vmatprep.subr.mxu0 %v2228
        %2345 = vmatpush1.msra.mxu0 %v2227
        %2346 = vmatprep.subr.mxu0 %v2230
        %2347 = vmatpush1.msra.mxu0 %v2229
        %2348 = vmatprep.subr.mxu0 %v2232
        %2349 = vmatpush1.msra.mxu0 %v2231
        %2350 = vmatprep.subr.mxu0 %v2234
        %2351 = vmatpush1.msra.mxu0 %v2233
        %2352 = vmatprep.subr.mxu0 %v2236
        %2353 = vmatpush1.msra.mxu0 %v2235
        %2354 = vmatprep.subr.mxu0 %v2238
        %2355 = vmatpush1.msra.mxu0 %v2237
        %2356 = vmatprep.subr.mxu0 %v2240
        %2357 = vmatpush1.msra.mxu0 %v2239
        %2358 = vmatprep.mubr.f32.mxu0 %v2174
        %2359 = vmatmul.mubr.f32.gmra.mrb[0].mxu0 %v2173
        %v2360 = vpop.f32.mrb[0].mxu0
        %v2361 = vadd.f32 %v2289, %v2360
        %v2362 = vpop.f32.mrb[0].mxu0
        %v2363 = vadd.f32 %v2289, %v2362
        %2364 = vdwg.mxu0
        %2365 = vmatprep.subr.mxu0 %v2242
        %2366 = vmatpush1.msra.mxu0 %v2241
        %2367 = vmatprep.subr.mxu0 %v2244
        %2368 = vmatpush1.msra.mxu0 %v2243
        %2369 = vmatprep.subr.mxu0 %v2246
        %2370 = vmatpush1.msra.mxu0 %v2245
        %2371 = vmatprep.subr.mxu0 %v2248
        %2372 = vmatpush1.msra.mxu0 %v2247
        %2373 = vmatprep.subr.mxu0 %v2250
        %2374 = vmatpush1.msra.mxu0 %v2249
        %2375 = vmatprep.subr.mxu0 %v2252
        %2376 = vmatpush1.msra.mxu0 %v2251
        %2377 = vmatprep.subr.mxu0 %v2254
        %2378 = vmatpush1.msra.mxu0 %v2253
        %2379 = vmatprep.subr.mxu0 %v2256
        %2380 = vmatpush1.msra.mxu0 %v2255
        %2381 = vmatprep.subr.mxu0 %v2258
        %2382 = vmatpush1.msra.mxu0 %v2257
        %2383 = vmatprep.subr.mxu0 %v2260
        %2384 = vmatpush1.msra.mxu0 %v2259
        %2385 = vmatprep.subr.mxu0 %v2262
        %2386 = vmatpush1.msra.mxu0 %v2261
        %2387 = vmatprep.subr.mxu0 %v2264
        %2388 = vmatpush1.msra.mxu0 %v2263
        %2389 = vmatprep.subr.mxu0 %v2266
        %2390 = vmatpush1.msra.mxu0 %v2265
        %2391 = vmatprep.subr.mxu0 %v2268
        %2392 = vmatpush1.msra.mxu0 %v2267
        %2393 = vmatprep.subr.mxu0 %v2270
        %2394 = vmatpush1.msra.mxu0 %v2269
        %2395 = vmatprep.subr.mxu0 %v2272
        %2396 = vmatpush1.msra.mxu0 %v2271
        %2397 = vmatprep.subr.mxu0 %v2274
        %2398 = vmatpush1.msra.mxu0 %v2273
        %2399 = vmatprep.subr.mxu0 %v2276
        %2400 = vmatpush1.msra.mxu0 %v2275
        %2401 = vmatprep.subr.mxu0 %v2278
        %2402 = vmatpush1.msra.mxu0 %v2277
        %2403 = vmatprep.subr.mxu0 %v2280
        %2404 = vmatpush1.msra.mxu0 %v2279
        %2405 = vmatprep.subr.mxu0 %v2282
        %2406 = vmatpush1.msra.mxu0 %v2281
        %2407 = vmatprep.subr.mxu0 %v2284
        %2408 = vmatpush1.msra.mxu0 %v2283
        %2409 = vmatprep.subr.mxu0 0.0
        %2410 = vmatpush1.msra.mxu0 0.0
        %2411 = vmatprep.subr.mxu0 0.0
        %2412 = vmatpush1.msra.mxu0 0.0
        %2413 = vmatprep.subr.mxu0 0.0
        %2414 = vmatpush1.msra.mxu0 0.0
        %2415 = vmatprep.subr.mxu0 0.0
        %2416 = vmatpush1.msra.mxu0 0.0
        %2417 = vmatprep.subr.mxu0 0.0
        %2418 = vmatpush1.msra.mxu0 0.0
        %2419 = vmatprep.subr.mxu0 0.0
        %2420 = vmatpush1.msra.mxu0 0.0
        %2421 = vmatprep.subr.mxu0 0.0
        %2422 = vmatpush1.msra.mxu0 0.0
        %2423 = vmatprep.subr.mxu0 0.0
        %2424 = vmatpush1.msra.mxu0 0.0
        %2425 = vmatprep.subr.mxu0 0.0
        %2426 = vmatpush1.msra.mxu0 0.0
        %2427 = vmatprep.subr.mxu0 0.0
        %2428 = vmatpush1.msra.mxu0 0.0
        %2429 = vmatprep.mubr.f32.mxu0 %v2292
        %2430 = vmatmul.mubr.f32.gmra.mrb[0].mxu0 %v2175
        %v2431 = vpop.f32.mrb[0].mxu0
        %v2432 = vadd.f32 %v2361, %v2431
        %v2433 = vpop.f32.mrb[0].mxu0
        %v2434 = vadd.f32 %v2363, %v2433
        %2435 = vdwg.mxu0
        %vm2436 = vcmp.ge.f32.partialorder %v2432, 0.0
        %vm2437 = vcmp.ge.f32.partialorder %v2434, 0.0
        %v2438 = vmul.f32 %v2432, 0.2
        %v2439 = vmul.f32 %v2434, 0.2
        %v2440 = vsel %vm2436, %v2432, %v2438
        %v2441 = vsel %vm2437, %v2434, %v2439
        %2444 = vrot.lane.b32.xlu0 %v2440, 17
        %v2445 = vpop.permute.xlu0 %2444
        %2446 = vrot.lane.b32.xlu0 %v2441, 17
        %v2447 = vpop.permute.xlu0 %2446
        %v2448 = vsel %vm613, %v2445, %v2447
        %2452 = vst.msk [vmem:[#allocation3] sm:$0xff] %vm622, %v2445
        %2453 = vst [vmem:[#allocation3 + $0x8] sm:$0xff] %v2448
        %2454 = vst.msk [vmem:[#allocation3 + $0x10] sm:$0xff] %vm613, %v2447
        %v2455 = vld [vmem:[#allocation3] sm:$0xff]
        %v2456 = vld [vmem:[#allocation3 + $0x8] sm:$0xff]
        %v2457 = vld [vmem:[%s1] ss:$2 sm:$0x3]
        %v2459 = vlaneseq
        %v2460 = vshrl.u32 %v2459, 7
        %v2461 = vsub.s32 0, %v2460
        %v2462 = vrot.slane %v2457, %v2461
        %v2463 = vlaneseq
        %v2464 = vshrl.u32 %v2463, 7
        %v2465 = vsub.s32 1, %v2464
        %v2466 = vrot.slane %v2457, %v2465
        %v2469 = vmul.f32 %v2455, %v2462
        %v2470 = vmul.f32 %v2456, %v2466
        %2471 = vst [vmem:[#allocation2 + $0x40] sm:$0xff] %v2469
        %2472 = vst [vmem:[#allocation2 + $0x48] sm:$0xff] %v2470
        %v2473 = vld [vmem:[#allocation3] sm:$0xff]
        %v2474 = vld [vmem:[#allocation3 + $0x8] sm:$0xff]
        %v2475 = vld [vmem:[#allocation3 + $0x10] sm:$0xff]
        %2479 = vrot.lane.b32.xlu0 %v2473, 127
        %v2480 = vpop.permute.xlu0 %2479
        %2481 = vrot.lane.b32.xlu0 %v2474, 127
        %v2482 = vpop.permute.xlu0 %2481
        %2483 = vrot.lane.b32.xlu0 %v2475, 127
        %v2484 = vpop.permute.xlu0 %2483
        %v2485 = vsel %vm677, %v2480, %v2482
        %v2486 = vsel %vm677, %v2482, %v2484
        %2489 = vst [vmem:[#allocation2 + $0xa0] sm:$0xff] %v2485
        %2490 = vst [vmem:[#allocation2 + $0xa8] sm:$0xff] %v2486
        %v2491 = vld [vmem:[#allocation3] sm:$0xff]
        %v2492 = vld [vmem:[#allocation3 + $0x8] sm:$0xff]
        %v2493 = vld [vmem:[#allocation3 + $0x10] sm:$0xff]
        %v2494 = vld [vmem:[%s696] ss:$2 sm:$0x3]
        %v2496 = vlaneseq
        %v2497 = vshrl.u32 %v2496, 7
        %v2498 = vsub.s32 0, %v2497
        %v2499 = vrot.slane %v2494, %v2498
        %v2500 = vlaneseq
        %v2501 = vshrl.u32 %v2500, 7
        %v2502 = vsub.s32 1, %v2501
        %v2503 = vrot.slane %v2494, %v2502
        %2504 = vrot.lane.b32.xlu0 %v2499, 2
        %v2505 = vpop.permute.xlu0 %2504
        %2506 = vrot.lane.b32.xlu0 %v2503, 2
        %v2507 = vpop.permute.xlu0 %2506
        %v2508 = vsel %vm711, %v2505, %v2507
        %v2512 = vmul.f32 %v2491, %v2505
        %v2513 = vmul.f32 %v2492, %v2508
        %v2514 = vmul.f32 %v2493, %v2507
        %2518 = vrot.lane.b32.xlu0 %v2512, 126
        %v2519 = vpop.permute.xlu0 %2518
        %2520 = vrot.lane.b32.xlu0 %v2513, 126
        %v2521 = vpop.permute.xlu0 %2520
        %2522 = vrot.lane.b32.xlu0 %v2514, 126
        %v2523 = vpop.permute.xlu0 %2522
        %v2524 = vsel %vm740, %v2519, %v2521
        %v2525 = vsel %vm740, %v2521, %v2523
        %2528 = vst [vmem:[#allocation2 + $0x100] sm:$0xff] %v2524
        %2529 = vst [vmem:[#allocation2 + $0x108] sm:$0xff] %v2525
        %v2530 = vld [vmem:[#allocation3] sm:$0xff]
        %v2531 = vld [vmem:[#allocation3 + $0x8] sm:$0xff]
        %v2532 = vld [vmem:[#allocation3 + $0x10] sm:$0xff]
        %v2533 = vld [vmem:[%s1] ss:$2 sm:$0x3]
        %v2535 = vlaneseq
        %v2536 = vshrl.u32 %v2535, 7
        %v2537 = vsub.s32 0, %v2536
        %v2538 = vrot.slane %v2533, %v2537
        %v2539 = vlaneseq
        %v2540 = vshrl.u32 %v2539, 7
        %v2541 = vsub.s32 1, %v2540
        %v2542 = vrot.slane %v2533, %v2541
        %2543 = vrot.lane.b32.xlu0 %v2538, 16
        %v2544 = vpop.permute.xlu0 %2543
        %2545 = vrot.lane.b32.xlu0 %v2542, 16
        %v2546 = vpop.permute.xlu0 %2545
        %v2547 = vsel %vm773, %v2544, %v2546
        %v2551 = vmul.f32 %v2530, %v2544
        %v2552 = vmul.f32 %v2531, %v2547
        %v2553 = vmul.f32 %v2532, %v2546
        %2557 = vrot.lane.b32.xlu0 %v2551, 112
        %v2558 = vpop.permute.xlu0 %2557
        %2559 = vrot.lane.b32.xlu0 %v2552, 112
        %v2560 = vpop.permute.xlu0 %2559
        %2561 = vrot.lane.b32.xlu0 %v2553, 112
        %v2562 = vpop.permute.xlu0 %2561
        %v2563 = vsel %vm802, %v2558, %v2560
        %v2564 = vsel %vm802, %v2560, %v2562
        %2567 = vst [vmem:[#allocation2 + $0x160] sm:$0xff] %v2563
        %2568 = vst [vmem:[#allocation2 + $0x168] sm:$0xff] %v2564
        %v2569 = vld [vmem:[#allocation3] sm:$0xff]
        %v2570 = vld [vmem:[#allocation3 + $0x8] sm:$0xff]
        %v2571 = vld [vmem:[#allocation3 + $0x10] sm:$0xff]
        %2575 = vrot.lane.b32.xlu0 %v2569, 111
        %v2576 = vpop.permute.xlu0 %2575
        %2577 = vrot.lane.b32.xlu0 %v2570, 111
        %v2578 = vpop.permute.xlu0 %2577
        %2579 = vrot.lane.b32.xlu0 %v2571, 111
        %v2580 = vpop.permute.xlu0 %2579
        %v2581 = vsel %vm839, %v2576, %v2578
        %v2582 = vsel %vm839, %v2578, %v2580
        %2585 = vst [vmem:[#allocation2 + $0x1c0] sm:$0xff] %v2581
        %2586 = vst [vmem:[#allocation2 + $0x1c8] sm:$0xff] %v2582
        %v2587 = vld [vmem:[#allocation3] sm:$0xff]
        %v2588 = vld [vmem:[#allocation3 + $0x8] sm:$0xff]
        %v2589 = vld [vmem:[#allocation3 + $0x10] sm:$0xff]
        %v2590 = vld [vmem:[%s696] ss:$2 sm:$0x3]
        %v2592 = vlaneseq
        %v2593 = vshrl.u32 %v2592, 7
        %v2594 = vsub.s32 0, %v2593
        %v2595 = vrot.slane %v2590, %v2594
        %v2596 = vlaneseq
        %v2597 = vshrl.u32 %v2596, 7
        %v2598 = vsub.s32 1, %v2597
        %v2599 = vrot.slane %v2590, %v2598
        %2600 = vrot.lane.b32.xlu0 %v2595, 18
        %v2601 = vpop.permute.xlu0 %2600
        %2602 = vrot.lane.b32.xlu0 %v2599, 18
        %v2603 = vpop.permute.xlu0 %2602
        %v2604 = vsel %vm872, %v2601, %v2603
        %v2608 = vmul.f32 %v2587, %v2601
        %v2609 = vmul.f32 %v2588, %v2604
        %v2610 = vmul.f32 %v2589, %v2603
        %2614 = vrot.lane.b32.xlu0 %v2608, 110
        %v2615 = vpop.permute.xlu0 %2614
        %2616 = vrot.lane.b32.xlu0 %v2609, 110
        %v2617 = vpop.permute.xlu0 %2616
        %2618 = vrot.lane.b32.xlu0 %v2610, 110
        %v2619 = vpop.permute.xlu0 %2618
        %v2620 = vsel %vm901, %v2615, %v2617
        %v2621 = vsel %vm901, %v2617, %v2619
        %2624 = vst [vmem:[#allocation2 + $0x220] sm:$0xff] %v2620
        %2625 = vst [vmem:[#allocation2 + $0x228] sm:$0xff] %v2621
        %v2626 = vld [vmem:[#allocation3] sm:$0xff]
        %v2627 = vld [vmem:[#allocation3 + $0x8] sm:$0xff]
        %v2628 = vld [vmem:[#allocation3 + $0x10] sm:$0xff]
        %v2629 = vld [vmem:[%s1] ss:$2 sm:$0x3]
        %v2631 = vlaneseq
        %v2632 = vshrl.u32 %v2631, 7
        %v2633 = vsub.s32 0, %v2632
        %v2634 = vrot.slane %v2629, %v2633
        %v2635 = vlaneseq
        %v2636 = vshrl.u32 %v2635, 7
        %v2637 = vsub.s32 1, %v2636
        %v2638 = vrot.slane %v2629, %v2637
        %2639 = vrot.lane.b32.xlu0 %v2634, 32
        %v2640 = vpop.permute.xlu0 %2639
        %2641 = vrot.lane.b32.xlu0 %v2638, 32
        %v2642 = vpop.permute.xlu0 %2641
        %v2643 = vsel %vm934, %v2640, %v2642
        %v2647 = vmul.f32 %v2626, %v2640
        %v2648 = vmul.f32 %v2627, %v2643
        %v2649 = vmul.f32 %v2628, %v2642
        %2653 = vrot.lane.b32.xlu0 %v2647, 96
        %v2654 = vpop.permute.xlu0 %2653
        %2655 = vrot.lane.b32.xlu0 %v2648, 96
        %v2656 = vpop.permute.xlu0 %2655
        %2657 = vrot.lane.b32.xlu0 %v2649, 96
        %v2658 = vpop.permute.xlu0 %2657
        %v2659 = vsel %vm963, %v2654, %v2656
        %v2660 = vsel %vm963, %v2656, %v2658
        %2663 = vst [vmem:[#allocation2 + $0x280] sm:$0xff] %v2659
        %2664 = vst [vmem:[#allocation2 + $0x288] sm:$0xff] %v2660
        %v2665 = vld [vmem:[#allocation3] sm:$0xff]
        %v2666 = vld [vmem:[#allocation3 + $0x8] sm:$0xff]
        %v2667 = vld [vmem:[#allocation3 + $0x10] sm:$0xff]
        %2671 = vrot.lane.b32.xlu0 %v2665, 95
        %v2672 = vpop.permute.xlu0 %2671
        %2673 = vrot.lane.b32.xlu0 %v2666, 95
        %v2674 = vpop.permute.xlu0 %2673
        %2675 = vrot.lane.b32.xlu0 %v2667, 95
        %v2676 = vpop.permute.xlu0 %2675
        %v2677 = vsel %vm1000, %v2672, %v2674
        %v2678 = vsel %vm1000, %v2674, %v2676
        %2681 = vst [vmem:[#allocation2 + $0x2e0] sm:$0xff] %v2677
        %2682 = vst [vmem:[#allocation2 + $0x2e8] sm:$0xff] %v2678
        %v2683 = vld [vmem:[#allocation3] sm:$0xff]
        %v2684 = vld [vmem:[#allocation3 + $0x8] sm:$0xff]
        %v2685 = vld [vmem:[#allocation3 + $0x10] sm:$0xff]
        %v2686 = vld [vmem:[%s696] ss:$2 sm:$0x3]
        %v2688 = vlaneseq
        %v2689 = vshrl.u32 %v2688, 7
        %v2690 = vsub.s32 0, %v2689
        %v2691 = vrot.slane %v2686, %v2690
        %v2692 = vlaneseq
        %v2693 = vshrl.u32 %v2692, 7
        %v2694 = vsub.s32 1, %v2693
        %v2695 = vrot.slane %v2686, %v2694
        %2696 = vrot.lane.b32.xlu0 %v2691, 34
        %v2697 = vpop.permute.xlu0 %2696
        %2698 = vrot.lane.b32.xlu0 %v2695, 34
        %v2699 = vpop.permute.xlu0 %2698
        %v2700 = vsel %vm592, %v2697, %v2699
        %v2704 = vmul.f32 %v2683, %v2697
        %v2705 = vmul.f32 %v2684, %v2700
        %v2706 = vmul.f32 %v2685, %v2699
        %2710 = vrot.lane.b32.xlu0 %v2704, 94
        %v2711 = vpop.permute.xlu0 %2710
        %2712 = vrot.lane.b32.xlu0 %v2705, 94
        %v2713 = vpop.permute.xlu0 %2712
        %2714 = vrot.lane.b32.xlu0 %v2706, 94
        %v2715 = vpop.permute.xlu0 %2714
        %v2716 = vsel %vm1061, %v2711, %v2713
        %v2717 = vsel %vm1061, %v2713, %v2715
        %2720 = vst [vmem:[#allocation2 + $0x340] sm:$0xff] %v2716
        %2721 = vst [vmem:[#allocation2 + $0x348] sm:$0xff] %v2717
        %v2722 = vld [vmem:[#allocation12] sm:$0xff]
        %v2723 = vld [vmem:[#allocation12 + $0x8] sm:$0xff]
        %v2724 = vld [vmem:[#allocation12 + $0x10] sm:$0xff]
        %v2725 = vld [vmem:[#allocation12 + $0x18] sm:$0xff]
        %v2726 = vld [vmem:[#allocation2] sm:$0xff]
        %v2727 = vld [vmem:[#allocation2 + $0x8] sm:$0xff]
        %v2728 = vld [vmem:[#allocation2 + $0x10] sm:$0xff]
        %v2729 = vld [vmem:[#allocation2 + $0x18] sm:$0xff]
        %v2730 = vld [vmem:[#allocation2 + $0x20] sm:$0xff]
        %v2731 = vld [vmem:[#allocation2 + $0x28] sm:$0xff]
        %v2732 = vld [vmem:[#allocation2 + $0x30] sm:$0xff]
        %v2733 = vld [vmem:[#allocation2 + $0x38] sm:$0xff]
        %v2734 = vld [vmem:[#allocation2 + $0x40] sm:$0xff]
        %v2735 = vld [vmem:[#allocation2 + $0x48] sm:$0xff]
        %v2736 = vld [vmem:[#allocation2 + $0x50] sm:$0xff]
        %v2737 = vld [vmem:[#allocation2 + $0x58] sm:$0xff]
        %v2738 = vld [vmem:[#allocation2 + $0x60] sm:$0xff]
        %v2739 = vld [vmem:[#allocation2 + $0x68] sm:$0xff]
        %v2740 = vld [vmem:[#allocation2 + $0x70] sm:$0xff]
        %v2741 = vld [vmem:[#allocation2 + $0x78] sm:$0xff]
        %v2742 = vld [vmem:[#allocation2 + $0x80] sm:$0xff]
        %v2743 = vld [vmem:[#allocation2 + $0x88] sm:$0xff]
        %v2744 = vld [vmem:[#allocation2 + $0x90] sm:$0xff]
        %v2745 = vld [vmem:[#allocation2 + $0x98] sm:$0xff]
        %v2746 = vld [vmem:[#allocation2 + $0xa0] sm:$0xff]
        %v2747 = vld [vmem:[#allocation2 + $0xa8] sm:$0xff]
        %v2748 = vld [vmem:[#allocation2 + $0xb0] sm:$0xff]
        %v2749 = vld [vmem:[#allocation2 + $0xb8] sm:$0xff]
        %v2750 = vld [vmem:[#allocation2 + $0xc0] sm:$0xff]
        %v2751 = vld [vmem:[#allocation2 + $0xc8] sm:$0xff]
        %v2752 = vld [vmem:[#allocation2 + $0xd0] sm:$0xff]
        %v2753 = vld [vmem:[#allocation2 + $0xd8] sm:$0xff]
        %v2754 = vld [vmem:[#allocation2 + $0xe0] sm:$0xff]
        %v2755 = vld [vmem:[#allocation2 + $0xe8] sm:$0xff]
        %v2756 = vld [vmem:[#allocation2 + $0xf0] sm:$0xff]
        %v2757 = vld [vmem:[#allocation2 + $0xf8] sm:$0xff]
        %v2758 = vld [vmem:[#allocation2 + $0x100] sm:$0xff]
        %v2759 = vld [vmem:[#allocation2 + $0x108] sm:$0xff]
        %v2760 = vld [vmem:[#allocation2 + $0x110] sm:$0xff]
        %v2761 = vld [vmem:[#allocation2 + $0x118] sm:$0xff]
        %v2762 = vld [vmem:[#allocation2 + $0x120] sm:$0xff]
        %v2763 = vld [vmem:[#allocation2 + $0x128] sm:$0xff]
        %v2764 = vld [vmem:[#allocation2 + $0x130] sm:$0xff]
        %v2765 = vld [vmem:[#allocation2 + $0x138] sm:$0xff]
        %v2766 = vld [vmem:[#allocation2 + $0x140] sm:$0xff]
        %v2767 = vld [vmem:[#allocation2 + $0x148] sm:$0xff]
        %v2768 = vld [vmem:[#allocation2 + $0x150] sm:$0xff]
        %v2769 = vld [vmem:[#allocation2 + $0x158] sm:$0xff]
        %v2770 = vld [vmem:[#allocation2 + $0x160] sm:$0xff]
        %v2771 = vld [vmem:[#allocation2 + $0x168] sm:$0xff]
        %v2772 = vld [vmem:[#allocation2 + $0x170] sm:$0xff]
        %v2773 = vld [vmem:[#allocation2 + $0x178] sm:$0xff]
        %v2774 = vld [vmem:[#allocation2 + $0x180] sm:$0xff]
        %v2775 = vld [vmem:[#allocation2 + $0x188] sm:$0xff]
        %v2776 = vld [vmem:[#allocation2 + $0x190] sm:$0xff]
        %v2777 = vld [vmem:[#allocation2 + $0x198] sm:$0xff]
        %v2778 = vld [vmem:[#allocation2 + $0x1a0] sm:$0xff]
        %v2779 = vld [vmem:[#allocation2 + $0x1a8] sm:$0xff]
        %v2780 = vld [vmem:[#allocation2 + $0x1b0] sm:$0xff]
        %v2781 = vld [vmem:[#allocation2 + $0x1b8] sm:$0xff]
        %v2782 = vld [vmem:[#allocation2 + $0x1c0] sm:$0xff]
        %v2783 = vld [vmem:[#allocation2 + $0x1c8] sm:$0xff]
        %v2784 = vld [vmem:[#allocation2 + $0x1d0] sm:$0xff]
        %v2785 = vld [vmem:[#allocation2 + $0x1d8] sm:$0xff]
        %v2786 = vld [vmem:[#allocation2 + $0x1e0] sm:$0xff]
        %v2787 = vld [vmem:[#allocation2 + $0x1e8] sm:$0xff]
        %v2788 = vld [vmem:[#allocation2 + $0x1f0] sm:$0xff]
        %v2789 = vld [vmem:[#allocation2 + $0x1f8] sm:$0xff]
        %v2790 = vld [vmem:[#allocation2 + $0x200] sm:$0xff]
        %v2791 = vld [vmem:[#allocation2 + $0x208] sm:$0xff]
        %v2792 = vld [vmem:[#allocation2 + $0x210] sm:$0xff]
        %v2793 = vld [vmem:[#allocation2 + $0x218] sm:$0xff]
        %v2794 = vld [vmem:[#allocation2 + $0x220] sm:$0xff]
        %v2795 = vld [vmem:[#allocation2 + $0x228] sm:$0xff]
        %v2796 = vld [vmem:[#allocation2 + $0x230] sm:$0xff]
        %v2797 = vld [vmem:[#allocation2 + $0x238] sm:$0xff]
        %v2798 = vld [vmem:[#allocation2 + $0x240] sm:$0xff]
        %v2799 = vld [vmem:[#allocation2 + $0x248] sm:$0xff]
        %v2800 = vld [vmem:[#allocation2 + $0x250] sm:$0xff]
        %v2801 = vld [vmem:[#allocation2 + $0x258] sm:$0xff]
        %v2802 = vld [vmem:[#allocation2 + $0x260] sm:$0xff]
        %v2803 = vld [vmem:[#allocation2 + $0x268] sm:$0xff]
        %v2804 = vld [vmem:[#allocation2 + $0x270] sm:$0xff]
        %v2805 = vld [vmem:[#allocation2 + $0x278] sm:$0xff]
        %v2806 = vld [vmem:[#allocation2 + $0x280] sm:$0xff]
        %v2807 = vld [vmem:[#allocation2 + $0x288] sm:$0xff]
        %v2808 = vld [vmem:[#allocation2 + $0x290] sm:$0xff]
        %v2809 = vld [vmem:[#allocation2 + $0x298] sm:$0xff]
        %v2810 = vld [vmem:[#allocation2 + $0x2a0] sm:$0xff]
        %v2811 = vld [vmem:[#allocation2 + $0x2a8] sm:$0xff]
        %v2812 = vld [vmem:[#allocation2 + $0x2b0] sm:$0xff]
        %v2813 = vld [vmem:[#allocation2 + $0x2b8] sm:$0xff]
        %v2814 = vld [vmem:[#allocation2 + $0x2c0] sm:$0xff]
        %v2815 = vld [vmem:[#allocation2 + $0x2c8] sm:$0xff]
        %v2816 = vld [vmem:[#allocation2 + $0x2d0] sm:$0xff]
        %v2817 = vld [vmem:[#allocation2 + $0x2d8] sm:$0xff]
        %v2818 = vld [vmem:[#allocation2 + $0x2e0] sm:$0xff]
        %v2819 = vld [vmem:[#allocation2 + $0x2e8] sm:$0xff]
        %v2820 = vld [vmem:[#allocation2 + $0x2f0] sm:$0xff]
        %v2821 = vld [vmem:[#allocation2 + $0x2f8] sm:$0xff]
        %v2822 = vld [vmem:[#allocation2 + $0x300] sm:$0xff]
        %v2823 = vld [vmem:[#allocation2 + $0x308] sm:$0xff]
        %v2824 = vld [vmem:[#allocation2 + $0x310] sm:$0xff]
        %v2825 = vld [vmem:[#allocation2 + $0x318] sm:$0xff]
        %v2826 = vld [vmem:[#allocation2 + $0x320] sm:$0xff]
        %v2827 = vld [vmem:[#allocation2 + $0x328] sm:$0xff]
        %v2828 = vld [vmem:[#allocation2 + $0x330] sm:$0xff]
        %v2829 = vld [vmem:[#allocation2 + $0x338] sm:$0xff]
        %v2830 = vld [vmem:[#allocation2 + $0x340] sm:$0xff]
        %v2831 = vld [vmem:[#allocation2 + $0x348] sm:$0xff]
        %v2832 = vld [vmem:[#allocation2 + $0x350] sm:$0xff]
        %v2833 = vld [vmem:[#allocation2 + $0x358] sm:$0xff]
        %v2834 = vld [vmem:[%s9] sm:$0xff]
        %2836 = vset.pattern.permute.xlu0 0
        %2837 = vperm.xlu0 %2836, %v2834
        %v2838 = vpop.permute.xlu0 %2837
        %v2841 = vsel %vm1192, %v2725, 0
        %2843 = vmatprep.subr.mxu0 %v2727
        %2844 = vmatpush1.msra.mxu0 %v2726
        %2845 = vmatprep.subr.mxu0 %v2729
        %2846 = vmatpush1.msra.mxu0 %v2728
        %2847 = vmatprep.subr.mxu0 %v2731
        %2848 = vmatpush1.msra.mxu0 %v2730
        %2849 = vmatprep.subr.mxu0 %v2733
        %2850 = vmatpush1.msra.mxu0 %v2732
        %2851 = vmatprep.subr.mxu0 %v2735
        %2852 = vmatpush1.msra.mxu0 %v2734
        %2853 = vmatprep.subr.mxu0 %v2737
        %2854 = vmatpush1.msra.mxu0 %v2736
        %2855 = vmatprep.subr.mxu0 %v2739
        %2856 = vmatpush1.msra.mxu0 %v2738
        %2857 = vmatprep.subr.mxu0 %v2741
        %2858 = vmatpush1.msra.mxu0 %v2740
        %2859 = vmatprep.subr.mxu0 %v2743
        %2860 = vmatpush1.msra.mxu0 %v2742
        %2861 = vmatprep.subr.mxu0 %v2745
        %2862 = vmatpush1.msra.mxu0 %v2744
        %2863 = vmatprep.subr.mxu0 %v2747
        %2864 = vmatpush1.msra.mxu0 %v2746
        %2865 = vmatprep.subr.mxu0 %v2749
        %2866 = vmatpush1.msra.mxu0 %v2748
        %2867 = vmatprep.subr.mxu0 %v2751
        %2868 = vmatpush1.msra.mxu0 %v2750
        %2869 = vmatprep.subr.mxu0 %v2753
        %2870 = vmatpush1.msra.mxu0 %v2752
        %2871 = vmatprep.subr.mxu0 %v2755
        %2872 = vmatpush1.msra.mxu0 %v2754
        %2873 = vmatprep.subr.mxu0 %v2757
        %2874 = vmatpush1.msra.mxu0 %v2756
        %2875 = vmatprep.subr.mxu0 %v2759
        %2876 = vmatpush1.msra.mxu0 %v2758
        %2877 = vmatprep.subr.mxu0 %v2761
        %2878 = vmatpush1.msra.mxu0 %v2760
        %2879 = vmatprep.subr.mxu0 %v2763
        %2880 = vmatpush1.msra.mxu0 %v2762
        %2881 = vmatprep.subr.mxu0 %v2765
        %2882 = vmatpush1.msra.mxu0 %v2764
        %2883 = vmatprep.subr.mxu0 %v2767
        %2884 = vmatpush1.msra.mxu0 %v2766
        %2885 = vmatprep.subr.mxu0 %v2769
        %2886 = vmatpush1.msra.mxu0 %v2768
        %2887 = vmatprep.subr.mxu0 %v2771
        %2888 = vmatpush1.msra.mxu0 %v2770
        %2889 = vmatprep.subr.mxu0 %v2773
        %2890 = vmatpush1.msra.mxu0 %v2772
        %2891 = vmatprep.subr.mxu0 %v2775
        %2892 = vmatpush1.msra.mxu0 %v2774
        %2893 = vmatprep.subr.mxu0 %v2777
        %2894 = vmatpush1.msra.mxu0 %v2776
        %2895 = vmatprep.subr.mxu0 %v2779
        %2896 = vmatpush1.msra.mxu0 %v2778
        %2897 = vmatprep.subr.mxu0 %v2781
        %2898 = vmatpush1.msra.mxu0 %v2780
        %2899 = vmatprep.subr.mxu0 %v2783
        %2900 = vmatpush1.msra.mxu0 %v2782
        %2901 = vmatprep.subr.mxu0 %v2785
        %2902 = vmatpush1.msra.mxu0 %v2784
        %2903 = vmatprep.subr.mxu0 %v2787
        %2904 = vmatpush1.msra.mxu0 %v2786
        %2905 = vmatprep.subr.mxu0 %v2789
        %2906 = vmatpush1.msra.mxu0 %v2788
        %2907 = vmatprep.mubr.f32.mxu0 %v2723
        %2908 = vmatmul.mubr.f32.gmra.mrb[0].mxu0 %v2722
        %v2909 = vpop.f32.mrb[0].mxu0
        %v2910 = vadd.f32 %v2838, %v2909
        %v2911 = vpop.f32.mrb[0].mxu0
        %v2912 = vadd.f32 %v2838, %v2911
        %2913 = vdwg.mxu0
        %2914 = vmatprep.subr.mxu0 %v2791
        %2915 = vmatpush1.msra.mxu0 %v2790
        %2916 = vmatprep.subr.mxu0 %v2793
        %2917 = vmatpush1.msra.mxu0 %v2792
        %2918 = vmatprep.subr.mxu0 %v2795
        %2919 = vmatpush1.msra.mxu0 %v2794
        %2920 = vmatprep.subr.mxu0 %v2797
        %2921 = vmatpush1.msra.mxu0 %v2796
        %2922 = vmatprep.subr.mxu0 %v2799
        %2923 = vmatpush1.msra.mxu0 %v2798
        %2924 = vmatprep.subr.mxu0 %v2801
        %2925 = vmatpush1.msra.mxu0 %v2800
        %2926 = vmatprep.subr.mxu0 %v2803
        %2927 = vmatpush1.msra.mxu0 %v2802
        %2928 = vmatprep.subr.mxu0 %v2805
        %2929 = vmatpush1.msra.mxu0 %v2804
        %2930 = vmatprep.subr.mxu0 %v2807
        %2931 = vmatpush1.msra.mxu0 %v2806
        %2932 = vmatprep.subr.mxu0 %v2809
        %2933 = vmatpush1.msra.mxu0 %v2808
        %2934 = vmatprep.subr.mxu0 %v2811
        %2935 = vmatpush1.msra.mxu0 %v2810
        %2936 = vmatprep.subr.mxu0 %v2813
        %2937 = vmatpush1.msra.mxu0 %v2812
        %2938 = vmatprep.subr.mxu0 %v2815
        %2939 = vmatpush1.msra.mxu0 %v2814
        %2940 = vmatprep.subr.mxu0 %v2817
        %2941 = vmatpush1.msra.mxu0 %v2816
        %2942 = vmatprep.subr.mxu0 %v2819
        %2943 = vmatpush1.msra.mxu0 %v2818
        %2944 = vmatprep.subr.mxu0 %v2821
        %2945 = vmatpush1.msra.mxu0 %v2820
        %2946 = vmatprep.subr.mxu0 %v2823
        %2947 = vmatpush1.msra.mxu0 %v2822
        %2948 = vmatprep.subr.mxu0 %v2825
        %2949 = vmatpush1.msra.mxu0 %v2824
        %2950 = vmatprep.subr.mxu0 %v2827
        %2951 = vmatpush1.msra.mxu0 %v2826
        %2952 = vmatprep.subr.mxu0 %v2829
        %2953 = vmatpush1.msra.mxu0 %v2828
        %2954 = vmatprep.subr.mxu0 %v2831
        %2955 = vmatpush1.msra.mxu0 %v2830
        %2956 = vmatprep.subr.mxu0 %v2833
        %2957 = vmatpush1.msra.mxu0 %v2832
        %2958 = vmatprep.subr.mxu0 0.0
        %2959 = vmatpush1.msra.mxu0 0.0
        %2960 = vmatprep.subr.mxu0 0.0
        %2961 = vmatpush1.msra.mxu0 0.0
        %2962 = vmatprep.subr.mxu0 0.0
        %2963 = vmatpush1.msra.mxu0 0.0
        %2964 = vmatprep.subr.mxu0 0.0
        %2965 = vmatpush1.msra.mxu0 0.0
        %2966 = vmatprep.subr.mxu0 0.0
        %2967 = vmatpush1.msra.mxu0 0.0
        %2968 = vmatprep.subr.mxu0 0.0
        %2969 = vmatpush1.msra.mxu0 0.0
        %2970 = vmatprep.subr.mxu0 0.0
        %2971 = vmatpush1.msra.mxu0 0.0
        %2972 = vmatprep.subr.mxu0 0.0
        %2973 = vmatpush1.msra.mxu0 0.0
        %2974 = vmatprep.subr.mxu0 0.0
        %2975 = vmatpush1.msra.mxu0 0.0
        %2976 = vmatprep.subr.mxu0 0.0
        %2977 = vmatpush1.msra.mxu0 0.0
        %2978 = vmatprep.mubr.f32.mxu0 %v2841
        %2979 = vmatmul.mubr.f32.gmra.mrb[0].mxu0 %v2724
        %v2980 = vpop.f32.mrb[0].mxu0
        %v2981 = vadd.f32 %v2910, %v2980
        %v2982 = vpop.f32.mrb[0].mxu0
        %v2983 = vadd.f32 %v2912, %v2982
        %2984 = vdwg.mxu0
        %vm2985 = vcmp.ge.f32.partialorder %v2981, 0.0
        %vm2986 = vcmp.ge.f32.partialorder %v2983, 0.0
        %v2987 = vmul.f32 %v2981, 0.2
        %v2988 = vmul.f32 %v2983, 0.2
        %v2989 = vsel %vm2985, %v2981, %v2987
        %v2990 = vsel %vm2986, %v2983, %v2988
        %2993 = vrot.lane.b32.xlu0 %v2989, 17
        %v2994 = vpop.permute.xlu0 %2993
        %2995 = vrot.lane.b32.xlu0 %v2990, 17
        %v2996 = vpop.permute.xlu0 %2995
        %v2997 = vsel %vm613, %v2994, %v2996
        %3001 = vst.msk [vmem:[#allocation3] sm:$0xff] %vm622, %v2994
        %3002 = vst [vmem:[#allocation3 + $0x8] sm:$0xff] %v2997
        %3003 = vst.msk [vmem:[#allocation3 + $0x10] sm:$0xff] %vm613, %v2996
        %v3004 = vld [vmem:[#allocation3] sm:$0xff]
        %v3005 = vld [vmem:[#allocation3 + $0x8] sm:$0xff]
        %v3006 = vld [vmem:[%s1] ss:$2 sm:$0x3]
        %v3008 = vlaneseq
        %v3009 = vshrl.u32 %v3008, 7
        %v3010 = vsub.s32 0, %v3009
        %v3011 = vrot.slane %v3006, %v3010
        %v3012 = vlaneseq
        %v3013 = vshrl.u32 %v3012, 7
        %v3014 = vsub.s32 1, %v3013
        %v3015 = vrot.slane %v3006, %v3014
        %v3018 = vmul.f32 %v3004, %v3011
        %v3019 = vmul.f32 %v3005, %v3015
        %3020 = vst [vmem:[#allocation2 + $0x50] sm:$0xff] %v3018
        %3021 = vst [vmem:[#allocation2 + $0x58] sm:$0xff] %v3019
        %v3022 = vld [vmem:[#allocation3] sm:$0xff]
        %v3023 = vld [vmem:[#allocation3 + $0x8] sm:$0xff]
        %v3024 = vld [vmem:[#allocation3 + $0x10] sm:$0xff]
        %3028 = vrot.lane.b32.xlu0 %v3022, 127
        %v3029 = vpop.permute.xlu0 %3028
        %3030 = vrot.lane.b32.xlu0 %v3023, 127
        %v3031 = vpop.permute.xlu0 %3030
        %3032 = vrot.lane.b32.xlu0 %v3024, 127
        %v3033 = vpop.permute.xlu0 %3032
        %v3034 = vsel %vm677, %v3029, %v3031
        %v3035 = vsel %vm677, %v3031, %v3033
        %3038 = vst [vmem:[#allocation2 + $0xb0] sm:$0xff] %v3034
        %3039 = vst [vmem:[#allocation2 + $0xb8] sm:$0xff] %v3035
        %v3040 = vld [vmem:[#allocation3] sm:$0xff]
        %v3041 = vld [vmem:[#allocation3 + $0x8] sm:$0xff]
        %v3042 = vld [vmem:[#allocation3 + $0x10] sm:$0xff]
        %v3043 = vld [vmem:[%s696] ss:$2 sm:$0x3]
        %v3045 = vlaneseq
        %v3046 = vshrl.u32 %v3045, 7
        %v3047 = vsub.s32 0, %v3046
        %v3048 = vrot.slane %v3043, %v3047
        %v3049 = vlaneseq
        %v3050 = vshrl.u32 %v3049, 7
        %v3051 = vsub.s32 1, %v3050
        %v3052 = vrot.slane %v3043, %v3051
        %3053 = vrot.lane.b32.xlu0 %v3048, 2
        %v3054 = vpop.permute.xlu0 %3053
        %3055 = vrot.lane.b32.xlu0 %v3052, 2
        %v3056 = vpop.permute.xlu0 %3055
        %v3057 = vsel %vm711, %v3054, %v3056
        %v3061 = vmul.f32 %v3040, %v3054
        %v3062 = vmul.f32 %v3041, %v3057
        %v3063 = vmul.f32 %v3042, %v3056
        %3067 = vrot.lane.b32.xlu0 %v3061, 126
        %v3068 = vpop.permute.xlu0 %3067
        %3069 = vrot.lane.b32.xlu0 %v3062, 126
        %v3070 = vpop.permute.xlu0 %3069
        %3071 = vrot.lane.b32.xlu0 %v3063, 126
        %v3072 = vpop.permute.xlu0 %3071
        %v3073 = vsel %vm740, %v3068, %v3070
        %v3074 = vsel %vm740, %v3070, %v3072
        %3077 = vst [vmem:[#allocation2 + $0x110] sm:$0xff] %v3073
        %3078 = vst [vmem:[#allocation2 + $0x118] sm:$0xff] %v3074
        %v3079 = vld [vmem:[#allocation3] sm:$0xff]
        %v3080 = vld [vmem:[#allocation3 + $0x8] sm:$0xff]
        %v3081 = vld [vmem:[#allocation3 + $0x10] sm:$0xff]
        %v3082 = vld [vmem:[%s1] ss:$2 sm:$0x3]
        %v3084 = vlaneseq
        %v3085 = vshrl.u32 %v3084, 7
        %v3086 = vsub.s32 0, %v3085
        %v3087 = vrot.slane %v3082, %v3086
        %v3088 = vlaneseq
        %v3089 = vshrl.u32 %v3088, 7
        %v3090 = vsub.s32 1, %v3089
        %v3091 = vrot.slane %v3082, %v3090
        %3092 = vrot.lane.b32.xlu0 %v3087, 16
        %v3093 = vpop.permute.xlu0 %3092
        %3094 = vrot.lane.b32.xlu0 %v3091, 16
        %v3095 = vpop.permute.xlu0 %3094
        %v3096 = vsel %vm773, %v3093, %v3095
        %v3100 = vmul.f32 %v3079, %v3093
        %v3101 = vmul.f32 %v3080, %v3096
        %v3102 = vmul.f32 %v3081, %v3095
        %3106 = vrot.lane.b32.xlu0 %v3100, 112
        %v3107 = vpop.permute.xlu0 %3106
        %3108 = vrot.lane.b32.xlu0 %v3101, 112
        %v3109 = vpop.permute.xlu0 %3108
        %3110 = vrot.lane.b32.xlu0 %v3102, 112
        %v3111 = vpop.permute.xlu0 %3110
        %v3112 = vsel %vm802, %v3107, %v3109
        %v3113 = vsel %vm802, %v3109, %v3111
        %3116 = vst [vmem:[#allocation2 + $0x170] sm:$0xff] %v3112
        %3117 = vst [vmem:[#allocation2 + $0x178] sm:$0xff] %v3113
        %v3118 = vld [vmem:[#allocation3] sm:$0xff]
        %v3119 = vld [vmem:[#allocation3 + $0x8] sm:$0xff]
        %v3120 = vld [vmem:[#allocation3 + $0x10] sm:$0xff]
        %3124 = vrot.lane.b32.xlu0 %v3118, 111
        %v3125 = vpop.permute.xlu0 %3124
        %3126 = vrot.lane.b32.xlu0 %v3119, 111
        %v3127 = vpop.permute.xlu0 %3126
        %3128 = vrot.lane.b32.xlu0 %v3120, 111
        %v3129 = vpop.permute.xlu0 %3128
        %v3130 = vsel %vm839, %v3125, %v3127
        %v3131 = vsel %vm839, %v3127, %v3129
        %3134 = vst [vmem:[#allocation2 + $0x1d0] sm:$0xff] %v3130
        %3135 = vst [vmem:[#allocation2 + $0x1d8] sm:$0xff] %v3131
        %v3136 = vld [vmem:[#allocation3] sm:$0xff]
        %v3137 = vld [vmem:[#allocation3 + $0x8] sm:$0xff]
        %v3138 = vld [vmem:[#allocation3 + $0x10] sm:$0xff]
        %v3139 = vld [vmem:[%s696] ss:$2 sm:$0x3]
        %v3141 = vlaneseq
        %v3142 = vshrl.u32 %v3141, 7
        %v3143 = vsub.s32 0, %v3142
        %v3144 = vrot.slane %v3139, %v3143
        %v3145 = vlaneseq
        %v3146 = vshrl.u32 %v3145, 7
        %v3147 = vsub.s32 1, %v3146
        %v3148 = vrot.slane %v3139, %v3147
        %3149 = vrot.lane.b32.xlu0 %v3144, 18
        %v3150 = vpop.permute.xlu0 %3149
        %3151 = vrot.lane.b32.xlu0 %v3148, 18
        %v3152 = vpop.permute.xlu0 %3151
        %v3153 = vsel %vm872, %v3150, %v3152
        %v3157 = vmul.f32 %v3136, %v3150
        %v3158 = vmul.f32 %v3137, %v3153
        %v3159 = vmul.f32 %v3138, %v3152
        %3163 = vrot.lane.b32.xlu0 %v3157, 110
        %v3164 = vpop.permute.xlu0 %3163
        %3165 = vrot.lane.b32.xlu0 %v3158, 110
        %v3166 = vpop.permute.xlu0 %3165
        %3167 = vrot.lane.b32.xlu0 %v3159, 110
        %v3168 = vpop.permute.xlu0 %3167
        %v3169 = vsel %vm901, %v3164, %v3166
        %v3170 = vsel %vm901, %v3166, %v3168
        %3173 = vst [vmem:[#allocation2 + $0x230] sm:$0xff] %v3169
        %3174 = vst [vmem:[#allocation2 + $0x238] sm:$0xff] %v3170
        %v3175 = vld [vmem:[#allocation3] sm:$0xff]
        %v3176 = vld [vmem:[#allocation3 + $0x8] sm:$0xff]
        %v3177 = vld [vmem:[#allocation3 + $0x10] sm:$0xff]
        %v3178 = vld [vmem:[%s1] ss:$2 sm:$0x3]
        %v3180 = vlaneseq
        %v3181 = vshrl.u32 %v3180, 7
        %v3182 = vsub.s32 0, %v3181
        %v3183 = vrot.slane %v3178, %v3182
        %v3184 = vlaneseq
        %v3185 = vshrl.u32 %v3184, 7
        %v3186 = vsub.s32 1, %v3185
        %v3187 = vrot.slane %v3178, %v3186
        %3188 = vrot.lane.b32.xlu0 %v3183, 32
        %v3189 = vpop.permute.xlu0 %3188
        %3190 = vrot.lane.b32.xlu0 %v3187, 32
        %v3191 = vpop.permute.xlu0 %3190
        %v3192 = vsel %vm934, %v3189, %v3191
        %v3196 = vmul.f32 %v3175, %v3189
        %v3197 = vmul.f32 %v3176, %v3192
        %v3198 = vmul.f32 %v3177, %v3191
        %3202 = vrot.lane.b32.xlu0 %v3196, 96
        %v3203 = vpop.permute.xlu0 %3202
        %3204 = vrot.lane.b32.xlu0 %v3197, 96
        %v3205 = vpop.permute.xlu0 %3204
        %3206 = vrot.lane.b32.xlu0 %v3198, 96
        %v3207 = vpop.permute.xlu0 %3206
        %v3208 = vsel %vm963, %v3203, %v3205
        %v3209 = vsel %vm963, %v3205, %v3207
        %3212 = vst [vmem:[#allocation2 + $0x290] sm:$0xff] %v3208
        %3213 = vst [vmem:[#allocation2 + $0x298] sm:$0xff] %v3209
        %v3214 = vld [vmem:[#allocation3] sm:$0xff]
        %v3215 = vld [vmem:[#allocation3 + $0x8] sm:$0xff]
        %v3216 = vld [vmem:[#allocation3 + $0x10] sm:$0xff]
        %3220 = vrot.lane.b32.xlu0 %v3214, 95
        %v3221 = vpop.permute.xlu0 %3220
        %3222 = vrot.lane.b32.xlu0 %v3215, 95
        %v3223 = vpop.permute.xlu0 %3222
        %3224 = vrot.lane.b32.xlu0 %v3216, 95
        %v3225 = vpop.permute.xlu0 %3224
        %v3226 = vsel %vm1000, %v3221, %v3223
        %v3227 = vsel %vm1000, %v3223, %v3225
        %3230 = vst [vmem:[#allocation2 + $0x2f0] sm:$0xff] %v3226
        %3231 = vst [vmem:[#allocation2 + $0x2f8] sm:$0xff] %v3227
        %v3232 = vld [vmem:[#allocation3] sm:$0xff]
        %v3233 = vld [vmem:[#allocation3 + $0x8] sm:$0xff]
        %v3234 = vld [vmem:[#allocation3 + $0x10] sm:$0xff]
        %v3235 = vld [vmem:[%s696] ss:$2 sm:$0x3]
        %v3237 = vlaneseq
        %v3238 = vshrl.u32 %v3237, 7
        %v3239 = vsub.s32 0, %v3238
        %v3240 = vrot.slane %v3235, %v3239
        %v3241 = vlaneseq
        %v3242 = vshrl.u32 %v3241, 7
        %v3243 = vsub.s32 1, %v3242
        %v3244 = vrot.slane %v3235, %v3243
        %3245 = vrot.lane.b32.xlu0 %v3240, 34
        %v3246 = vpop.permute.xlu0 %3245
        %3247 = vrot.lane.b32.xlu0 %v3244, 34
        %v3248 = vpop.permute.xlu0 %3247
        %v3249 = vsel %vm592, %v3246, %v3248
        %v3253 = vmul.f32 %v3232, %v3246
        %v3254 = vmul.f32 %v3233, %v3249
        %v3255 = vmul.f32 %v3234, %v3248
        %3259 = vrot.lane.b32.xlu0 %v3253, 94
        %v3260 = vpop.permute.xlu0 %3259
        %3261 = vrot.lane.b32.xlu0 %v3254, 94
        %v3262 = vpop.permute.xlu0 %3261
        %3263 = vrot.lane.b32.xlu0 %v3255, 94
        %v3264 = vpop.permute.xlu0 %3263
        %v3265 = vsel %vm1061, %v3260, %v3262
        %v3266 = vsel %vm1061, %v3262, %v3264
        %3269 = vst [vmem:[#allocation2 + $0x350] sm:$0xff] %v3265
        %3270 = vst [vmem:[#allocation2 + $0x358] sm:$0xff] %v3266
        %v3271 = vld [vmem:[%s10] sm:$0xff]
        %v3272 = vld [vmem:[%s10 + $0x8] sm:$0xff]
        %v3273 = vld [vmem:[%s10 + $0x10] sm:$0xff]
        %v3274 = vld [vmem:[%s10 + $0x18] sm:$0xff]
        %v3275 = vld [vmem:[%s10 + $0x20] sm:$0xff]
        %v3276 = vld [vmem:[%s10 + $0x28] sm:$0xff]
        %v3277 = vld [vmem:[%s10 + $0x30] sm:$0xff]
        %v3278 = vld [vmem:[%s10 + $0x38] sm:$0xff]
        %v3279 = vld [vmem:[#allocation2] sm:$0xff]
        %v3280 = vld [vmem:[#allocation2 + $0x8] sm:$0xff]
        %v3281 = vld [vmem:[#allocation2 + $0x10] sm:$0xff]
        %v3282 = vld [vmem:[#allocation2 + $0x18] sm:$0xff]
        %v3283 = vld [vmem:[#allocation2 + $0x20] sm:$0xff]
        %v3284 = vld [vmem:[#allocation2 + $0x28] sm:$0xff]
        %v3285 = vld [vmem:[#allocation2 + $0x30] sm:$0xff]
        %v3286 = vld [vmem:[#allocation2 + $0x38] sm:$0xff]
        %v3287 = vld [vmem:[#allocation2 + $0x40] sm:$0xff]
        %v3288 = vld [vmem:[#allocation2 + $0x48] sm:$0xff]
        %v3289 = vld [vmem:[#allocation2 + $0x50] sm:$0xff]
        %v3290 = vld [vmem:[#allocation2 + $0x58] sm:$0xff]
        %v3291 = vld [vmem:[#allocation2 + $0x60] sm:$0xff]
        %v3292 = vld [vmem:[#allocation2 + $0x68] sm:$0xff]
        %v3293 = vld [vmem:[#allocation2 + $0x70] sm:$0xff]
        %v3294 = vld [vmem:[#allocation2 + $0x78] sm:$0xff]
        %v3295 = vld [vmem:[#allocation2 + $0x80] sm:$0xff]
        %v3296 = vld [vmem:[#allocation2 + $0x88] sm:$0xff]
        %v3297 = vld [vmem:[#allocation2 + $0x90] sm:$0xff]
        %v3298 = vld [vmem:[#allocation2 + $0x98] sm:$0xff]
        %v3299 = vld [vmem:[#allocation2 + $0xa0] sm:$0xff]
        %v3300 = vld [vmem:[#allocation2 + $0xa8] sm:$0xff]
        %v3301 = vld [vmem:[#allocation2 + $0xb0] sm:$0xff]
        %v3302 = vld [vmem:[#allocation2 + $0xb8] sm:$0xff]
        %v3303 = vld [vmem:[#allocation2 + $0xc0] sm:$0xff]
        %v3304 = vld [vmem:[#allocation2 + $0xc8] sm:$0xff]
        %v3305 = vld [vmem:[#allocation2 + $0xd0] sm:$0xff]
        %v3306 = vld [vmem:[#allocation2 + $0xd8] sm:$0xff]
        %v3307 = vld [vmem:[#allocation2 + $0xe0] sm:$0xff]
        %v3308 = vld [vmem:[#allocation2 + $0xe8] sm:$0xff]
        %v3309 = vld [vmem:[#allocation2 + $0xf0] sm:$0xff]
        %v3310 = vld [vmem:[#allocation2 + $0xf8] sm:$0xff]
        %v3311 = vld [vmem:[#allocation2 + $0x100] sm:$0xff]
        %v3312 = vld [vmem:[#allocation2 + $0x108] sm:$0xff]
        %v3313 = vld [vmem:[#allocation2 + $0x110] sm:$0xff]
        %v3314 = vld [vmem:[#allocation2 + $0x118] sm:$0xff]
        %v3315 = vld [vmem:[#allocation2 + $0x120] sm:$0xff]
        %v3316 = vld [vmem:[#allocation2 + $0x128] sm:$0xff]
        %v3317 = vld [vmem:[#allocation2 + $0x130] sm:$0xff]
        %v3318 = vld [vmem:[#allocation2 + $0x138] sm:$0xff]
        %v3319 = vld [vmem:[#allocation2 + $0x140] sm:$0xff]
        %v3320 = vld [vmem:[#allocation2 + $0x148] sm:$0xff]
        %v3321 = vld [vmem:[#allocation2 + $0x150] sm:$0xff]
        %v3322 = vld [vmem:[#allocation2 + $0x158] sm:$0xff]
        %v3323 = vld [vmem:[#allocation2 + $0x160] sm:$0xff]
        %v3324 = vld [vmem:[#allocation2 + $0x168] sm:$0xff]
        %v3325 = vld [vmem:[#allocation2 + $0x170] sm:$0xff]
        %v3326 = vld [vmem:[#allocation2 + $0x178] sm:$0xff]
        %v3327 = vld [vmem:[#allocation2 + $0x180] sm:$0xff]
        %v3328 = vld [vmem:[#allocation2 + $0x188] sm:$0xff]
        %v3329 = vld [vmem:[#allocation2 + $0x190] sm:$0xff]
        %v3330 = vld [vmem:[#allocation2 + $0x198] sm:$0xff]
        %v3331 = vld [vmem:[#allocation2 + $0x1a0] sm:$0xff]
        %v3332 = vld [vmem:[#allocation2 + $0x1a8] sm:$0xff]
        %v3333 = vld [vmem:[#allocation2 + $0x1b0] sm:$0xff]
        %v3334 = vld [vmem:[#allocation2 + $0x1b8] sm:$0xff]
        %v3335 = vld [vmem:[#allocation2 + $0x1c0] sm:$0xff]
        %v3336 = vld [vmem:[#allocation2 + $0x1c8] sm:$0xff]
        %v3337 = vld [vmem:[#allocation2 + $0x1d0] sm:$0xff]
        %v3338 = vld [vmem:[#allocation2 + $0x1d8] sm:$0xff]
        %v3339 = vld [vmem:[#allocation2 + $0x1e0] sm:$0xff]
        %v3340 = vld [vmem:[#allocation2 + $0x1e8] sm:$0xff]
        %v3341 = vld [vmem:[#allocation2 + $0x1f0] sm:$0xff]
        %v3342 = vld [vmem:[#allocation2 + $0x1f8] sm:$0xff]
        %v3343 = vld [vmem:[#allocation2 + $0x200] sm:$0xff]
        %v3344 = vld [vmem:[#allocation2 + $0x208] sm:$0xff]
        %v3345 = vld [vmem:[#allocation2 + $0x210] sm:$0xff]
        %v3346 = vld [vmem:[#allocation2 + $0x218] sm:$0xff]
        %v3347 = vld [vmem:[#allocation2 + $0x220] sm:$0xff]
        %v3348 = vld [vmem:[#allocation2 + $0x228] sm:$0xff]
        %v3349 = vld [vmem:[#allocation2 + $0x230] sm:$0xff]
        %v3350 = vld [vmem:[#allocation2 + $0x238] sm:$0xff]
        %v3351 = vld [vmem:[#allocation2 + $0x240] sm:$0xff]
        %v3352 = vld [vmem:[#allocation2 + $0x248] sm:$0xff]
        %v3353 = vld [vmem:[#allocation2 + $0x250] sm:$0xff]
        %v3354 = vld [vmem:[#allocation2 + $0x258] sm:$0xff]
        %v3355 = vld [vmem:[#allocation2 + $0x260] sm:$0xff]
        %v3356 = vld [vmem:[#allocation2 + $0x268] sm:$0xff]
        %v3357 = vld [vmem:[#allocation2 + $0x270] sm:$0xff]
        %v3358 = vld [vmem:[#allocation2 + $0x278] sm:$0xff]
        %v3359 = vld [vmem:[#allocation2 + $0x280] sm:$0xff]
        %v3360 = vld [vmem:[#allocation2 + $0x288] sm:$0xff]
        %v3361 = vld [vmem:[#allocation2 + $0x290] sm:$0xff]
        %v3362 = vld [vmem:[#allocation2 + $0x298] sm:$0xff]
        %v3363 = vld [vmem:[#allocation2 + $0x2a0] sm:$0xff]
        %v3364 = vld [vmem:[#allocation2 + $0x2a8] sm:$0xff]
        %v3365 = vld [vmem:[#allocation2 + $0x2b0] sm:$0xff]
        %v3366 = vld [vmem:[#allocation2 + $0x2b8] sm:$0xff]
        %v3367 = vld [vmem:[#allocation2 + $0x2c0] sm:$0xff]
        %v3368 = vld [vmem:[#allocation2 + $0x2c8] sm:$0xff]
        %v3369 = vld [vmem:[#allocation2 + $0x2d0] sm:$0xff]
        %v3370 = vld [vmem:[#allocation2 + $0x2d8] sm:$0xff]
        %v3371 = vld [vmem:[#allocation2 + $0x2e0] sm:$0xff]
        %v3372 = vld [vmem:[#allocation2 + $0x2e8] sm:$0xff]
        %v3373 = vld [vmem:[#allocation2 + $0x2f0] sm:$0xff]
        %v3374 = vld [vmem:[#allocation2 + $0x2f8] sm:$0xff]
        %v3375 = vld [vmem:[#allocation2 + $0x300] sm:$0xff]
        %v3376 = vld [vmem:[#allocation2 + $0x308] sm:$0xff]
        %v3377 = vld [vmem:[#allocation2 + $0x310] sm:$0xff]
        %v3378 = vld [vmem:[#allocation2 + $0x318] sm:$0xff]
        %v3379 = vld [vmem:[#allocation2 + $0x320] sm:$0xff]
        %v3380 = vld [vmem:[#allocation2 + $0x328] sm:$0xff]
        %v3381 = vld [vmem:[#allocation2 + $0x330] sm:$0xff]
        %v3382 = vld [vmem:[#allocation2 + $0x338] sm:$0xff]
        %v3383 = vld [vmem:[#allocation2 + $0x340] sm:$0xff]
        %v3384 = vld [vmem:[#allocation2 + $0x348] sm:$0xff]
        %v3385 = vld [vmem:[#allocation2 + $0x350] sm:$0xff]
        %v3386 = vld [vmem:[#allocation2 + $0x358] sm:$0xff]
        %v3387 = vld [vmem:[%s11] sm:$0xff]
        %v3388 = vld [vmem:[%s11 + $0x8] sm:$0xff]
        %3390 = vset.pattern.permute.xlu0 0
        %3391 = vperm.xlu0 %3390, %v3387
        %v3392 = vpop.permute.xlu0 %3391
        %3395 = vset.pattern.permute.xlu0 0
        %3396 = vperm.xlu0 %3395, %v3388
        %v3397 = vpop.permute.xlu0 %3396
        %v3400 = vsel %vm1192, %v3274, 0
        %v3403 = vsel %vm1192, %v3278, 0
        %3405 = vmatprep.subr.mxu0 %v3280
        %3406 = vmatpush1.msra.mxu0 %v3279
        %3407 = vmatprep.subr.mxu0 %v3282
        %3408 = vmatpush1.msra.mxu0 %v3281
        %3409 = vmatprep.subr.mxu0 %v3284
        %3410 = vmatpush1.msra.mxu0 %v3283
        %3411 = vmatprep.subr.mxu0 %v3286
        %3412 = vmatpush1.msra.mxu0 %v3285
        %3413 = vmatprep.subr.mxu0 %v3288
        %3414 = vmatpush1.msra.mxu0 %v3287
        %3415 = vmatprep.subr.mxu0 %v3290
        %3416 = vmatpush1.msra.mxu0 %v3289
        %3417 = vmatprep.subr.mxu0 %v3292
        %3418 = vmatpush1.msra.mxu0 %v3291
        %3419 = vmatprep.subr.mxu0 %v3294
        %3420 = vmatpush1.msra.mxu0 %v3293
        %3421 = vmatprep.subr.mxu0 %v3296
        %3422 = vmatpush1.msra.mxu0 %v3295
        %3423 = vmatprep.subr.mxu0 %v3298
        %3424 = vmatpush1.msra.mxu0 %v3297
        %3425 = vmatprep.subr.mxu0 %v3300
        %3426 = vmatpush1.msra.mxu0 %v3299
        %3427 = vmatprep.subr.mxu0 %v3302
        %3428 = vmatpush1.msra.mxu0 %v3301
        %3429 = vmatprep.subr.mxu0 %v3304
        %3430 = vmatpush1.msra.mxu0 %v3303
        %3431 = vmatprep.subr.mxu0 %v3306
        %3432 = vmatpush1.msra.mxu0 %v3305
        %3433 = vmatprep.subr.mxu0 %v3308
        %3434 = vmatpush1.msra.mxu0 %v3307
        %3435 = vmatprep.subr.mxu0 %v3310
        %3436 = vmatpush1.msra.mxu0 %v3309
        %3437 = vmatprep.subr.mxu0 %v3312
        %3438 = vmatpush1.msra.mxu0 %v3311
        %3439 = vmatprep.subr.mxu0 %v3314
        %3440 = vmatpush1.msra.mxu0 %v3313
        %3441 = vmatprep.subr.mxu0 %v3316
        %3442 = vmatpush1.msra.mxu0 %v3315
        %3443 = vmatprep.subr.mxu0 %v3318
        %3444 = vmatpush1.msra.mxu0 %v3317
        %3445 = vmatprep.subr.mxu0 %v3320
        %3446 = vmatpush1.msra.mxu0 %v3319
        %3447 = vmatprep.subr.mxu0 %v3322
        %3448 = vmatpush1.msra.mxu0 %v3321
        %3449 = vmatprep.subr.mxu0 %v3324
        %3450 = vmatpush1.msra.mxu0 %v3323
        %3451 = vmatprep.subr.mxu0 %v3326
        %3452 = vmatpush1.msra.mxu0 %v3325
        %3453 = vmatprep.subr.mxu0 %v3328
        %3454 = vmatpush1.msra.mxu0 %v3327
        %3455 = vmatprep.subr.mxu0 %v3330
        %3456 = vmatpush1.msra.mxu0 %v3329
        %3457 = vmatprep.subr.mxu0 %v3332
        %3458 = vmatpush1.msra.mxu0 %v3331
        %3459 = vmatprep.subr.mxu0 %v3334
        %3460 = vmatpush1.msra.mxu0 %v3333
        %3461 = vmatprep.subr.mxu0 %v3336
        %3462 = vmatpush1.msra.mxu0 %v3335
        %3463 = vmatprep.subr.mxu0 %v3338
        %3464 = vmatpush1.msra.mxu0 %v3337
        %3465 = vmatprep.subr.mxu0 %v3340
        %3466 = vmatpush1.msra.mxu0 %v3339
        %3467 = vmatprep.subr.mxu0 %v3342
        %3468 = vmatpush1.msra.mxu0 %v3341
        %3469 = vmatprep.mubr.f32.mxu0 %v3272
        %3470 = vmatmul.mubr.f32.gmra.mrb[0].mxu0 %v3271
        %v3471 = vpop.f32.mrb[0].mxu0
        %v3472 = vadd.f32 %v3392, %v3471
        %v3473 = vpop.f32.mrb[0].mxu0
        %v3474 = vadd.f32 %v3392, %v3473
        %3475 = vmatprep.mubr.f32.mxu0 %v3276
        %3476 = vmatmul.mubr.f32.gmra.mrb[0].mxu0 %v3275
        %v3477 = vpop.f32.mrb[0].mxu0
        %v3478 = vadd.f32 %v3397, %v3477
        %v3479 = vpop.f32.mrb[0].mxu0
        %v3480 = vadd.f32 %v3397, %v3479
        %3481 = vdwg.mxu0
        %3482 = vmatprep.subr.mxu0 %v3344
        %3483 = vmatpush1.msra.mxu0 %v3343
        %3484 = vmatprep.subr.mxu0 %v3346
        %3485 = vmatpush1.msra.mxu0 %v3345
        %3486 = vmatprep.subr.mxu0 %v3348
        %3487 = vmatpush1.msra.mxu0 %v3347
        %3488 = vmatprep.subr.mxu0 %v3350
        %3489 = vmatpush1.msra.mxu0 %v3349
        %3490 = vmatprep.subr.mxu0 %v3352
        %3491 = vmatpush1.msra.mxu0 %v3351
        %3492 = vmatprep.subr.mxu0 %v3354
        %3493 = vmatpush1.msra.mxu0 %v3353
        %3494 = vmatprep.subr.mxu0 %v3356
        %3495 = vmatpush1.msra.mxu0 %v3355
        %3496 = vmatprep.subr.mxu0 %v3358
        %3497 = vmatpush1.msra.mxu0 %v3357
        %3498 = vmatprep.subr.mxu0 %v3360
        %3499 = vmatpush1.msra.mxu0 %v3359
        %3500 = vmatprep.subr.mxu0 %v3362
        %3501 = vmatpush1.msra.mxu0 %v3361
        %3502 = vmatprep.subr.mxu0 %v3364
        %3503 = vmatpush1.msra.mxu0 %v3363
        %3504 = vmatprep.subr.mxu0 %v3366
        %3505 = vmatpush1.msra.mxu0 %v3365
        %3506 = vmatprep.subr.mxu0 %v3368
        %3507 = vmatpush1.msra.mxu0 %v3367
        %3508 = vmatprep.subr.mxu0 %v3370
        %3509 = vmatpush1.msra.mxu0 %v3369
        %3510 = vmatprep.subr.mxu0 %v3372
        %3511 = vmatpush1.msra.mxu0 %v3371
        %3512 = vmatprep.subr.mxu0 %v3374
        %3513 = vmatpush1.msra.mxu0 %v3373
        %3514 = vmatprep.subr.mxu0 %v3376
        %3515 = vmatpush1.msra.mxu0 %v3375
        %3516 = vmatprep.subr.mxu0 %v3378
        %3517 = vmatpush1.msra.mxu0 %v3377
        %3518 = vmatprep.subr.mxu0 %v3380
        %3519 = vmatpush1.msra.mxu0 %v3379
        %3520 = vmatprep.subr.mxu0 %v3382
        %3521 = vmatpush1.msra.mxu0 %v3381
        %3522 = vmatprep.subr.mxu0 %v3384
        %3523 = vmatpush1.msra.mxu0 %v3383
        %3524 = vmatprep.subr.mxu0 %v3386
        %3525 = vmatpush1.msra.mxu0 %v3385
        %3526 = vmatprep.subr.mxu0 0.0
        %3527 = vmatpush1.msra.mxu0 0.0
        %3528 = vmatprep.subr.mxu0 0.0
        %3529 = vmatpush1.msra.mxu0 0.0
        %3530 = vmatprep.subr.mxu0 0.0
        %3531 = vmatpush1.msra.mxu0 0.0
        %3532 = vmatprep.subr.mxu0 0.0
        %3533 = vmatpush1.msra.mxu0 0.0
        %3534 = vmatprep.subr.mxu0 0.0
        %3535 = vmatpush1.msra.mxu0 0.0
        %3536 = vmatprep.subr.mxu0 0.0
        %3537 = vmatpush1.msra.mxu0 0.0
        %3538 = vmatprep.subr.mxu0 0.0
        %3539 = vmatpush1.msra.mxu0 0.0
        %3540 = vmatprep.subr.mxu0 0.0
        %3541 = vmatpush1.msra.mxu0 0.0
        %3542 = vmatprep.subr.mxu0 0.0
        %3543 = vmatpush1.msra.mxu0 0.0
        %3544 = vmatprep.subr.mxu0 0.0
        %3545 = vmatpush1.msra.mxu0 0.0
        %3546 = vmatprep.mubr.f32.mxu0 %v3400
        %3547 = vmatmul.mubr.f32.gmra.mrb[0].mxu0 %v3273
        %v3548 = vpop.f32.mrb[0].mxu0
        %v3549 = vadd.f32 %v3472, %v3548
        %v3550 = vpop.f32.mrb[0].mxu0
        %v3551 = vadd.f32 %v3474, %v3550
        %3552 = vmatprep.mubr.f32.mxu0 %v3403
        %3553 = vmatmul.mubr.f32.gmra.mrb[0].mxu0 %v3277
        %v3554 = vpop.f32.mrb[0].mxu0
        %v3555 = vadd.f32 %v3478, %v3554
        %v3556 = vpop.f32.mrb[0].mxu0
        %v3557 = vadd.f32 %v3480, %v3556
        %3558 = vdwg.mxu0
        %v3559 = vmul.f32 %v3549, 0.2
        %v3560 = vmul.f32 %v3551, 0.2
        %v3561 = vmul.f32 %v3555, 0.2
        %v3562 = vmul.f32 %v3557, 0.2
        %v3563 = vadd.f32 %v597, %v3559
        %v3564 = vadd.f32 %v598, %v3560
        %v3565 = vadd.f32 %v599, %v3561
        %v3566 = vadd.f32 %v600, %v3562
        %3567 = vst [vmem:[%s481] sm:$0xff] %v3563
        %3568 = vst [vmem:[%s481 + $0x8] sm:$0xff] %v3564
        %3569 = vst [vmem:[%s481 + $0x10] sm:$0xff] %v3565
        %3570 = vst [vmem:[%s481 + $0x18] sm:$0xff] %v3566
        %s3571 = sand.u32 %s296, 1
        %s3572 = scalar_lea.sflag [#allocation6], %s3571
        %s3573 = sand.u32 %s296, 1
        %s3574 = smul.addr %s3573, 32
        %s3575 = scalar_lea.vmem [#allocation13], %s3574
        // Predicated region
        $region89: #{tpu_custom_call.1} parent=67 // pred_check
          %p3576 = pneg %p306
        $region90: #{tpu_custom_call.1} parent=67 // pred_check_branch
          %3578 = sbr.rel (%p3576) target = $region92
        $region91: #{tpu_custom_call.1} parent=67 // pred_region
          %s3580 = ssub.s32 512, 512
          %3581 = vsyncadd %s3572, %s3580
          %s3582 = smul.addr %s31, 4
          %s3583 = smul.addr %s3582, 128
          %s3584 = scalar_lea.hbm %s12, %s3583
          %s3585 = sshll.u32 %s3575, 4
          %s3586 = int_to_ptr.vmem [resolvable:$true] %s3585
          %3591 = dma.vmem_to_hbm [thread:$0]  %s3586, 512, %s3584, %s3572, 256, 256, 16
        $region92: #{tpu_custom_call.1} parent=67 // pred_fallthru
          _
      $region68: #{tpu_custom_call.1} parent=5 // pred_fallthru
        _
      %p3592 = scmp.le.s32.totalorder 2, %s26
      // Predicated region
      $region93: #{tpu_custom_call.1} parent=5 // pred_check
        %p3593 = pneg %p3592
      $region94: #{tpu_custom_call.1} parent=5 // pred_check_branch
        %3595 = sbr.rel (%p3593) target = $region96
      $region95: #{tpu_custom_call.1} parent=5 // pred_region
        %s3596 = ssub.s32 %s26, 2
        // Predicated region
        $region97: #{tpu_custom_call.1} parent=95 // pred_check
          %p3597 = pneg %p312
        $region98: #{tpu_custom_call.1} parent=95 // pred_check_branch
          %3599 = sbr.rel (%p3597) target = $region100
        $region99: #{tpu_custom_call.1} parent=95 // pred_region
          %s3600 = sand.u32 %s297, 1
          %s3601 = scalar_lea.sflag [#allocation6], %s3600
          %s3602 = sand.u32 %s297, 1
          %s3603 = smul.addr %s3602, 32
          %s3604 = scalar_lea.vmem [#allocation13], %s3603
          %3605 = dma.done %s3601, 512
        $region100: #{tpu_custom_call.1} parent=95 // pred_fallthru
          _
      $region96: #{tpu_custom_call.1} parent=5 // pred_fallthru
        _
    $region6: #{tpu_custom_call.1} parent=1 // loop_footer
      %s30 = sadd.s32 1, %s26
    $region7: #{tpu_custom_call.1} parent=1 // loop_footer_branch
      %25 = sbr.rel target = $region3
    $region8: #{tpu_custom_call.1} parent=1 // loop_exit
      _
    %3606 = vsyncpa [#allocation5], 1
    %s3607 = scalar_lea.sflag [#allocation5], 1
    %3608 = vsyncpa %s3607, 1
    %3609 = vsyncpa [#allocation8], 1
    %3610 = vsyncpa [#allocation11], 1
    %3611 = vsyncpa [#allocation6], 1
    %s3612 = scalar_lea.sflag [#allocation6], 1
    %3613 = vsyncpa %s3612, 1

</llo_original>
